<compile_context>
chip_gen: v7x
topology: tpu7x:2x2x1
jax: 0.10.0
libtpu: 0.0.40
codegen_flags: <defaults>
</compile_context>

<pallas_src>
import functools
import numpy as np
import jax
import jax.numpy as jnp
from jax.experimental import pallas as pl
from jax.experimental.pallas import tpu as pltpu

LN_EPS = 1e-5            # torch nn.LayerNorm default
_MM = jnp.bfloat16       # matmul-operand dtype (accumulation is always f32)

_FFT_NW = 12             # packed weights per FFT block
_DP_NW = 10              # packed weights for the duration predictor


# ----------------------------- in-kernel helpers -----------------------------

def _layernorm(y, g, b):
    mu = jnp.mean(y, axis=-1, keepdims=True)
    var = jnp.mean(jnp.square(y - mu), axis=-1, keepdims=True)
    return (y - mu) * jax.lax.rsqrt(var + LN_EPS) * g + b


def _double_softmax(s):
    """Reference applies nn.Softmax(dim=-1) twice."""
    m = jnp.max(s, axis=-1, keepdims=True)
    e = jnp.exp(s - m)
    p = e * pl.reciprocal(jnp.sum(e, axis=-1, keepdims=True), approx=True)
    e2 = jnp.exp(p)       # p in (0, 1] -> second max-subtraction unnecessary
    return e2 * pl.reciprocal(jnp.sum(e2, axis=-1, keepdims=True), approx=True)


def _linear(x, w_ref, b_ref):
    return jnp.dot(x.astype(_MM), w_ref[...],
                   preferred_element_type=jnp.float32) + b_ref[...]


def _conv1d_im2col(x, w_ref, b_ref, kernel_size):
    """'Same' 1-D conv on one (L, Cin) f32 value via im2col + one MXU matmul.
    w_ref is the im2col-packed weight (K*Cin, Cout); b_ref (1, Cout)."""
    L, cin = x.shape
    pad = (kernel_size - 1) // 2
    if pad > 0:
        z = jnp.zeros((pad, cin), x.dtype)
        xp = jnp.concatenate([z, x, z], axis=0)        # value-space padding
    else:
        xp = x
    slab = jnp.concatenate([xp[j:j + L, :] for j in range(kernel_size)], axis=1)
    return jnp.dot(slab.astype(_MM), w_ref[...],
                   preferred_element_type=jnp.float32) + b_ref[...]


def _fft_block(x, mask, w, *, n_head, d_k, inv_temp, conv_k):
    """FFTBlock: MHA (double softmax) + add&LN + mask + Conv9/ReLU/Conv1 + add&LN + mask."""
    (qkv_w, qkv_b, fc_w, fc_b, g1, b1, w1, c1b, w2, c2b, g2, b2) = w
    L, d = x.shape
    qkv = _linear(x, qkv_w, qkv_b)                     # one fused QKV matmul, (L, 3*n_head*d_k) f32
    dq = n_head * d_k
    fcw = fc_w[...]                                    # (n_head*d_v, d) bf16
    acc = jnp.zeros((L, d), jnp.float32)
    for h in range(n_head):                            # static unroll over heads
        qh = qkv[:, h * d_k:(h + 1) * d_k]
        kh = qkv[:, dq + h * d_k: dq + (h + 1) * d_k]
        vh = qkv[:, 2 * dq + h * d_k: 2 * dq + (h + 1) * d_k]
        # q @ k^T via dot_general (NT layout: no explicit transpose materialized)
        s = jax.lax.dot_general(qh.astype(_MM), kh.astype(_MM),
                                (((1,), (1,)), ((), ())),
                                preferred_element_type=jnp.float32) * inv_temp
        a = _double_softmax(s)
        oh = jnp.dot(a.astype(_MM), vh.astype(_MM),
                     preferred_element_type=jnp.float32)
        # fold head h straight into the output projection (no concat, no extra store)
        acc = acc + jnp.dot(oh.astype(_MM), fcw[h * d_k:(h + 1) * d_k, :],
                            preferred_element_type=jnp.float32)
    y = _layernorm(acc + fc_b[...] + x, g1[...], b1[...]) * mask
    h1 = jnp.maximum(_conv1d_im2col(y, w1, c1b, conv_k), 0.0)   # Conv1d(k=9) + ReLU
    h2 = _linear(h1, w2, c2b)                                   # Conv1d(k=1) == linear
    return _layernorm(h2 + y, g2[...], b2[...]) * mask


def _duration_predictor(x, w, *, conv_k):
    (c1w, c1b, g1, b1, c2w, c2b, g2, b2, lwT, lb) = w
    h = _conv1d_im2col(x, c1w, c1b, conv_k)
    h = jnp.maximum(_layernorm(h, g1[...], b1[...]), 0.0)       # LN then ReLU
    h = _conv1d_im2col(h, c2w, c2b, conv_k)
    h = jnp.maximum(_layernorm(h, g2[...], b2[...]), 0.0)
    # final 1-unit linear, emitted lane-dense as a (1, L) row (no trailing 1-dim)
    y = jax.lax.dot_general(lwT[...], h.astype(_MM),
                            (((1,), (1,)), ((), ())),
                            preferred_element_type=jnp.float32) + lb[...]
    return jnp.maximum(y, 0.0)                                  # (1, L)


# ------------------------------ fused forward kernel -------------------------

def _fastspeech_kernel(*refs, n_enc, n_dec, n_head, d_k, ffn_k, dp_k):
    it = iter(refs)
    mel_len_ref = next(it)                              # SMEM (B,) scalar-prefetch
    enc_in_ref, enc_mask_ref = next(it), next(it)
    start_ref, end_ref = next(it), next(it)
    dec_pos_ref, dec_mask_ref = next(it), next(it)
    enc_w = [tuple(next(it) for _ in range(_FFT_NW)) for _ in range(n_enc)]
    dp_w = tuple(next(it) for _ in range(_DP_NW))
    dec_w = [tuple(next(it) for _ in range(_FFT_NW)) for _ in range(n_dec)]
    mel_w_ref, mel_b_ref = next(it), next(it)
    mel_out_ref, dur_out_ref = next(it), next(it)

    inv_temp = 1.0 / (float(d_k) ** 0.5)

    # ---------------- encoder (slf_attn_mask is never applied, matching ref) --
    x = enc_in_ref[0]                                   # (L, d) f32
    enc_mask = enc_mask_ref[0]                          # (L, 1)
    for w in enc_w:
        x = _fft_block(x, enc_mask, w, n_head=n_head, d_k=d_k,
                       inv_temp=inv_temp, conv_k=ffn_k)

    # ---------------- duration predictor --------------------------------------
    dur_out_ref[0] = _duration_predictor(x, dp_w, conv_k=dp_k).astype(dur_out_ref.dtype)

    # ---------------- length regulator (one-hot alignment -> gather-as-matmul)
    T = dec_pos_ref.shape[1]
    L = x.shape[0]
    t_iota = jax.lax.broadcasted_iota(jnp.int32, (T, L), 0)
    align = jnp.logical_and(t_iota >= start_ref[0],
                            t_iota < end_ref[0]).astype(jnp.float32)
    y = jnp.dot(align, x, preferred_element_type=jnp.float32)   # (T, d), exact f32 gather

    # ---------------- decoder -------------------------------------------------
    y = y + dec_pos_ref[0]
    dec_mask = dec_mask_ref[0]                          # (T, 1)
    for w in dec_w:
        y = _fft_block(y, dec_mask, w, n_head=n_head, d_k=d_k,
                       inv_temp=inv_temp, conv_k=ffn_k)

    # ---------------- mask_tensor + mel_linear (masked rows get the bias) -----
    length = mel_len_ref[pl.program_id(0)]
    keep = (jax.lax.broadcasted_iota(jnp.int32, (T, 1), 0) < length).astype(jnp.float32)
    mel = jnp.dot((y * keep).astype(_MM), mel_w_ref[...],
                  preferred_element_type=jnp.float32) + mel_b_ref[...]
    mel_out_ref[0] = mel.astype(mel_out_ref.dtype)


# --------------------------- host-side weight packing ------------------------

def _pack_fft_block(p):
    K, d_in, dff = p['ffn_w1'].shape
    qkv_w = jnp.concatenate([p['w_qs_w'], p['w_ks_w'], p['w_vs_w']], axis=1).astype(_MM)
    qkv_b = jnp.concatenate([p['w_qs_b'], p['w_ks_b'], p['w_vs_b']], axis=0).reshape(1, -1)
    return [
        qkv_w, qkv_b.astype(jnp.float32),
        p['fc_w'].astype(_MM), p['fc_b'].reshape(1, -1),
        p['attn_ln_g'].reshape(1, -1), p['attn_ln_b'].reshape(1, -1),
        p['ffn_w1'].reshape(K * d_in, dff).astype(_MM), p['ffn_b1'].reshape(1, -1),
        p['ffn_w2'].reshape(dff, d_in).astype(_MM), p['ffn_b2'].reshape(1, -1),
        p['ffn_ln_g'].reshape(1, -1), p['ffn_ln_b'].reshape(1, -1),
    ]


def _pack_duration_predictor(params):
    K, d_in, dpf = params['dp_c1_w'].shape
    return [
        params['dp_c1_w'].reshape(K * d_in, dpf).astype(_MM), params['dp_c1_b'].reshape(1, -1),
        params['dp_ln1_g'].reshape(1, -1), params['dp_ln1_b'].reshape(1, -1),
        params['dp_c2_w'].reshape(K * dpf, dpf).astype(_MM), params['dp_c2_b'].reshape(1, -1),
        params['dp_ln2_g'].reshape(1, -1), params['dp_ln2_b'].reshape(1, -1),
        params['dp_lin_w'].reshape(1, -1).astype(_MM),      # (dpf, 1) -> (1, dpf) row
        params['dp_lin_b'].reshape(1, 1),
    ]


# ------------------------------- BlockSpec helpers ---------------------------

def _batch_spec(shape):
    zeros = (0,) * (len(shape) - 1)

    def idx(b, _mel_len):        # scalar-prefetch ref is passed to every index_map
        return (b,) + zeros
    return pl.BlockSpec(shape, idx)


def _weight_spec(arr):
    zeros = (0,) * arr.ndim

    def idx(b, _mel_len):
        return zeros
    return pl.BlockSpec(arr.shape, idx)


# ------------------------------ Model forward --------------------------------

def fastspeech_forward(params, cfg, mel_cfg, src_seq, src_pos, mel_pos,
                       mel_max_length, length_target):
    B, L = src_seq.shape
    d = cfg.encoder_dim
    T = int(mel_max_length)
    n_mels = mel_cfg.num_mels
    n_head = cfg.encoder_head
    ffn_k = int(params['enc_layers'][0]['ffn_w1'].shape[0])
    dp_k = int(params['dp_c1_w'].shape[0])

    # Tiny XLA-side prep: embedding gathers, pad masks, cumulative durations.
    enc_in = (params['src_word_emb'][src_seq] + params['enc_pos_emb'][src_pos]).astype(jnp.float32)
    enc_mask = (src_seq != cfg.PAD).astype(jnp.float32)[..., None]          # (B, L, 1)
    csum = jnp.cumsum(length_target.astype(jnp.int32), axis=-1)
    start = (csum - length_target.astype(jnp.int32)).reshape(B, 1, L)
    end = csum.reshape(B, 1, L)
    dec_pos = params['dec_pos_emb'][mel_pos].astype(jnp.float32)            # (B, T, d)
    dec_mask = (mel_pos != cfg.PAD).astype(jnp.float32)[..., None]          # (B, T, 1)
    # Matches ref mask_tensor (lengths = max(mel_pos)); assumes padded mel positions are 0.
    mel_len = jnp.max(mel_pos, axis=-1).astype(jnp.int32)                   # (B,) -> SMEM prefetch

    weights = []
    for p in params['enc_layers']:
        weights += _pack_fft_block(p)
    weights += _pack_duration_predictor(params)
    for p in params['dec_layers']:
        weights += _pack_fft_block(p)
    weights += [params['mel_w'].astype(_MM), params['mel_b'].reshape(1, -1)]

    tensors = [enc_in, enc_mask, start, end, dec_pos, dec_mask]
    in_specs = ([_batch_spec((1, L, d)), _batch_spec((1, L, 1)),
                 _batch_spec((1, 1, L)), _batch_spec((1, 1, L)),
                 _batch_spec((1, T, d)), _batch_spec((1, T, 1))]
                + [_weight_spec(w) for w in weights])
    out_specs = (_batch_spec((1, T, n_mels)), _batch_spec((1, 1, L)))
    out_shape = (jax.ShapeDtypeStruct((B, T, n_mels), jnp.float32),
                 jax.ShapeDtypeStruct((B, 1, L), jnp.float32))

    kernel = functools.partial(
        _fastspeech_kernel,
        n_enc=len(params['enc_layers']), n_dec=len(params['dec_layers']),
        n_head=n_head, d_k=d // n_head, ffn_k=ffn_k, dp_k=dp_k)

    mel_out, dur = pl.pallas_call(
        kernel,
        out_shape=out_shape,
        grid_spec=pltpu.PrefetchScalarGridSpec(
            num_scalar_prefetch=1, grid=(B,),
            in_specs=in_specs, out_specs=out_specs),
        compiler_params=pltpu.CompilerParams(
            dimension_semantics=("parallel",),
            vmem_limit_bytes=32 * 1024 * 1024),
    )(mel_len, *tensors, *weights)

    # torch does out.squeeze(); for B > 1 that is (B, L).  (torch would also drop B==1.)
    return mel_out, dur.reshape(B, L)


# ------------------------------ Model config ---------------------------------

class Cfg:
    PAD = 0
    vocab_size = 32
    max_seq_len = 16
    encoder_dim = 32
    decoder_dim = 32
    encoder_head = 2
    encoder_conv1d_filter_size = 64
    encoder_n_layer = 1
    decoder_n_layer = 1
    duration_predictor_filter_size = 32
    duration_predictor_kernel_size = 3
    dropout = 0.1


class MelCfg:
    num_mels = 8


# ----------------------------- Parameter init --------------------------------

def init_params(key, cfg, mel_cfg):
    d = cfg.encoder_dim
    nh = cfg.encoder_head
    dk = d // nh
    dv = dk
    dff = cfg.encoder_conv1d_filter_size
    dpf = cfg.duration_predictor_filter_size
    dpk = cfg.duration_predictor_kernel_size
    keys = iter(jax.random.split(key, 128))

    def nrm(shape, std):
        return jax.random.normal(next(keys), shape, jnp.float32) * std

    def fft_block_params():
        return dict(
            w_qs_w=nrm((d, nh * dk), np.sqrt(2.0 / (d + dk))), w_qs_b=jnp.zeros((nh * dk,), jnp.float32),
            w_ks_w=nrm((d, nh * dk), np.sqrt(2.0 / (d + dk))), w_ks_b=jnp.zeros((nh * dk,), jnp.float32),
            w_vs_w=nrm((d, nh * dv), np.sqrt(2.0 / (d + dv))), w_vs_b=jnp.zeros((nh * dv,), jnp.float32),
            fc_w=nrm((nh * dv, d), np.sqrt(2.0 / (nh * dv + d))), fc_b=jnp.zeros((d,), jnp.float32),
            attn_ln_g=jnp.ones((d,), jnp.float32), attn_ln_b=jnp.zeros((d,), jnp.float32),
            ffn_w1=nrm((9, d, dff), np.sqrt(1.0 / (9 * d))), ffn_b1=jnp.zeros((dff,), jnp.float32),
            ffn_w2=nrm((1, dff, d), np.sqrt(1.0 / dff)), ffn_b2=jnp.zeros((d,), jnp.float32),
            ffn_ln_g=jnp.ones((d,), jnp.float32), ffn_ln_b=jnp.zeros((d,), jnp.float32),
        )

    n_position = cfg.max_seq_len + 1
    src_word_emb = nrm((cfg.vocab_size, d), 0.1).at[cfg.PAD].set(0.0)
    enc_pos_emb = nrm((n_position, d), 0.1).at[cfg.PAD].set(0.0)
    dec_pos_emb = nrm((n_position, d), 0.1).at[cfg.PAD].set(0.0)

    return dict(
        src_word_emb=src_word_emb,
        enc_pos_emb=enc_pos_emb,
        dec_pos_emb=dec_pos_emb,
        enc_layers=[fft_block_params() for _ in range(cfg.encoder_n_layer)],
        dec_layers=[fft_block_params() for _ in range(cfg.decoder_n_layer)],
        dp_c1_w=nrm((dpk, d, dpf), np.sqrt(1.0 / (dpk * d))), dp_c1_b=jnp.zeros((dpf,), jnp.float32),
        dp_ln1_g=jnp.ones((dpf,), jnp.float32), dp_ln1_b=jnp.zeros((dpf,), jnp.float32),
        dp_c2_w=nrm((dpk, dpf, dpf), np.sqrt(1.0 / (dpk * dpf))), dp_c2_b=jnp.zeros((dpf,), jnp.float32),
        dp_ln2_g=jnp.ones((dpf,), jnp.float32), dp_ln2_b=jnp.zeros((dpf,), jnp.float32),
        dp_lin_w=nrm((dpf, 1), np.sqrt(1.0 / dpf)), dp_lin_b=jnp.zeros((1,), jnp.float32),
        mel_w=nrm((cfg.decoder_dim, mel_cfg.num_mels), np.sqrt(1.0 / cfg.decoder_dim)),
        mel_b=jnp.zeros((mel_cfg.num_mels,), jnp.float32),
    )


# ---------------------------------- Main --------------------------------------

if __name__ == "__main__":
    cfg, mel_cfg = Cfg(), MelCfg()
    key = jax.random.PRNGKey(0)
    pkey, dkey = jax.random.split(key)
    params = init_params(pkey, cfg, mel_cfg)

    B, L = 2, 8
    mel_max_length = 16
    src_seq = jax.random.randint(dkey, (B, L), 1, cfg.vocab_size, dtype=jnp.int32)
    src_pos = jnp.tile(jnp.arange(1, L + 1, dtype=jnp.int32)[None, :], (B, 1))
    length_target = jnp.array([[2, 2, 2, 2, 2, 2, 2, 2],
                               [1, 3, 2, 2, 1, 3, 2, 2]], dtype=jnp.int32)  # rows sum to 16
    mel_pos = jnp.tile(jnp.arange(1, mel_max_length + 1, dtype=jnp.int32)[None, :], (B, 1))

    @functools.partial(jax.jit, static_argnums=(5,))
    def run(p, s_seq, s_pos, m_pos, l_tgt, mel_max_len):
        return fastspeech_forward(p, cfg, mel_cfg, s_seq, s_pos, m_pos, mel_max_len, l_tgt)

    mel_out, dur_out = run(params, src_seq, src_pos, mel_pos, length_target, mel_max_length)
    jax.block_until_ready((mel_out, dur_out))

    assert mel_out.shape == (B, mel_max_length, mel_cfg.num_mels)
    assert dur_out.shape == (B, L)
    print("KERNEL_OK")
</pallas_src>

<mosaic_0001>
module attributes {stable_mosaic.version = 11 : i64} {
  func.func @_fastspeech_kernel(%arg0: i32, %arg1: memref<2xi32, #tpu.memory_space<smem>>, %arg2: memref<1x8x32xf32, #tpu.memory_space<vmem>>, %arg3: memref<1x8x1xf32, #tpu.memory_space<vmem>>, %arg4: memref<1x1x8xi32, #tpu.memory_space<vmem>>, %arg5: memref<1x1x8xi32, #tpu.memory_space<vmem>>, %arg6: memref<1x16x32xf32, #tpu.memory_space<vmem>>, %arg7: memref<1x16x1xf32, #tpu.memory_space<vmem>>, %arg8: memref<32x96xbf16, #tpu.memory_space<vmem>>, %arg9: memref<1x96xf32, #tpu.memory_space<vmem>>, %arg10: memref<32x32xbf16, #tpu.memory_space<vmem>>, %arg11: memref<1x32xf32, #tpu.memory_space<vmem>>, %arg12: memref<1x32xf32, #tpu.memory_space<vmem>>, %arg13: memref<1x32xf32, #tpu.memory_space<vmem>>, %arg14: memref<288x64xbf16, #tpu.memory_space<vmem>>, %arg15: memref<1x64xf32, #tpu.memory_space<vmem>>, %arg16: memref<64x32xbf16, #tpu.memory_space<vmem>>, %arg17: memref<1x32xf32, #tpu.memory_space<vmem>>, %arg18: memref<1x32xf32, #tpu.memory_space<vmem>>, %arg19: memref<1x32xf32, #tpu.memory_space<vmem>>, %arg20: memref<96x32xbf16, #tpu.memory_space<vmem>>, %arg21: memref<1x32xf32, #tpu.memory_space<vmem>>, %arg22: memref<1x32xf32, #tpu.memory_space<vmem>>, %arg23: memref<1x32xf32, #tpu.memory_space<vmem>>, %arg24: memref<96x32xbf16, #tpu.memory_space<vmem>>, %arg25: memref<1x32xf32, #tpu.memory_space<vmem>>, %arg26: memref<1x32xf32, #tpu.memory_space<vmem>>, %arg27: memref<1x32xf32, #tpu.memory_space<vmem>>, %arg28: memref<1x32xbf16, #tpu.memory_space<vmem>>, %arg29: memref<1x1xf32, #tpu.memory_space<vmem>>, %arg30: memref<32x96xbf16, #tpu.memory_space<vmem>>, %arg31: memref<1x96xf32, #tpu.memory_space<vmem>>, %arg32: memref<32x32xbf16, #tpu.memory_space<vmem>>, %arg33: memref<1x32xf32, #tpu.memory_space<vmem>>, %arg34: memref<1x32xf32, #tpu.memory_space<vmem>>, %arg35: memref<1x32xf32, #tpu.memory_space<vmem>>, %arg36: memref<288x64xbf16, #tpu.memory_space<vmem>>, %arg37: memref<1x64xf32, #tpu.memory_space<vmem>>, %arg38: memref<64x32xbf16, #tpu.memory_space<vmem>>, %arg39: memref<1x32xf32, #tpu.memory_space<vmem>>, %arg40: memref<1x32xf32, #tpu.memory_space<vmem>>, %arg41: memref<1x32xf32, #tpu.memory_space<vmem>>, %arg42: memref<32x8xbf16, #tpu.memory_space<vmem>>, %arg43: memref<1x8xf32, #tpu.memory_space<vmem>>, %arg44: memref<1x16x8xf32, #tpu.memory_space<vmem>>, %arg45: memref<1x1x8xf32, #tpu.memory_space<vmem>>) attributes {dimension_semantics = [#tpu.dimension_semantics<parallel>], iteration_bounds = array<i64: 2>, scalar_prefetch = 1 : i64, scratch_operands = 0 : i64, tpu.core_type = #tpu.core_type<tc>, window_params = [{transform_indices = @transform_0, window_bounds = array<i64: 1, 8, 32>}, {transform_indices = @transform_1, window_bounds = array<i64: 1, 8, 1>}, {transform_indices = @transform_2, window_bounds = array<i64: 1, 1, 8>}, {transform_indices = @transform_3, window_bounds = array<i64: 1, 1, 8>}, {transform_indices = @transform_4, window_bounds = array<i64: 1, 16, 32>}, {transform_indices = @transform_5, window_bounds = array<i64: 1, 16, 1>}, {pipeline_mode = #tpu.pipeline_mode<synchronous>, transform_indices = @transform_6, window_bounds = array<i64: 32, 96>}, {pipeline_mode = #tpu.pipeline_mode<synchronous>, transform_indices = @transform_7, window_bounds = array<i64: 1, 96>}, {pipeline_mode = #tpu.pipeline_mode<synchronous>, transform_indices = @transform_8, window_bounds = array<i64: 32, 32>}, {pipeline_mode = #tpu.pipeline_mode<synchronous>, transform_indices = @transform_9, window_bounds = array<i64: 1, 32>}, {pipeline_mode = #tpu.pipeline_mode<synchronous>, transform_indices = @transform_10, window_bounds = array<i64: 1, 32>}, {pipeline_mode = #tpu.pipeline_mode<synchronous>, transform_indices = @transform_11, window_bounds = array<i64: 1, 32>}, {pipeline_mode = #tpu.pipeline_mode<synchronous>, transform_indices = @transform_12, window_bounds = array<i64: 288, 64>}, {pipeline_mode = #tpu.pipeline_mode<synchronous>, transform_indices = @transform_13, window_bounds = array<i64: 1, 64>}, {pipeline_mode = #tpu.pipeline_mode<synchronous>, transform_indices = @transform_14, window_bounds = array<i64: 64, 32>}, {pipeline_mode = #tpu.pipeline_mode<synchronous>, transform_indices = @transform_15, window_bounds = array<i64: 1, 32>}, {pipeline_mode = #tpu.pipeline_mode<synchronous>, transform_indices = @transform_16, window_bounds = array<i64: 1, 32>}, {pipeline_mode = #tpu.pipeline_mode<synchronous>, transform_indices = @transform_17, window_bounds = array<i64: 1, 32>}, {pipeline_mode = #tpu.pipeline_mode<synchronous>, transform_indices = @transform_18, window_bounds = array<i64: 96, 32>}, {pipeline_mode = #tpu.pipeline_mode<synchronous>, transform_indices = @transform_19, window_bounds = array<i64: 1, 32>}, {pipeline_mode = #tpu.pipeline_mode<synchronous>, transform_indices = @transform_20, window_bounds = array<i64: 1, 32>}, {pipeline_mode = #tpu.pipeline_mode<synchronous>, transform_indices = @transform_21, window_bounds = array<i64: 1, 32>}, {pipeline_mode = #tpu.pipeline_mode<synchronous>, transform_indices = @transform_22, window_bounds = array<i64: 96, 32>}, {pipeline_mode = #tpu.pipeline_mode<synchronous>, transform_indices = @transform_23, window_bounds = array<i64: 1, 32>}, {pipeline_mode = #tpu.pipeline_mode<synchronous>, transform_indices = @transform_24, window_bounds = array<i64: 1, 32>}, {pipeline_mode = #tpu.pipeline_mode<synchronous>, transform_indices = @transform_25, window_bounds = array<i64: 1, 32>}, {pipeline_mode = #tpu.pipeline_mode<synchronous>, transform_indices = @transform_26, window_bounds = array<i64: 1, 32>}, {pipeline_mode = #tpu.pipeline_mode<synchronous>, transform_indices = @transform_27, window_bounds = array<i64: 1, 1>}, {pipeline_mode = #tpu.pipeline_mode<synchronous>, transform_indices = @transform_28, window_bounds = array<i64: 32, 96>}, {pipeline_mode = #tpu.pipeline_mode<synchronous>, transform_indices = @transform_29, window_bounds = array<i64: 1, 96>}, {pipeline_mode = #tpu.pipeline_mode<synchronous>, transform_indices = @transform_30, window_bounds = array<i64: 32, 32>}, {pipeline_mode = #tpu.pipeline_mode<synchronous>, transform_indices = @transform_31, window_bounds = array<i64: 1, 32>}, {pipeline_mode = #tpu.pipeline_mode<synchronous>, transform_indices = @transform_32, window_bounds = array<i64: 1, 32>}, {pipeline_mode = #tpu.pipeline_mode<synchronous>, transform_indices = @transform_33, window_bounds = array<i64: 1, 32>}, {pipeline_mode = #tpu.pipeline_mode<synchronous>, transform_indices = @transform_34, window_bounds = array<i64: 288, 64>}, {pipeline_mode = #tpu.pipeline_mode<synchronous>, transform_indices = @transform_35, window_bounds = array<i64: 1, 64>}, {pipeline_mode = #tpu.pipeline_mode<synchronous>, transform_indices = @transform_36, window_bounds = array<i64: 64, 32>}, {pipeline_mode = #tpu.pipeline_mode<synchronous>, transform_indices = @transform_37, window_bounds = array<i64: 1, 32>}, {pipeline_mode = #tpu.pipeline_mode<synchronous>, transform_indices = @transform_38, window_bounds = array<i64: 1, 32>}, {pipeline_mode = #tpu.pipeline_mode<synchronous>, transform_indices = @transform_39, window_bounds = array<i64: 1, 32>}, {pipeline_mode = #tpu.pipeline_mode<synchronous>, transform_indices = @transform_40, window_bounds = array<i64: 32, 8>}, {pipeline_mode = #tpu.pipeline_mode<synchronous>, transform_indices = @transform_41, window_bounds = array<i64: 1, 8>}, {transform_indices = @transform_42, window_bounds = array<i64: 1, 16, 8>}, {transform_indices = @transform_43, window_bounds = array<i64: 1, 1, 8>}]} {
    %c0 = arith.constant 0 : index
    %c0_0 = arith.constant 0 : index
    %c0_1 = arith.constant 0 : index
    %0 = vector.load %arg2[%c0, %c0_0, %c0_1] : memref<1x8x32xf32, #tpu.memory_space<vmem>>, vector<1x8x32xf32>
    %1 = vector.shape_cast %0 : vector<1x8x32xf32> to vector<8x32xf32>
    %c0_2 = arith.constant 0 : index
    %c0_3 = arith.constant 0 : index
    %c0_4 = arith.constant 0 : index
    %2 = vector.load %arg3[%c0_2, %c0_3, %c0_4] : memref<1x8x1xf32, #tpu.memory_space<vmem>>, vector<1x8x1xf32>
    %3 = vector.shape_cast %2 : vector<1x8x1xf32> to vector<8x1xf32>
    %4 = arith.truncf %1 : vector<8x32xf32> to vector<8x32xbf16>
    %c0_5 = arith.constant 0 : index
    %c0_6 = arith.constant 0 : index
    %5 = vector.load %arg8[%c0_5, %c0_6] : memref<32x96xbf16, #tpu.memory_space<vmem>>, vector<32x96xbf16>
    %cst = arith.constant dense<0.000000e+00> : vector<8x96xf32>
    %6 = tpu.matmul %4, %5, %cst {dimension_numbers = #tpu.dot_dimension_numbers<[1], [0], [0], [1], [0, 0, 1, 1], [], []>} : vector<8x32xbf16>, vector<32x96xbf16>, vector<8x96xf32> -> vector<8x96xf32>
    %c0_7 = arith.constant 0 : index
    %c0_8 = arith.constant 0 : index
    %7 = vector.load %arg9[%c0_7, %c0_8] : memref<1x96xf32, #tpu.memory_space<vmem>>, vector<1x96xf32>
    %8 = vector.broadcast %7 : vector<1x96xf32> to vector<8x96xf32>
    %9 = arith.addf %6, %8 : vector<8x96xf32>
    %c0_9 = arith.constant 0 : index
    %c0_10 = arith.constant 0 : index
    %10 = vector.load %arg10[%c0_9, %c0_10] : memref<32x32xbf16, #tpu.memory_space<vmem>>, vector<32x32xbf16>
    %cst_11 = arith.constant 0.000000e+00 : f32
    %11 = vector.broadcast %cst_11 : f32 to vector<8x32xf32>
    %12 = vector.extract_strided_slice %9 {offsets = [0, 0], sizes = [8, 16], strides = [1, 1]} : vector<8x96xf32> to vector<8x16xf32>
    %13 = vector.extract_strided_slice %9 {offsets = [0, 32], sizes = [8, 16], strides = [1, 1]} : vector<8x96xf32> to vector<8x16xf32>
    %14 = vector.extract_strided_slice %9 {offsets = [0, 64], sizes = [8, 16], strides = [1, 1]} : vector<8x96xf32> to vector<8x16xf32>
    %15 = arith.truncf %12 : vector<8x16xf32> to vector<8x16xbf16>
    %16 = arith.truncf %13 : vector<8x16xf32> to vector<8x16xbf16>
    %cst_12 = arith.constant dense<0.000000e+00> : vector<8x8xf32>
    %17 = tpu.matmul %15, %16, %cst_12 {dimension_numbers = #tpu.dot_dimension_numbers<[1], [1], [0], [0], [0, 0, 1, 0], [], []>} : vector<8x16xbf16>, vector<8x16xbf16>, vector<8x8xf32> -> vector<8x8xf32>
    %cst_13 = arith.constant 2.500000e-01 : f32
    %18 = vector.broadcast %cst_13 : f32 to vector<8x8xf32>
    %19 = arith.mulf %17, %18 : vector<8x8xf32>
    %cst_14 = arith.constant dense<0xFF800000> : vector<8xf32>
    %20 = vector.multi_reduction <maximumf>, %19, %cst_14 [1] : vector<8x8xf32> to vector<8xf32>
    %21 = vector.shape_cast %20 : vector<8xf32> to vector<8x1xf32>
    %22 = vector.broadcast %21 : vector<8x1xf32> to vector<8x8xf32>
    %23 = arith.subf %19, %22 : vector<8x8xf32>
    %24 = math.exp %23 : vector<8x8xf32>
    %cst_15 = arith.constant dense<0.000000e+00> : vector<8xf32>
    %25 = vector.multi_reduction <add>, %24, %cst_15 [1] : vector<8x8xf32> to vector<8xf32>
    %26 = vector.shape_cast %25 : vector<8xf32> to vector<8x1xf32>
    %27 = tpu.reciprocal %26 {approx = true} : vector<8x1xf32> -> vector<8x1xf32>
    %28 = vector.broadcast %27 : vector<8x1xf32> to vector<8x8xf32>
    %29 = arith.mulf %24, %28 : vector<8x8xf32>
    %30 = math.exp %29 : vector<8x8xf32>
    %cst_16 = arith.constant dense<0.000000e+00> : vector<8xf32>
    %31 = vector.multi_reduction <add>, %30, %cst_16 [1] : vector<8x8xf32> to vector<8xf32>
    %32 = vector.shape_cast %31 : vector<8xf32> to vector<8x1xf32>
    %33 = tpu.reciprocal %32 {approx = true} : vector<8x1xf32> -> vector<8x1xf32>
    %34 = vector.broadcast %33 : vector<8x1xf32> to vector<8x8xf32>
    %35 = arith.mulf %30, %34 : vector<8x8xf32>
    %36 = arith.truncf %35 : vector<8x8xf32> to vector<8x8xbf16>
    %37 = arith.truncf %14 : vector<8x16xf32> to vector<8x16xbf16>
    %cst_17 = arith.constant dense<0.000000e+00> : vector<8x16xf32>
    %38 = tpu.matmul %36, %37, %cst_17 {dimension_numbers = #tpu.dot_dimension_numbers<[1], [0], [0], [1], [0, 0, 1, 1], [], []>} : vector<8x8xbf16>, vector<8x16xbf16>, vector<8x16xf32> -> vector<8x16xf32>
    %39 = arith.truncf %38 : vector<8x16xf32> to vector<8x16xbf16>
    %40 = vector.extract_strided_slice %10 {offsets = [0, 0], sizes = [16, 32], strides = [1, 1]} : vector<32x32xbf16> to vector<16x32xbf16>
    %cst_18 = arith.constant dense<0.000000e+00> : vector<8x32xf32>
    %41 = tpu.matmul %39, %40, %cst_18 {dimension_numbers = #tpu.dot_dimension_numbers<[1], [0], [0], [1], [0, 0, 1, 1], [], []>} : vector<8x16xbf16>, vector<16x32xbf16>, vector<8x32xf32> -> vector<8x32xf32>
    %42 = arith.addf %11, %41 : vector<8x32xf32>
    %43 = vector.extract_strided_slice %9 {offsets = [0, 16], sizes = [8, 16], strides = [1, 1]} : vector<8x96xf32> to vector<8x16xf32>
    %44 = vector.extract_strided_slice %9 {offsets = [0, 48], sizes = [8, 16], strides = [1, 1]} : vector<8x96xf32> to vector<8x16xf32>
    %45 = vector.extract_strided_slice %9 {offsets = [0, 80], sizes = [8, 16], strides = [1, 1]} : vector<8x96xf32> to vector<8x16xf32>
    %46 = arith.truncf %43 : vector<8x16xf32> to vector<8x16xbf16>
    %47 = arith.truncf %44 : vector<8x16xf32> to vector<8x16xbf16>
    %cst_19 = arith.constant dense<0.000000e+00> : vector<8x8xf32>
    %48 = tpu.matmul %46, %47, %cst_19 {dimension_numbers = #tpu.dot_dimension_numbers<[1], [1], [0], [0], [0, 0, 1, 0], [], []>} : vector<8x16xbf16>, vector<8x16xbf16>, vector<8x8xf32> -> vector<8x8xf32>
    %cst_20 = arith.constant 2.500000e-01 : f32
    %49 = vector.broadcast %cst_20 : f32 to vector<8x8xf32>
    %50 = arith.mulf %48, %49 : vector<8x8xf32>
    %cst_21 = arith.constant dense<0xFF800000> : vector<8xf32>
    %51 = vector.multi_reduction <maximumf>, %50, %cst_21 [1] : vector<8x8xf32> to vector<8xf32>
    %52 = vector.shape_cast %51 : vector<8xf32> to vector<8x1xf32>
    %53 = vector.broadcast %52 : vector<8x1xf32> to vector<8x8xf32>
    %54 = arith.subf %50, %53 : vector<8x8xf32>
    %55 = math.exp %54 : vector<8x8xf32>
    %cst_22 = arith.constant dense<0.000000e+00> : vector<8xf32>
    %56 = vector.multi_reduction <add>, %55, %cst_22 [1] : vector<8x8xf32> to vector<8xf32>
    %57 = vector.shape_cast %56 : vector<8xf32> to vector<8x1xf32>
    %58 = tpu.reciprocal %57 {approx = true} : vector<8x1xf32> -> vector<8x1xf32>
    %59 = vector.broadcast %58 : vector<8x1xf32> to vector<8x8xf32>
    %60 = arith.mulf %55, %59 : vector<8x8xf32>
    %61 = math.exp %60 : vector<8x8xf32>
    %cst_23 = arith.constant dense<0.000000e+00> : vector<8xf32>
    %62 = vector.multi_reduction <add>, %61, %cst_23 [1] : vector<8x8xf32> to vector<8xf32>
    %63 = vector.shape_cast %62 : vector<8xf32> to vector<8x1xf32>
    %64 = tpu.reciprocal %63 {approx = true} : vector<8x1xf32> -> vector<8x1xf32>
    %65 = vector.broadcast %64 : vector<8x1xf32> to vector<8x8xf32>
    %66 = arith.mulf %61, %65 : vector<8x8xf32>
    %67 = arith.truncf %66 : vector<8x8xf32> to vector<8x8xbf16>
    %68 = arith.truncf %45 : vector<8x16xf32> to vector<8x16xbf16>
    %cst_24 = arith.constant dense<0.000000e+00> : vector<8x16xf32>
    %69 = tpu.matmul %67, %68, %cst_24 {dimension_numbers = #tpu.dot_dimension_numbers<[1], [0], [0], [1], [0, 0, 1, 1], [], []>} : vector<8x8xbf16>, vector<8x16xbf16>, vector<8x16xf32> -> vector<8x16xf32>
    %70 = arith.truncf %69 : vector<8x16xf32> to vector<8x16xbf16>
    %71 = vector.extract_strided_slice %10 {offsets = [16, 0], sizes = [16, 32], strides = [1, 1]} : vector<32x32xbf16> to vector<16x32xbf16>
    %cst_25 = arith.constant dense<0.000000e+00> : vector<8x32xf32>
    %72 = tpu.matmul %70, %71, %cst_25 {dimension_numbers = #tpu.dot_dimension_numbers<[1], [0], [0], [1], [0, 0, 1, 1], [], []>} : vector<8x16xbf16>, vector<16x32xbf16>, vector<8x32xf32> -> vector<8x32xf32>
    %73 = arith.addf %42, %72 : vector<8x32xf32>
    %c0_26 = arith.constant 0 : index
    %c0_27 = arith.constant 0 : index
    %74 = vector.load %arg11[%c0_26, %c0_27] : memref<1x32xf32, #tpu.memory_space<vmem>>, vector<1x32xf32>
    %75 = vector.broadcast %74 : vector<1x32xf32> to vector<8x32xf32>
    %76 = arith.addf %73, %75 : vector<8x32xf32>
    %77 = arith.addf %76, %1 : vector<8x32xf32>
    %c0_28 = arith.constant 0 : index
    %c0_29 = arith.constant 0 : index
    %78 = vector.load %arg12[%c0_28, %c0_29] : memref<1x32xf32, #tpu.memory_space<vmem>>, vector<1x32xf32>
    %c0_30 = arith.constant 0 : index
    %c0_31 = arith.constant 0 : index
    %79 = vector.load %arg13[%c0_30, %c0_31] : memref<1x32xf32, #tpu.memory_space<vmem>>, vector<1x32xf32>
    %cst_32 = arith.constant dense<0.000000e+00> : vector<8xf32>
    %80 = vector.multi_reduction <add>, %77, %cst_32 [1] : vector<8x32xf32> to vector<8xf32>
    %81 = vector.shape_cast %80 : vector<8xf32> to vector<8x1xf32>
    %cst_33 = arith.constant 3.200000e+01 : f32
    %82 = vector.broadcast %cst_33 : f32 to vector<8x1xf32>
    %83 = arith.divf %81, %82 : vector<8x1xf32>
    %84 = vector.broadcast %83 : vector<8x1xf32> to vector<8x32xf32>
    %85 = arith.subf %77, %84 : vector<8x32xf32>
    %86 = arith.mulf %85, %85 : vector<8x32xf32>
    %cst_34 = arith.constant dense<0.000000e+00> : vector<8xf32>
    %87 = vector.multi_reduction <add>, %86, %cst_34 [1] : vector<8x32xf32> to vector<8xf32>
    %88 = vector.shape_cast %87 : vector<8xf32> to vector<8x1xf32>
    %cst_35 = arith.constant 3.200000e+01 : f32
    %89 = vector.broadcast %cst_35 : f32 to vector<8x1xf32>
    %90 = arith.divf %88, %89 : vector<8x1xf32>
    %91 = vector.broadcast %83 : vector<8x1xf32> to vector<8x32xf32>
    %92 = arith.subf %77, %91 : vector<8x32xf32>
    %cst_36 = arith.constant 9.99999974E-6 : f32
    %93 = vector.broadcast %cst_36 : f32 to vector<8x1xf32>
    %94 = arith.addf %90, %93 : vector<8x1xf32>
    %95 = math.rsqrt %94 : vector<8x1xf32>
    %96 = vector.broadcast %95 : vector<8x1xf32> to vector<8x32xf32>
    %97 = arith.mulf %92, %96 : vector<8x32xf32>
    %98 = vector.broadcast %78 : vector<1x32xf32> to vector<8x32xf32>
    %99 = arith.mulf %97, %98 : vector<8x32xf32>
    %100 = vector.broadcast %79 : vector<1x32xf32> to vector<8x32xf32>
    %101 = arith.addf %99, %100 : vector<8x32xf32>
    %102 = vector.broadcast %3 : vector<8x1xf32> to vector<8x32xf32>
    %103 = arith.mulf %101, %102 : vector<8x32xf32>
    %cst_37 = arith.constant 0.000000e+00 : f32
    %104 = vector.broadcast %cst_37 : f32 to vector<4x32xf32>
    %105 = tpu.concatenate %104, %103, %104 in 0 : vector<4x32xf32>, vector<8x32xf32>, vector<4x32xf32> -> vector<16x32xf32>
    %106 = vector.extract_strided_slice %105 {offsets = [0, 0], sizes = [8, 32], strides = [1, 1]} : vector<16x32xf32> to vector<8x32xf32>
    %107 = vector.extract_strided_slice %105 {offsets = [1, 0], sizes = [8, 32], strides = [1, 1]} : vector<16x32xf32> to vector<8x32xf32>
    %108 = vector.extract_strided_slice %105 {offsets = [2, 0], sizes = [8, 32], strides = [1, 1]} : vector<16x32xf32> to vector<8x32xf32>
    %109 = vector.extract_strided_slice %105 {offsets = [3, 0], sizes = [8, 32], strides = [1, 1]} : vector<16x32xf32> to vector<8x32xf32>
    %110 = vector.extract_strided_slice %105 {offsets = [4, 0], sizes = [8, 32], strides = [1, 1]} : vector<16x32xf32> to vector<8x32xf32>
    %111 = vector.extract_strided_slice %105 {offsets = [5, 0], sizes = [8, 32], strides = [1, 1]} : vector<16x32xf32> to vector<8x32xf32>
    %112 = vector.extract_strided_slice %105 {offsets = [6, 0], sizes = [8, 32], strides = [1, 1]} : vector<16x32xf32> to vector<8x32xf32>
    %113 = vector.extract_strided_slice %105 {offsets = [7, 0], sizes = [8, 32], strides = [1, 1]} : vector<16x32xf32> to vector<8x32xf32>
    %114 = vector.extract_strided_slice %105 {offsets = [8, 0], sizes = [8, 32], strides = [1, 1]} : vector<16x32xf32> to vector<8x32xf32>
    %115 = tpu.concatenate %106, %107, %108, %109, %110, %111, %112, %113, %114 in 1 : vector<8x32xf32>, vector<8x32xf32>, vector<8x32xf32>, vector<8x32xf32>, vector<8x32xf32>, vector<8x32xf32>, vector<8x32xf32>, vector<8x32xf32>, vector<8x32xf32> -> vector<8x288xf32>
    %116 = arith.truncf %115 : vector<8x288xf32> to vector<8x288xbf16>
    %c0_38 = arith.constant 0 : index
    %c0_39 = arith.constant 0 : index
    %117 = vector.load %arg14[%c0_38, %c0_39] : memref<288x64xbf16, #tpu.memory_space<vmem>>, vector<288x64xbf16>
    %cst_40 = arith.constant dense<0.000000e+00> : vector<8x64xf32>
    %118 = tpu.matmul %116, %117, %cst_40 {dimension_numbers = #tpu.dot_dimension_numbers<[1], [0], [0], [1], [0, 0, 1, 1], [], []>} : vector<8x288xbf16>, vector<288x64xbf16>, vector<8x64xf32> -> vector<8x64xf32>
    %c0_41 = arith.constant 0 : index
    %c0_42 = arith.constant 0 : index
    %119 = vector.load %arg15[%c0_41, %c0_42] : memref<1x64xf32, #tpu.memory_space<vmem>>, vector<1x64xf32>
    %120 = vector.broadcast %119 : vector<1x64xf32> to vector<8x64xf32>
    %121 = arith.addf %118, %120 : vector<8x64xf32>
    %cst_43 = arith.constant 0.000000e+00 : f32
    %122 = vector.broadcast %cst_43 : f32 to vector<8x64xf32>
    %123 = arith.maximumf %121, %122 : vector<8x64xf32>
    %124 = arith.truncf %123 : vector<8x64xf32> to vector<8x64xbf16>
    %c0_44 = arith.constant 0 : index
    %c0_45 = arith.constant 0 : index
    %125 = vector.load %arg16[%c0_44, %c0_45] : memref<64x32xbf16, #tpu.memory_space<vmem>>, vector<64x32xbf16>
    %cst_46 = arith.constant dense<0.000000e+00> : vector<8x32xf32>
    %126 = tpu.matmul %124, %125, %cst_46 {dimension_numbers = #tpu.dot_dimension_numbers<[1], [0], [0], [1], [0, 0, 1, 1], [], []>} : vector<8x64xbf16>, vector<64x32xbf16>, vector<8x32xf32> -> vector<8x32xf32>
    %c0_47 = arith.constant 0 : index
    %c0_48 = arith.constant 0 : index
    %127 = vector.load %arg17[%c0_47, %c0_48] : memref<1x32xf32, #tpu.memory_space<vmem>>, vector<1x32xf32>
    %128 = vector.broadcast %127 : vector<1x32xf32> to vector<8x32xf32>
    %129 = arith.addf %126, %128 : vector<8x32xf32>
    %130 = arith.addf %129, %103 : vector<8x32xf32>
    %c0_49 = arith.constant 0 : index
    %c0_50 = arith.constant 0 : index
    %131 = vector.load %arg18[%c0_49, %c0_50] : memref<1x32xf32, #tpu.memory_space<vmem>>, vector<1x32xf32>
    %c0_51 = arith.constant 0 : index
    %c0_52 = arith.constant 0 : index
    %132 = vector.load %arg19[%c0_51, %c0_52] : memref<1x32xf32, #tpu.memory_space<vmem>>, vector<1x32xf32>
    %cst_53 = arith.constant dense<0.000000e+00> : vector<8xf32>
    %133 = vector.multi_reduction <add>, %130, %cst_53 [1] : vector<8x32xf32> to vector<8xf32>
    %134 = vector.shape_cast %133 : vector<8xf32> to vector<8x1xf32>
    %cst_54 = arith.constant 3.200000e+01 : f32
    %135 = vector.broadcast %cst_54 : f32 to vector<8x1xf32>
    %136 = arith.divf %134, %135 : vector<8x1xf32>
    %137 = vector.broadcast %136 : vector<8x1xf32> to vector<8x32xf32>
    %138 = arith.subf %130, %137 : vector<8x32xf32>
    %139 = arith.mulf %138, %138 : vector<8x32xf32>
    %cst_55 = arith.constant dense<0.000000e+00> : vector<8xf32>
    %140 = vector.multi_reduction <add>, %139, %cst_55 [1] : vector<8x32xf32> to vector<8xf32>
    %141 = vector.shape_cast %140 : vector<8xf32> to vector<8x1xf32>
    %cst_56 = arith.constant 3.200000e+01 : f32
    %142 = vector.broadcast %cst_56 : f32 to vector<8x1xf32>
    %143 = arith.divf %141, %142 : vector<8x1xf32>
    %144 = vector.broadcast %136 : vector<8x1xf32> to vector<8x32xf32>
    %145 = arith.subf %130, %144 : vector<8x32xf32>
    %cst_57 = arith.constant 9.99999974E-6 : f32
    %146 = vector.broadcast %cst_57 : f32 to vector<8x1xf32>
    %147 = arith.addf %143, %146 : vector<8x1xf32>
    %148 = math.rsqrt %147 : vector<8x1xf32>
    %149 = vector.broadcast %148 : vector<8x1xf32> to vector<8x32xf32>
    %150 = arith.mulf %145, %149 : vector<8x32xf32>
    %151 = vector.broadcast %131 : vector<1x32xf32> to vector<8x32xf32>
    %152 = arith.mulf %150, %151 : vector<8x32xf32>
    %153 = vector.broadcast %132 : vector<1x32xf32> to vector<8x32xf32>
    %154 = arith.addf %152, %153 : vector<8x32xf32>
    %155 = vector.broadcast %3 : vector<8x1xf32> to vector<8x32xf32>
    %156 = arith.mulf %154, %155 : vector<8x32xf32>
    %cst_58 = arith.constant 0.000000e+00 : f32
    %157 = vector.broadcast %cst_58 : f32 to vector<1x32xf32>
    %158 = tpu.concatenate %157, %156, %157 in 0 : vector<1x32xf32>, vector<8x32xf32>, vector<1x32xf32> -> vector<10x32xf32>
    %159 = vector.extract_strided_slice %158 {offsets = [0, 0], sizes = [8, 32], strides = [1, 1]} : vector<10x32xf32> to vector<8x32xf32>
    %160 = vector.extract_strided_slice %158 {offsets = [1, 0], sizes = [8, 32], strides = [1, 1]} : vector<10x32xf32> to vector<8x32xf32>
    %161 = vector.extract_strided_slice %158 {offsets = [2, 0], sizes = [8, 32], strides = [1, 1]} : vector<10x32xf32> to vector<8x32xf32>
    %162 = tpu.concatenate %159, %160, %161 in 1 : vector<8x32xf32>, vector<8x32xf32>, vector<8x32xf32> -> vector<8x96xf32>
    %163 = arith.truncf %162 : vector<8x96xf32> to vector<8x96xbf16>
    %c0_59 = arith.constant 0 : index
    %c0_60 = arith.constant 0 : index
    %164 = vector.load %arg20[%c0_59, %c0_60] : memref<96x32xbf16, #tpu.memory_space<vmem>>, vector<96x32xbf16>
    %cst_61 = arith.constant dense<0.000000e+00> : vector<8x32xf32>
    %165 = tpu.matmul %163, %164, %cst_61 {dimension_numbers = #tpu.dot_dimension_numbers<[1], [0], [0], [1], [0, 0, 1, 1], [], []>} : vector<8x96xbf16>, vector<96x32xbf16>, vector<8x32xf32> -> vector<8x32xf32>
    %c0_62 = arith.constant 0 : index
    %c0_63 = arith.constant 0 : index
    %166 = vector.load %arg21[%c0_62, %c0_63] : memref<1x32xf32, #tpu.memory_space<vmem>>, vector<1x32xf32>
    %167 = vector.broadcast %166 : vector<1x32xf32> to vector<8x32xf32>
    %168 = arith.addf %165, %167 : vector<8x32xf32>
    %c0_64 = arith.constant 0 : index
    %c0_65 = arith.constant 0 : index
    %169 = vector.load %arg22[%c0_64, %c0_65] : memref<1x32xf32, #tpu.memory_space<vmem>>, vector<1x32xf32>
    %c0_66 = arith.constant 0 : index
    %c0_67 = arith.constant 0 : index
    %170 = vector.load %arg23[%c0_66, %c0_67] : memref<1x32xf32, #tpu.memory_space<vmem>>, vector<1x32xf32>
    %cst_68 = arith.constant dense<0.000000e+00> : vector<8xf32>
    %171 = vector.multi_reduction <add>, %168, %cst_68 [1] : vector<8x32xf32> to vector<8xf32>
    %172 = vector.shape_cast %171 : vector<8xf32> to vector<8x1xf32>
    %cst_69 = arith.constant 3.200000e+01 : f32
    %173 = vector.broadcast %cst_69 : f32 to vector<8x1xf32>
    %174 = arith.divf %172, %173 : vector<8x1xf32>
    %175 = vector.broadcast %174 : vector<8x1xf32> to vector<8x32xf32>
    %176 = arith.subf %168, %175 : vector<8x32xf32>
    %177 = arith.mulf %176, %176 : vector<8x32xf32>
    %cst_70 = arith.constant dense<0.000000e+00> : vector<8xf32>
    %178 = vector.multi_reduction <add>, %177, %cst_70 [1] : vector<8x32xf32> to vector<8xf32>
    %179 = vector.shape_cast %178 : vector<8xf32> to vector<8x1xf32>
    %cst_71 = arith.constant 3.200000e+01 : f32
    %180 = vector.broadcast %cst_71 : f32 to vector<8x1xf32>
    %181 = arith.divf %179, %180 : vector<8x1xf32>
    %182 = vector.broadcast %174 : vector<8x1xf32> to vector<8x32xf32>
    %183 = arith.subf %168, %182 : vector<8x32xf32>
    %cst_72 = arith.constant 9.99999974E-6 : f32
    %184 = vector.broadcast %cst_72 : f32 to vector<8x1xf32>
    %185 = arith.addf %181, %184 : vector<8x1xf32>
    %186 = math.rsqrt %185 : vector<8x1xf32>
    %187 = vector.broadcast %186 : vector<8x1xf32> to vector<8x32xf32>
    %188 = arith.mulf %183, %187 : vector<8x32xf32>
    %189 = vector.broadcast %169 : vector<1x32xf32> to vector<8x32xf32>
    %190 = arith.mulf %188, %189 : vector<8x32xf32>
    %191 = vector.broadcast %170 : vector<1x32xf32> to vector<8x32xf32>
    %192 = arith.addf %190, %191 : vector<8x32xf32>
    %cst_73 = arith.constant 0.000000e+00 : f32
    %193 = vector.broadcast %cst_73 : f32 to vector<8x32xf32>
    %194 = arith.maximumf %192, %193 : vector<8x32xf32>
    %cst_74 = arith.constant 0.000000e+00 : f32
    %195 = vector.broadcast %cst_74 : f32 to vector<1x32xf32>
    %196 = tpu.concatenate %195, %194, %195 in 0 : vector<1x32xf32>, vector<8x32xf32>, vector<1x32xf32> -> vector<10x32xf32>
    %197 = vector.extract_strided_slice %196 {offsets = [0, 0], sizes = [8, 32], strides = [1, 1]} : vector<10x32xf32> to vector<8x32xf32>
    %198 = vector.extract_strided_slice %196 {offsets = [1, 0], sizes = [8, 32], strides = [1, 1]} : vector<10x32xf32> to vector<8x32xf32>
    %199 = vector.extract_strided_slice %196 {offsets = [2, 0], sizes = [8, 32], strides = [1, 1]} : vector<10x32xf32> to vector<8x32xf32>
    %200 = tpu.concatenate %197, %198, %199 in 1 : vector<8x32xf32>, vector<8x32xf32>, vector<8x32xf32> -> vector<8x96xf32>
    %201 = arith.truncf %200 : vector<8x96xf32> to vector<8x96xbf16>
    %c0_75 = arith.constant 0 : index
    %c0_76 = arith.constant 0 : index
    %202 = vector.load %arg24[%c0_75, %c0_76] : memref<96x32xbf16, #tpu.memory_space<vmem>>, vector<96x32xbf16>
    %cst_77 = arith.constant dense<0.000000e+00> : vector<8x32xf32>
    %203 = tpu.matmul %201, %202, %cst_77 {dimension_numbers = #tpu.dot_dimension_numbers<[1], [0], [0], [1], [0, 0, 1, 1], [], []>} : vector<8x96xbf16>, vector<96x32xbf16>, vector<8x32xf32> -> vector<8x32xf32>
    %c0_78 = arith.constant 0 : index
    %c0_79 = arith.constant 0 : index
    %204 = vector.load %arg25[%c0_78, %c0_79] : memref<1x32xf32, #tpu.memory_space<vmem>>, vector<1x32xf32>
    %205 = vector.broadcast %204 : vector<1x32xf32> to vector<8x32xf32>
    %206 = arith.addf %203, %205 : vector<8x32xf32>
    %c0_80 = arith.constant 0 : index
    %c0_81 = arith.constant 0 : index
    %207 = vector.load %arg26[%c0_80, %c0_81] : memref<1x32xf32, #tpu.memory_space<vmem>>, vector<1x32xf32>
    %c0_82 = arith.constant 0 : index
    %c0_83 = arith.constant 0 : index
    %208 = vector.load %arg27[%c0_82, %c0_83] : memref<1x32xf32, #tpu.memory_space<vmem>>, vector<1x32xf32>
    %cst_84 = arith.constant dense<0.000000e+00> : vector<8xf32>
    %209 = vector.multi_reduction <add>, %206, %cst_84 [1] : vector<8x32xf32> to vector<8xf32>
    %210 = vector.shape_cast %209 : vector<8xf32> to vector<8x1xf32>
    %cst_85 = arith.constant 3.200000e+01 : f32
    %211 = vector.broadcast %cst_85 : f32 to vector<8x1xf32>
    %212 = arith.divf %210, %211 : vector<8x1xf32>
    %213 = vector.broadcast %212 : vector<8x1xf32> to vector<8x32xf32>
    %214 = arith.subf %206, %213 : vector<8x32xf32>
    %215 = arith.mulf %214, %214 : vector<8x32xf32>
    %cst_86 = arith.constant dense<0.000000e+00> : vector<8xf32>
    %216 = vector.multi_reduction <add>, %215, %cst_86 [1] : vector<8x32xf32> to vector<8xf32>
    %217 = vector.shape_cast %216 : vector<8xf32> to vector<8x1xf32>
    %cst_87 = arith.constant 3.200000e+01 : f32
    %218 = vector.broadcast %cst_87 : f32 to vector<8x1xf32>
    %219 = arith.divf %217, %218 : vector<8x1xf32>
    %220 = vector.broadcast %212 : vector<8x1xf32> to vector<8x32xf32>
    %221 = arith.subf %206, %220 : vector<8x32xf32>
    %cst_88 = arith.constant 9.99999974E-6 : f32
    %222 = vector.broadcast %cst_88 : f32 to vector<8x1xf32>
    %223 = arith.addf %219, %222 : vector<8x1xf32>
    %224 = math.rsqrt %223 : vector<8x1xf32>
    %225 = vector.broadcast %224 : vector<8x1xf32> to vector<8x32xf32>
    %226 = arith.mulf %221, %225 : vector<8x32xf32>
    %227 = vector.broadcast %207 : vector<1x32xf32> to vector<8x32xf32>
    %228 = arith.mulf %226, %227 : vector<8x32xf32>
    %229 = vector.broadcast %208 : vector<1x32xf32> to vector<8x32xf32>
    %230 = arith.addf %228, %229 : vector<8x32xf32>
    %cst_89 = arith.constant 0.000000e+00 : f32
    %231 = vector.broadcast %cst_89 : f32 to vector<8x32xf32>
    %232 = arith.maximumf %230, %231 : vector<8x32xf32>
    %c0_90 = arith.constant 0 : index
    %c0_91 = arith.constant 0 : index
    %233 = vector.load %arg28[%c0_90, %c0_91] : memref<1x32xbf16, #tpu.memory_space<vmem>>, vector<1x32xbf16>
    %234 = arith.truncf %232 : vector<8x32xf32> to vector<8x32xbf16>
    %cst_92 = arith.constant dense<0.000000e+00> : vector<1x8xf32>
    %235 = tpu.matmul %233, %234, %cst_92 {dimension_numbers = #tpu.dot_dimension_numbers<[1], [1], [0], [0], [0, 0, 1, 0], [], []>} : vector<1x32xbf16>, vector<8x32xbf16>, vector<1x8xf32> -> vector<1x8xf32>
    %c0_93 = arith.constant 0 : index
    %c0_94 = arith.constant 0 : index
    %236 = vector.load %arg29[%c0_93, %c0_94] : memref<1x1xf32, #tpu.memory_space<vmem>>, vector<1x1xf32>
    %237 = vector.broadcast %236 : vector<1x1xf32> to vector<1x8xf32>
    %238 = arith.addf %235, %237 : vector<1x8xf32>
    %cst_95 = arith.constant 0.000000e+00 : f32
    %239 = vector.broadcast %cst_95 : f32 to vector<1x8xf32>
    %240 = arith.maximumf %238, %239 : vector<1x8xf32>
    %c0_96 = arith.constant 0 : index
    %c0_97 = arith.constant 0 : index
    %c0_98 = arith.constant 0 : index
    %241 = vector.load %arg45[%c0_96, %c0_97, %c0_98] : memref<1x1x8xf32, #tpu.memory_space<vmem>>, vector<1x1x8xf32>
    %242 = vector.shape_cast %241 : vector<1x1x8xf32> to vector<1x8xf32>
    %243 = vector.shape_cast %240 : vector<1x8xf32> to vector<1x1x8xf32>
    tpu.vector_store %arg45[%c0_96, %c0_97, %c0_98], %243 {strides = array<i32>} : memref<1x1x8xf32, #tpu.memory_space<vmem>>, vector<1x1x8xf32>,
    %244 = tpu.iota {dimensions = array<i32: 0>} : vector<16x8xi32>
    %c0_99 = arith.constant 0 : index
    %c0_100 = arith.constant 0 : index
    %c0_101 = arith.constant 0 : index
    %245 = vector.load %arg4[%c0_99, %c0_100, %c0_101] : memref<1x1x8xi32, #tpu.memory_space<vmem>>, vector<1x1x8xi32>
    %246 = vector.shape_cast %245 : vector<1x1x8xi32> to vector<1x8xi32>
    %247 = vector.broadcast %246 : vector<1x8xi32> to vector<16x8xi32>
    %248 = arith.cmpi sge, %244, %247 : vector<16x8xi32>
    %c0_102 = arith.constant 0 : index
    %c0_103 = arith.constant 0 : index
    %c0_104 = arith.constant 0 : index
    %249 = vector.load %arg5[%c0_102, %c0_103, %c0_104] : memref<1x1x8xi32, #tpu.memory_space<vmem>>, vector<1x1x8xi32>
    %250 = vector.shape_cast %249 : vector<1x1x8xi32> to vector<1x8xi32>
    %251 = vector.broadcast %250 : vector<1x8xi32> to vector<16x8xi32>
    %252 = arith.cmpi slt, %244, %251 : vector<16x8xi32>
    %253 = arith.andi %248, %252 : vector<16x8xi1>
    %254 = arith.extui %253 : vector<16x8xi1> to vector<16x8xi32>
    %255 = arith.sitofp %254 : vector<16x8xi32> to vector<16x8xf32>
    %cst_105 = arith.constant dense<0.000000e+00> : vector<16x32xf32>
    %256 = tpu.matmul %255, %156, %cst_105 {dimension_numbers = #tpu.dot_dimension_numbers<[1], [0], [0], [1], [0, 0, 1, 1], [], []>} : vector<16x8xf32>, vector<8x32xf32>, vector<16x32xf32> -> vector<16x32xf32>
    %c0_106 = arith.constant 0 : index
    %c0_107 = arith.constant 0 : index
    %c0_108 = arith.constant 0 : index
    %257 = vector.load %arg6[%c0_106, %c0_107, %c0_108] : memref<1x16x32xf32, #tpu.memory_space<vmem>>, vector<1x16x32xf32>
    %258 = vector.shape_cast %257 : vector<1x16x32xf32> to vector<16x32xf32>
    %259 = arith.addf %256, %258 : vector<16x32xf32>
    %c0_109 = arith.constant 0 : index
    %c0_110 = arith.constant 0 : index
    %c0_111 = arith.constant 0 : index
    %260 = vector.load %arg7[%c0_109, %c0_110, %c0_111] : memref<1x16x1xf32, #tpu.memory_space<vmem>>, vector<1x16x1xf32>
    %261 = vector.shape_cast %260 : vector<1x16x1xf32> to vector<16x1xf32>
    %262 = arith.truncf %259 : vector<16x32xf32> to vector<16x32xbf16>
    %c0_112 = arith.constant 0 : index
    %c0_113 = arith.constant 0 : index
    %263 = vector.load %arg30[%c0_112, %c0_113] : memref<32x96xbf16, #tpu.memory_space<vmem>>, vector<32x96xbf16>
    %cst_114 = arith.constant dense<0.000000e+00> : vector<16x96xf32>
    %264 = tpu.matmul %262, %263, %cst_114 {dimension_numbers = #tpu.dot_dimension_numbers<[1], [0], [0], [1], [0, 0, 1, 1], [], []>} : vector<16x32xbf16>, vector<32x96xbf16>, vector<16x96xf32> -> vector<16x96xf32>
    %c0_115 = arith.constant 0 : index
    %c0_116 = arith.constant 0 : index
    %265 = vector.load %arg31[%c0_115, %c0_116] : memref<1x96xf32, #tpu.memory_space<vmem>>, vector<1x96xf32>
    %266 = vector.broadcast %265 : vector<1x96xf32> to vector<16x96xf32>
    %267 = arith.addf %264, %266 : vector<16x96xf32>
    %c0_117 = arith.constant 0 : index
    %c0_118 = arith.constant 0 : index
    %268 = vector.load %arg32[%c0_117, %c0_118] : memref<32x32xbf16, #tpu.memory_space<vmem>>, vector<32x32xbf16>
    %cst_119 = arith.constant 0.000000e+00 : f32
    %269 = vector.broadcast %cst_119 : f32 to vector<16x32xf32>
    %270 = vector.extract_strided_slice %267 {offsets = [0, 0], sizes = [16, 16], strides = [1, 1]} : vector<16x96xf32> to vector<16x16xf32>
    %271 = vector.extract_strided_slice %267 {offsets = [0, 32], sizes = [16, 16], strides = [1, 1]} : vector<16x96xf32> to vector<16x16xf32>
    %272 = vector.extract_strided_slice %267 {offsets = [0, 64], sizes = [16, 16], strides = [1, 1]} : vector<16x96xf32> to vector<16x16xf32>
    %273 = arith.truncf %270 : vector<16x16xf32> to vector<16x16xbf16>
    %274 = arith.truncf %271 : vector<16x16xf32> to vector<16x16xbf16>
    %cst_120 = arith.constant dense<0.000000e+00> : vector<16x16xf32>
    %275 = tpu.matmul %273, %274, %cst_120 {dimension_numbers = #tpu.dot_dimension_numbers<[1], [1], [0], [0], [0, 0, 1, 0], [], []>} : vector<16x16xbf16>, vector<16x16xbf16>, vector<16x16xf32> -> vector<16x16xf32>
    %cst_121 = arith.constant 2.500000e-01 : f32
    %276 = vector.broadcast %cst_121 : f32 to vector<16x16xf32>
    %277 = arith.mulf %275, %276 : vector<16x16xf32>
    %cst_122 = arith.constant dense<0xFF800000> : vector<16xf32>
    %278 = vector.multi_reduction <maximumf>, %277, %cst_122 [1] : vector<16x16xf32> to vector<16xf32>
    %279 = vector.shape_cast %278 : vector<16xf32> to vector<16x1xf32>
    %280 = vector.broadcast %279 : vector<16x1xf32> to vector<16x16xf32>
    %281 = arith.subf %277, %280 : vector<16x16xf32>
    %282 = math.exp %281 : vector<16x16xf32>
    %cst_123 = arith.constant dense<0.000000e+00> : vector<16xf32>
    %283 = vector.multi_reduction <add>, %282, %cst_123 [1] : vector<16x16xf32> to vector<16xf32>
    %284 = vector.shape_cast %283 : vector<16xf32> to vector<16x1xf32>
    %285 = tpu.reciprocal %284 {approx = true} : vector<16x1xf32> -> vector<16x1xf32>
    %286 = vector.broadcast %285 : vector<16x1xf32> to vector<16x16xf32>
    %287 = arith.mulf %282, %286 : vector<16x16xf32>
    %288 = math.exp %287 : vector<16x16xf32>
    %cst_124 = arith.constant dense<0.000000e+00> : vector<16xf32>
    %289 = vector.multi_reduction <add>, %288, %cst_124 [1] : vector<16x16xf32> to vector<16xf32>
    %290 = vector.shape_cast %289 : vector<16xf32> to vector<16x1xf32>
    %291 = tpu.reciprocal %290 {approx = true} : vector<16x1xf32> -> vector<16x1xf32>
    %292 = vector.broadcast %291 : vector<16x1xf32> to vector<16x16xf32>
    %293 = arith.mulf %288, %292 : vector<16x16xf32>
    %294 = arith.truncf %293 : vector<16x16xf32> to vector<16x16xbf16>
    %295 = arith.truncf %272 : vector<16x16xf32> to vector<16x16xbf16>
    %cst_125 = arith.constant dense<0.000000e+00> : vector<16x16xf32>
    %296 = tpu.matmul %294, %295, %cst_125 {dimension_numbers = #tpu.dot_dimension_numbers<[1], [0], [0], [1], [0, 0, 1, 1], [], []>} : vector<16x16xbf16>, vector<16x16xbf16>, vector<16x16xf32> -> vector<16x16xf32>
    %297 = arith.truncf %296 : vector<16x16xf32> to vector<16x16xbf16>
    %298 = vector.extract_strided_slice %268 {offsets = [0, 0], sizes = [16, 32], strides = [1, 1]} : vector<32x32xbf16> to vector<16x32xbf16>
    %cst_126 = arith.constant dense<0.000000e+00> : vector<16x32xf32>
    %299 = tpu.matmul %297, %298, %cst_126 {dimension_numbers = #tpu.dot_dimension_numbers<[1], [0], [0], [1], [0, 0, 1, 1], [], []>} : vector<16x16xbf16>, vector<16x32xbf16>, vector<16x32xf32> -> vector<16x32xf32>
    %300 = arith.addf %269, %299 : vector<16x32xf32>
    %301 = vector.extract_strided_slice %267 {offsets = [0, 16], sizes = [16, 16], strides = [1, 1]} : vector<16x96xf32> to vector<16x16xf32>
    %302 = vector.extract_strided_slice %267 {offsets = [0, 48], sizes = [16, 16], strides = [1, 1]} : vector<16x96xf32> to vector<16x16xf32>
    %303 = vector.extract_strided_slice %267 {offsets = [0, 80], sizes = [16, 16], strides = [1, 1]} : vector<16x96xf32> to vector<16x16xf32>
    %304 = arith.truncf %301 : vector<16x16xf32> to vector<16x16xbf16>
    %305 = arith.truncf %302 : vector<16x16xf32> to vector<16x16xbf16>
    %cst_127 = arith.constant dense<0.000000e+00> : vector<16x16xf32>
    %306 = tpu.matmul %304, %305, %cst_127 {dimension_numbers = #tpu.dot_dimension_numbers<[1], [1], [0], [0], [0, 0, 1, 0], [], []>} : vector<16x16xbf16>, vector<16x16xbf16>, vector<16x16xf32> -> vector<16x16xf32>
    %cst_128 = arith.constant 2.500000e-01 : f32
    %307 = vector.broadcast %cst_128 : f32 to vector<16x16xf32>
    %308 = arith.mulf %306, %307 : vector<16x16xf32>
    %cst_129 = arith.constant dense<0xFF800000> : vector<16xf32>
    %309 = vector.multi_reduction <maximumf>, %308, %cst_129 [1] : vector<16x16xf32> to vector<16xf32>
    %310 = vector.shape_cast %309 : vector<16xf32> to vector<16x1xf32>
    %311 = vector.broadcast %310 : vector<16x1xf32> to vector<16x16xf32>
    %312 = arith.subf %308, %311 : vector<16x16xf32>
    %313 = math.exp %312 : vector<16x16xf32>
    %cst_130 = arith.constant dense<0.000000e+00> : vector<16xf32>
    %314 = vector.multi_reduction <add>, %313, %cst_130 [1] : vector<16x16xf32> to vector<16xf32>
    %315 = vector.shape_cast %314 : vector<16xf32> to vector<16x1xf32>
    %316 = tpu.reciprocal %315 {approx = true} : vector<16x1xf32> -> vector<16x1xf32>
    %317 = vector.broadcast %316 : vector<16x1xf32> to vector<16x16xf32>
    %318 = arith.mulf %313, %317 : vector<16x16xf32>
    %319 = math.exp %318 : vector<16x16xf32>
    %cst_131 = arith.constant dense<0.000000e+00> : vector<16xf32>
    %320 = vector.multi_reduction <add>, %319, %cst_131 [1] : vector<16x16xf32> to vector<16xf32>
    %321 = vector.shape_cast %320 : vector<16xf32> to vector<16x1xf32>
    %322 = tpu.reciprocal %321 {approx = true} : vector<16x1xf32> -> vector<16x1xf32>
    %323 = vector.broadcast %322 : vector<16x1xf32> to vector<16x16xf32>
    %324 = arith.mulf %319, %323 : vector<16x16xf32>
    %325 = arith.truncf %324 : vector<16x16xf32> to vector<16x16xbf16>
    %326 = arith.truncf %303 : vector<16x16xf32> to vector<16x16xbf16>
    %cst_132 = arith.constant dense<0.000000e+00> : vector<16x16xf32>
    %327 = tpu.matmul %325, %326, %cst_132 {dimension_numbers = #tpu.dot_dimension_numbers<[1], [0], [0], [1], [0, 0, 1, 1], [], []>} : vector<16x16xbf16>, vector<16x16xbf16>, vector<16x16xf32> -> vector<16x16xf32>
    %328 = arith.truncf %327 : vector<16x16xf32> to vector<16x16xbf16>
    %329 = vector.extract_strided_slice %268 {offsets = [16, 0], sizes = [16, 32], strides = [1, 1]} : vector<32x32xbf16> to vector<16x32xbf16>
    %cst_133 = arith.constant dense<0.000000e+00> : vector<16x32xf32>
    %330 = tpu.matmul %328, %329, %cst_133 {dimension_numbers = #tpu.dot_dimension_numbers<[1], [0], [0], [1], [0, 0, 1, 1], [], []>} : vector<16x16xbf16>, vector<16x32xbf16>, vector<16x32xf32> -> vector<16x32xf32>
    %331 = arith.addf %300, %330 : vector<16x32xf32>
    %c0_134 = arith.constant 0 : index
    %c0_135 = arith.constant 0 : index
    %332 = vector.load %arg33[%c0_134, %c0_135] : memref<1x32xf32, #tpu.memory_space<vmem>>, vector<1x32xf32>
    %333 = vector.broadcast %332 : vector<1x32xf32> to vector<16x32xf32>
    %334 = arith.addf %331, %333 : vector<16x32xf32>
    %335 = arith.addf %334, %259 : vector<16x32xf32>
    %c0_136 = arith.constant 0 : index
    %c0_137 = arith.constant 0 : index
    %336 = vector.load %arg34[%c0_136, %c0_137] : memref<1x32xf32, #tpu.memory_space<vmem>>, vector<1x32xf32>
    %c0_138 = arith.constant 0 : index
    %c0_139 = arith.constant 0 : index
    %337 = vector.load %arg35[%c0_138, %c0_139] : memref<1x32xf32, #tpu.memory_space<vmem>>, vector<1x32xf32>
    %cst_140 = arith.constant dense<0.000000e+00> : vector<16xf32>
    %338 = vector.multi_reduction <add>, %335, %cst_140 [1] : vector<16x32xf32> to vector<16xf32>
    %339 = vector.shape_cast %338 : vector<16xf32> to vector<16x1xf32>
    %cst_141 = arith.constant 3.200000e+01 : f32
    %340 = vector.broadcast %cst_141 : f32 to vector<16x1xf32>
    %341 = arith.divf %339, %340 : vector<16x1xf32>
    %342 = vector.broadcast %341 : vector<16x1xf32> to vector<16x32xf32>
    %343 = arith.subf %335, %342 : vector<16x32xf32>
    %344 = arith.mulf %343, %343 : vector<16x32xf32>
    %cst_142 = arith.constant dense<0.000000e+00> : vector<16xf32>
    %345 = vector.multi_reduction <add>, %344, %cst_142 [1] : vector<16x32xf32> to vector<16xf32>
    %346 = vector.shape_cast %345 : vector<16xf32> to vector<16x1xf32>
    %cst_143 = arith.constant 3.200000e+01 : f32
    %347 = vector.broadcast %cst_143 : f32 to vector<16x1xf32>
    %348 = arith.divf %346, %347 : vector<16x1xf32>
    %349 = vector.broadcast %341 : vector<16x1xf32> to vector<16x32xf32>
    %350 = arith.subf %335, %349 : vector<16x32xf32>
    %cst_144 = arith.constant 9.99999974E-6 : f32
    %351 = vector.broadcast %cst_144 : f32 to vector<16x1xf32>
    %352 = arith.addf %348, %351 : vector<16x1xf32>
    %353 = math.rsqrt %352 : vector<16x1xf32>
    %354 = vector.broadcast %353 : vector<16x1xf32> to vector<16x32xf32>
    %355 = arith.mulf %350, %354 : vector<16x32xf32>
    %356 = vector.broadcast %336 : vector<1x32xf32> to vector<16x32xf32>
    %357 = arith.mulf %355, %356 : vector<16x32xf32>
    %358 = vector.broadcast %337 : vector<1x32xf32> to vector<16x32xf32>
    %359 = arith.addf %357, %358 : vector<16x32xf32>
    %360 = vector.broadcast %261 : vector<16x1xf32> to vector<16x32xf32>
    %361 = arith.mulf %359, %360 : vector<16x32xf32>
    %cst_145 = arith.constant 0.000000e+00 : f32
    %362 = vector.broadcast %cst_145 : f32 to vector<4x32xf32>
    %363 = tpu.concatenate %362, %361, %362 in 0 : vector<4x32xf32>, vector<16x32xf32>, vector<4x32xf32> -> vector<24x32xf32>
    %364 = vector.extract_strided_slice %363 {offsets = [0, 0], sizes = [16, 32], strides = [1, 1]} : vector<24x32xf32> to vector<16x32xf32>
    %365 = vector.extract_strided_slice %363 {offsets = [1, 0], sizes = [16, 32], strides = [1, 1]} : vector<24x32xf32> to vector<16x32xf32>
    %366 = vector.extract_strided_slice %363 {offsets = [2, 0], sizes = [16, 32], strides = [1, 1]} : vector<24x32xf32> to vector<16x32xf32>
    %367 = vector.extract_strided_slice %363 {offsets = [3, 0], sizes = [16, 32], strides = [1, 1]} : vector<24x32xf32> to vector<16x32xf32>
    %368 = vector.extract_strided_slice %363 {offsets = [4, 0], sizes = [16, 32], strides = [1, 1]} : vector<24x32xf32> to vector<16x32xf32>
    %369 = vector.extract_strided_slice %363 {offsets = [5, 0], sizes = [16, 32], strides = [1, 1]} : vector<24x32xf32> to vector<16x32xf32>
    %370 = vector.extract_strided_slice %363 {offsets = [6, 0], sizes = [16, 32], strides = [1, 1]} : vector<24x32xf32> to vector<16x32xf32>
    %371 = vector.extract_strided_slice %363 {offsets = [7, 0], sizes = [16, 32], strides = [1, 1]} : vector<24x32xf32> to vector<16x32xf32>
    %372 = vector.extract_strided_slice %363 {offsets = [8, 0], sizes = [16, 32], strides = [1, 1]} : vector<24x32xf32> to vector<16x32xf32>
    %373 = tpu.concatenate %364, %365, %366, %367, %368, %369, %370, %371, %372 in 1 : vector<16x32xf32>, vector<16x32xf32>, vector<16x32xf32>, vector<16x32xf32>, vector<16x32xf32>, vector<16x32xf32>, vector<16x32xf32>, vector<16x32xf32>, vector<16x32xf32> -> vector<16x288xf32>
    %374 = arith.truncf %373 : vector<16x288xf32> to vector<16x288xbf16>
    %c0_146 = arith.constant 0 : index
    %c0_147 = arith.constant 0 : index
    %375 = vector.load %arg36[%c0_146, %c0_147] : memref<288x64xbf16, #tpu.memory_space<vmem>>, vector<288x64xbf16>
    %cst_148 = arith.constant dense<0.000000e+00> : vector<16x64xf32>
    %376 = tpu.matmul %374, %375, %cst_148 {dimension_numbers = #tpu.dot_dimension_numbers<[1], [0], [0], [1], [0, 0, 1, 1], [], []>} : vector<16x288xbf16>, vector<288x64xbf16>, vector<16x64xf32> -> vector<16x64xf32>
    %c0_149 = arith.constant 0 : index
    %c0_150 = arith.constant 0 : index
    %377 = vector.load %arg37[%c0_149, %c0_150] : memref<1x64xf32, #tpu.memory_space<vmem>>, vector<1x64xf32>
    %378 = vector.broadcast %377 : vector<1x64xf32> to vector<16x64xf32>
    %379 = arith.addf %376, %378 : vector<16x64xf32>
    %cst_151 = arith.constant 0.000000e+00 : f32
    %380 = vector.broadcast %cst_151 : f32 to vector<16x64xf32>
    %381 = arith.maximumf %379, %380 : vector<16x64xf32>
    %382 = arith.truncf %381 : vector<16x64xf32> to vector<16x64xbf16>
    %c0_152 = arith.constant 0 : index
    %c0_153 = arith.constant 0 : index
    %383 = vector.load %arg38[%c0_152, %c0_153] : memref<64x32xbf16, #tpu.memory_space<vmem>>, vector<64x32xbf16>
    %cst_154 = arith.constant dense<0.000000e+00> : vector<16x32xf32>
    %384 = tpu.matmul %382, %383, %cst_154 {dimension_numbers = #tpu.dot_dimension_numbers<[1], [0], [0], [1], [0, 0, 1, 1], [], []>} : vector<16x64xbf16>, vector<64x32xbf16>, vector<16x32xf32> -> vector<16x32xf32>
    %c0_155 = arith.constant 0 : index
    %c0_156 = arith.constant 0 : index
    %385 = vector.load %arg39[%c0_155, %c0_156] : memref<1x32xf32, #tpu.memory_space<vmem>>, vector<1x32xf32>
    %386 = vector.broadcast %385 : vector<1x32xf32> to vector<16x32xf32>
    %387 = arith.addf %384, %386 : vector<16x32xf32>
    %388 = arith.addf %387, %361 : vector<16x32xf32>
    %c0_157 = arith.constant 0 : index
    %c0_158 = arith.constant 0 : index
    %389 = vector.load %arg40[%c0_157, %c0_158] : memref<1x32xf32, #tpu.memory_space<vmem>>, vector<1x32xf32>
    %c0_159 = arith.constant 0 : index
    %c0_160 = arith.constant 0 : index
    %390 = vector.load %arg41[%c0_159, %c0_160] : memref<1x32xf32, #tpu.memory_space<vmem>>, vector<1x32xf32>
    %cst_161 = arith.constant dense<0.000000e+00> : vector<16xf32>
    %391 = vector.multi_reduction <add>, %388, %cst_161 [1] : vector<16x32xf32> to vector<16xf32>
    %392 = vector.shape_cast %391 : vector<16xf32> to vector<16x1xf32>
    %cst_162 = arith.constant 3.200000e+01 : f32
    %393 = vector.broadcast %cst_162 : f32 to vector<16x1xf32>
    %394 = arith.divf %392, %393 : vector<16x1xf32>
    %395 = vector.broadcast %394 : vector<16x1xf32> to vector<16x32xf32>
    %396 = arith.subf %388, %395 : vector<16x32xf32>
    %397 = arith.mulf %396, %396 : vector<16x32xf32>
    %cst_163 = arith.constant dense<0.000000e+00> : vector<16xf32>
    %398 = vector.multi_reduction <add>, %397, %cst_163 [1] : vector<16x32xf32> to vector<16xf32>
    %399 = vector.shape_cast %398 : vector<16xf32> to vector<16x1xf32>
    %cst_164 = arith.constant 3.200000e+01 : f32
    %400 = vector.broadcast %cst_164 : f32 to vector<16x1xf32>
    %401 = arith.divf %399, %400 : vector<16x1xf32>
    %402 = vector.broadcast %394 : vector<16x1xf32> to vector<16x32xf32>
    %403 = arith.subf %388, %402 : vector<16x32xf32>
    %cst_165 = arith.constant 9.99999974E-6 : f32
    %404 = vector.broadcast %cst_165 : f32 to vector<16x1xf32>
    %405 = arith.addf %401, %404 : vector<16x1xf32>
    %406 = math.rsqrt %405 : vector<16x1xf32>
    %407 = vector.broadcast %406 : vector<16x1xf32> to vector<16x32xf32>
    %408 = arith.mulf %403, %407 : vector<16x32xf32>
    %409 = vector.broadcast %389 : vector<1x32xf32> to vector<16x32xf32>
    %410 = arith.mulf %408, %409 : vector<16x32xf32>
    %411 = vector.broadcast %390 : vector<1x32xf32> to vector<16x32xf32>
    %412 = arith.addf %410, %411 : vector<16x32xf32>
    %413 = vector.broadcast %261 : vector<16x1xf32> to vector<16x32xf32>
    %414 = arith.mulf %412, %413 : vector<16x32xf32>
    %415 = arith.index_cast %arg0 : i32 to index
    %416 = memref.load %arg1[%415] : memref<2xi32, #tpu.memory_space<smem>>
    %417 = tpu.iota {dimensions = array<i32: 0>} : vector<16x1xi32>
    %418 = vector.broadcast %416 : i32 to vector<16x1xi32>
    %419 = arith.cmpi slt, %417, %418 : vector<16x1xi32>
    %420 = arith.extui %419 : vector<16x1xi1> to vector<16x1xi32>
    %421 = arith.sitofp %420 : vector<16x1xi32> to vector<16x1xf32>
    %422 = vector.broadcast %421 : vector<16x1xf32> to vector<16x32xf32>
    %423 = arith.mulf %414, %422 : vector<16x32xf32>
    %424 = arith.truncf %423 : vector<16x32xf32> to vector<16x32xbf16>
    %c0_166 = arith.constant 0 : index
    %c0_167 = arith.constant 0 : index
    %425 = vector.load %arg42[%c0_166, %c0_167] : memref<32x8xbf16, #tpu.memory_space<vmem>>, vector<32x8xbf16>
    %cst_168 = arith.constant dense<0.000000e+00> : vector<16x8xf32>
    %426 = tpu.matmul %424, %425, %cst_168 {dimension_numbers = #tpu.dot_dimension_numbers<[1], [0], [0], [1], [0, 0, 1, 1], [], []>} : vector<16x32xbf16>, vector<32x8xbf16>, vector<16x8xf32> -> vector<16x8xf32>
    %c0_169 = arith.constant 0 : index
    %c0_170 = arith.constant 0 : index
    %427 = vector.load %arg43[%c0_169, %c0_170] : memref<1x8xf32, #tpu.memory_space<vmem>>, vector<1x8xf32>
    %428 = vector.broadcast %427 : vector<1x8xf32> to vector<16x8xf32>
    %429 = arith.addf %426, %428 : vector<16x8xf32>
    %c0_171 = arith.constant 0 : index
    %c0_172 = arith.constant 0 : index
    %c0_173 = arith.constant 0 : index
    %430 = vector.load %arg44[%c0_171, %c0_172, %c0_173] : memref<1x16x8xf32, #tpu.memory_space<vmem>>, vector<1x16x8xf32>
    %431 = vector.shape_cast %430 : vector<1x16x8xf32> to vector<16x8xf32>
    %432 = vector.shape_cast %429 : vector<16x8xf32> to vector<1x16x8xf32>
    tpu.vector_store %arg44[%c0_171, %c0_172, %c0_173], %432 {strides = array<i32>} : memref<1x16x8xf32, #tpu.memory_space<vmem>>, vector<1x16x8xf32>,
    return
  }
  func.func @transform_0(%arg0: i32, %arg1: memref<2xi32, #tpu.memory_space<smem>>) -> (i32, i32, i32) {
    %c0_i32 = arith.constant 0 : i32
    %c0_i32_0 = arith.constant 0 : i32
    %c0_i32_1 = arith.constant 0 : i32
    return %arg0, %c0_i32, %c0_i32_0 : i32, i32, i32
  }
  func.func @transform_1(%arg0: i32, %arg1: memref<2xi32, #tpu.memory_space<smem>>) -> (i32, i32, i32) {
    %c0_i32 = arith.constant 0 : i32
    %c0_i32_0 = arith.constant 0 : i32
    %c0_i32_1 = arith.constant 0 : i32
    return %arg0, %c0_i32, %c0_i32_0 : i32, i32, i32
  }
  func.func @transform_2(%arg0: i32, %arg1: memref<2xi32, #tpu.memory_space<smem>>) -> (i32, i32, i32) {
    %c0_i32 = arith.constant 0 : i32
    %c0_i32_0 = arith.constant 0 : i32
    %c0_i32_1 = arith.constant 0 : i32
    return %arg0, %c0_i32, %c0_i32_0 : i32, i32, i32
  }
  func.func @transform_3(%arg0: i32, %arg1: memref<2xi32, #tpu.memory_space<smem>>) -> (i32, i32, i32) {
    %c0_i32 = arith.constant 0 : i32
    %c0_i32_0 = arith.constant 0 : i32
    %c0_i32_1 = arith.constant 0 : i32
    return %arg0, %c0_i32, %c0_i32_0 : i32, i32, i32
  }
  func.func @transform_4(%arg0: i32, %arg1: memref<2xi32, #tpu.memory_space<smem>>) -> (i32, i32, i32) {
    %c0_i32 = arith.constant 0 : i32
    %c0_i32_0 = arith.constant 0 : i32
    %c0_i32_1 = arith.constant 0 : i32
    return %arg0, %c0_i32, %c0_i32_0 : i32, i32, i32
  }
  func.func @transform_5(%arg0: i32, %arg1: memref<2xi32, #tpu.memory_space<smem>>) -> (i32, i32, i32) {
    %c0_i32 = arith.constant 0 : i32
    %c0_i32_0 = arith.constant 0 : i32
    %c0_i32_1 = arith.constant 0 : i32
    return %arg0, %c0_i32, %c0_i32_0 : i32, i32, i32
  }
  func.func @transform_6(%arg0: i32, %arg1: memref<2xi32, #tpu.memory_space<smem>>) -> (i32, i32) {
    %c0_i32 = arith.constant 0 : i32
    %c0_i32_0 = arith.constant 0 : i32
    %c0_i32_1 = arith.constant 0 : i32
    return %c0_i32, %c0_i32_0 : i32, i32
  }
  func.func @transform_7(%arg0: i32, %arg1: memref<2xi32, #tpu.memory_space<smem>>) -> (i32, i32) {
    %c0_i32 = arith.constant 0 : i32
    %c0_i32_0 = arith.constant 0 : i32
    %c0_i32_1 = arith.constant 0 : i32
    return %c0_i32, %c0_i32_0 : i32, i32
  }
  func.func @transform_8(%arg0: i32, %arg1: memref<2xi32, #tpu.memory_space<smem>>) -> (i32, i32) {
    %c0_i32 = arith.constant 0 : i32
    %c0_i32_0 = arith.constant 0 : i32
    %c0_i32_1 = arith.constant 0 : i32
    return %c0_i32, %c0_i32_0 : i32, i32
  }
  func.func @transform_9(%arg0: i32, %arg1: memref<2xi32, #tpu.memory_space<smem>>) -> (i32, i32) {
    %c0_i32 = arith.constant 0 : i32
    %c0_i32_0 = arith.constant 0 : i32
    %c0_i32_1 = arith.constant 0 : i32
    return %c0_i32, %c0_i32_0 : i32, i32
  }
  func.func @transform_10(%arg0: i32, %arg1: memref<2xi32, #tpu.memory_space<smem>>) -> (i32, i32) {
    %c0_i32 = arith.constant 0 : i32
    %c0_i32_0 = arith.constant 0 : i32
    %c0_i32_1 = arith.constant 0 : i32
    return %c0_i32, %c0_i32_0 : i32, i32
  }
  func.func @transform_11(%arg0: i32, %arg1: memref<2xi32, #tpu.memory_space<smem>>) -> (i32, i32) {
    %c0_i32 = arith.constant 0 : i32
    %c0_i32_0 = arith.constant 0 : i32
    %c0_i32_1 = arith.constant 0 : i32
    return %c0_i32, %c0_i32_0 : i32, i32
  }
  func.func @transform_12(%arg0: i32, %arg1: memref<2xi32, #tpu.memory_space<smem>>) -> (i32, i32) {
    %c0_i32 = arith.constant 0 : i32
    %c0_i32_0 = arith.constant 0 : i32
    %c0_i32_1 = arith.constant 0 : i32
    return %c0_i32, %c0_i32_0 : i32, i32
  }
  func.func @transform_13(%arg0: i32, %arg1: memref<2xi32, #tpu.memory_space<smem>>) -> (i32, i32) {
    %c0_i32 = arith.constant 0 : i32
    %c0_i32_0 = arith.constant 0 : i32
    %c0_i32_1 = arith.constant 0 : i32
    return %c0_i32, %c0_i32_0 : i32, i32
  }
  func.func @transform_14(%arg0: i32, %arg1: memref<2xi32, #tpu.memory_space<smem>>) -> (i32, i32) {
    %c0_i32 = arith.constant 0 : i32
    %c0_i32_0 = arith.constant 0 : i32
    %c0_i32_1 = arith.constant 0 : i32
    return %c0_i32, %c0_i32_0 : i32, i32
  }
  func.func @transform_15(%arg0: i32, %arg1: memref<2xi32, #tpu.memory_space<smem>>) -> (i32, i32) {
    %c0_i32 = arith.constant 0 : i32
    %c0_i32_0 = arith.constant 0 : i32
    %c0_i32_1 = arith.constant 0 : i32
    return %c0_i32, %c0_i32_0 : i32, i32
  }
  func.func @transform_16(%arg0: i32, %arg1: memref<2xi32, #tpu.memory_space<smem>>) -> (i32, i32) {
    %c0_i32 = arith.constant 0 : i32
    %c0_i32_0 = arith.constant 0 : i32
    %c0_i32_1 = arith.constant 0 : i32
    return %c0_i32, %c0_i32_0 : i32, i32
  }
  func.func @transform_17(%arg0: i32, %arg1: memref<2xi32, #tpu.memory_space<smem>>) -> (i32, i32) {
    %c0_i32 = arith.constant 0 : i32
    %c0_i32_0 = arith.constant 0 : i32
    %c0_i32_1 = arith.constant 0 : i32
    return %c0_i32, %c0_i32_0 : i32, i32
  }
  func.func @transform_18(%arg0: i32, %arg1: memref<2xi32, #tpu.memory_space<smem>>) -> (i32, i32) {
    %c0_i32 = arith.constant 0 : i32
    %c0_i32_0 = arith.constant 0 : i32
    %c0_i32_1 = arith.constant 0 : i32
    return %c0_i32, %c0_i32_0 : i32, i32
  }
  func.func @transform_19(%arg0: i32, %arg1: memref<2xi32, #tpu.memory_space<smem>>) -> (i32, i32) {
    %c0_i32 = arith.constant 0 : i32
    %c0_i32_0 = arith.constant 0 : i32
    %c0_i32_1 = arith.constant 0 : i32
    return %c0_i32, %c0_i32_0 : i32, i32
  }
  func.func @transform_20(%arg0: i32, %arg1: memref<2xi32, #tpu.memory_space<smem>>) -> (i32, i32) {
    %c0_i32 = arith.constant 0 : i32
    %c0_i32_0 = arith.constant 0 : i32
    %c0_i32_1 = arith.constant 0 : i32
    return %c0_i32, %c0_i32_0 : i32, i32
  }
  func.func @transform_21(%arg0: i32, %arg1: memref<2xi32, #tpu.memory_space<smem>>) -> (i32, i32) {
    %c0_i32 = arith.constant 0 : i32
    %c0_i32_0 = arith.constant 0 : i32
    %c0_i32_1 = arith.constant 0 : i32
    return %c0_i32, %c0_i32_0 : i32, i32
  }
  func.func @transform_22(%arg0: i32, %arg1: memref<2xi32, #tpu.memory_space<smem>>) -> (i32, i32) {
    %c0_i32 = arith.constant 0 : i32
    %c0_i32_0 = arith.constant 0 : i32
    %c0_i32_1 = arith.constant 0 : i32
    return %c0_i32, %c0_i32_0 : i32, i32
  }
  func.func @transform_23(%arg0: i32, %arg1: memref<2xi32, #tpu.memory_space<smem>>) -> (i32, i32) {
    %c0_i32 = arith.constant 0 : i32
    %c0_i32_0 = arith.constant 0 : i32
    %c0_i32_1 = arith.constant 0 : i32
    return %c0_i32, %c0_i32_0 : i32, i32
  }
  func.func @transform_24(%arg0: i32, %arg1: memref<2xi32, #tpu.memory_space<smem>>) -> (i32, i32) {
    %c0_i32 = arith.constant 0 : i32
    %c0_i32_0 = arith.constant 0 : i32
    %c0_i32_1 = arith.constant 0 : i32
    return %c0_i32, %c0_i32_0 : i32, i32
  }
  func.func @transform_25(%arg0: i32, %arg1: memref<2xi32, #tpu.memory_space<smem>>) -> (i32, i32) {
    %c0_i32 = arith.constant 0 : i32
    %c0_i32_0 = arith.constant 0 : i32
    %c0_i32_1 = arith.constant 0 : i32
    return %c0_i32, %c0_i32_0 : i32, i32
  }
  func.func @transform_26(%arg0: i32, %arg1: memref<2xi32, #tpu.memory_space<smem>>) -> (i32, i32) {
    %c0_i32 = arith.constant 0 : i32
    %c0_i32_0 = arith.constant 0 : i32
    %c0_i32_1 = arith.constant 0 : i32
    return %c0_i32, %c0_i32_0 : i32, i32
  }
  func.func @transform_27(%arg0: i32, %arg1: memref<2xi32, #tpu.memory_space<smem>>) -> (i32, i32) {
    %c0_i32 = arith.constant 0 : i32
    %c0_i32_0 = arith.constant 0 : i32
    %c0_i32_1 = arith.constant 0 : i32
    return %c0_i32, %c0_i32_0 : i32, i32
  }
  func.func @transform_28(%arg0: i32, %arg1: memref<2xi32, #tpu.memory_space<smem>>) -> (i32, i32) {
    %c0_i32 = arith.constant 0 : i32
    %c0_i32_0 = arith.constant 0 : i32
    %c0_i32_1 = arith.constant 0 : i32
    return %c0_i32, %c0_i32_0 : i32, i32
  }
  func.func @transform_29(%arg0: i32, %arg1: memref<2xi32, #tpu.memory_space<smem>>) -> (i32, i32) {
    %c0_i32 = arith.constant 0 : i32
    %c0_i32_0 = arith.constant 0 : i32
    %c0_i32_1 = arith.constant 0 : i32
    return %c0_i32, %c0_i32_0 : i32, i32
  }
  func.func @transform_30(%arg0: i32, %arg1: memref<2xi32, #tpu.memory_space<smem>>) -> (i32, i32) {
    %c0_i32 = arith.constant 0 : i32
    %c0_i32_0 = arith.constant 0 : i32
    %c0_i32_1 = arith.constant 0 : i32
    return %c0_i32, %c0_i32_0 : i32, i32
  }
  func.func @transform_31(%arg0: i32, %arg1: memref<2xi32, #tpu.memory_space<smem>>) -> (i32, i32) {
    %c0_i32 = arith.constant 0 : i32
    %c0_i32_0 = arith.constant 0 : i32
    %c0_i32_1 = arith.constant 0 : i32
    return %c0_i32, %c0_i32_0 : i32, i32
  }
  func.func @transform_32(%arg0: i32, %arg1: memref<2xi32, #tpu.memory_space<smem>>) -> (i32, i32) {
    %c0_i32 = arith.constant 0 : i32
    %c0_i32_0 = arith.constant 0 : i32
    %c0_i32_1 = arith.constant 0 : i32
    return %c0_i32, %c0_i32_0 : i32, i32
  }
  func.func @transform_33(%arg0: i32, %arg1: memref<2xi32, #tpu.memory_space<smem>>) -> (i32, i32) {
    %c0_i32 = arith.constant 0 : i32
    %c0_i32_0 = arith.constant 0 : i32
    %c0_i32_1 = arith.constant 0 : i32
    return %c0_i32, %c0_i32_0 : i32, i32
  }
  func.func @transform_34(%arg0: i32, %arg1: memref<2xi32, #tpu.memory_space<smem>>) -> (i32, i32) {
    %c0_i32 = arith.constant 0 : i32
    %c0_i32_0 = arith.constant 0 : i32
    %c0_i32_1 = arith.constant 0 : i32
    return %c0_i32, %c0_i32_0 : i32, i32
  }
  func.func @transform_35(%arg0: i32, %arg1: memref<2xi32, #tpu.memory_space<smem>>) -> (i32, i32) {
    %c0_i32 = arith.constant 0 : i32
    %c0_i32_0 = arith.constant 0 : i32
    %c0_i32_1 = arith.constant 0 : i32
    return %c0_i32, %c0_i32_0 : i32, i32
  }
  func.func @transform_36(%arg0: i32, %arg1: memref<2xi32, #tpu.memory_space<smem>>) -> (i32, i32) {
    %c0_i32 = arith.constant 0 : i32
    %c0_i32_0 = arith.constant 0 : i32
    %c0_i32_1 = arith.constant 0 : i32
    return %c0_i32, %c0_i32_0 : i32, i32
  }
  func.func @transform_37(%arg0: i32, %arg1: memref<2xi32, #tpu.memory_space<smem>>) -> (i32, i32) {
    %c0_i32 = arith.constant 0 : i32
    %c0_i32_0 = arith.constant 0 : i32
    %c0_i32_1 = arith.constant 0 : i32
    return %c0_i32, %c0_i32_0 : i32, i32
  }
  func.func @transform_38(%arg0: i32, %arg1: memref<2xi32, #tpu.memory_space<smem>>) -> (i32, i32) {
    %c0_i32 = arith.constant 0 : i32
    %c0_i32_0 = arith.constant 0 : i32
    %c0_i32_1 = arith.constant 0 : i32
    return %c0_i32, %c0_i32_0 : i32, i32
  }
  func.func @transform_39(%arg0: i32, %arg1: memref<2xi32, #tpu.memory_space<smem>>) -> (i32, i32) {
    %c0_i32 = arith.constant 0 : i32
    %c0_i32_0 = arith.constant 0 : i32
    %c0_i32_1 = arith.constant 0 : i32
    return %c0_i32, %c0_i32_0 : i32, i32
  }
  func.func @transform_40(%arg0: i32, %arg1: memref<2xi32, #tpu.memory_space<smem>>) -> (i32, i32) {
    %c0_i32 = arith.constant 0 : i32
    %c0_i32_0 = arith.constant 0 : i32
    %c0_i32_1 = arith.constant 0 : i32
    return %c0_i32, %c0_i32_0 : i32, i32
  }
  func.func @transform_41(%arg0: i32, %arg1: memref<2xi32, #tpu.memory_space<smem>>) -> (i32, i32) {
    %c0_i32 = arith.constant 0 : i32
    %c0_i32_0 = arith.constant 0 : i32
    %c0_i32_1 = arith.constant 0 : i32
    return %c0_i32, %c0_i32_0 : i32, i32
  }
  func.func @transform_42(%arg0: i32, %arg1: memref<2xi32, #tpu.memory_space<smem>>) -> (i32, i32, i32) {
    %c0_i32 = arith.constant 0 : i32
    %c0_i32_0 = arith.constant 0 : i32
    %c0_i32_1 = arith.constant 0 : i32
    return %arg0, %c0_i32, %c0_i32_0 : i32, i32, i32
  }
  func.func @transform_43(%arg0: i32, %arg1: memref<2xi32, #tpu.memory_space<smem>>) -> (i32, i32, i32) {
    %c0_i32 = arith.constant 0 : i32
    %c0_i32_0 = arith.constant 0 : i32
    %c0_i32_1 = arith.constant 0 : i32
    return %arg0, %c0_i32, %c0_i32_0 : i32, i32, i32
  }
}

</mosaic_0001>

<llo_original>
// kernel: sub.1
$region0: #{sub.1}
  #allocation0 [shape = 's32[1]{0}', space=sflag, size = 0x4, scoped, tag = 'scoped memory for sub.1']
  %s0 = inlined_call_operand.vmem [shape: s32[2,8], index: 0, kind: input, shape index: {}]
  %s1 = inlined_call_operand.vmem [shape: s32[2,8], index: 1, kind: input, shape index: {}]
  %s2 = inlined_call_operand.vmem [shape: s32[2,8], index: 2, kind: output, shape index: {}]
  %v3 = vld [vmem:[%s0] sm:$0x3]
  %v4 = vld [vmem:[%s1] sm:$0x3]
  %5 = xla_tuple %v3, %v4
  %6 = xla_tuple %5
  %v7 = vsub.s32 %v3, %v4
  %8 = xla_tuple %v7
  %9 = vst [vmem:[%s2] sm:$0x3] %v7

// kernel: run.1
$region0: #{run.1}
  #allocation0 [shape = 'u32[]', space=smem, size = 0x4, offset = 0x4, fixed_abs, tag = 'smem constant byte address 0x4 - core index']
  #allocation1 [shape = 'u32[144,128]{1,0:T(1,128)}', space=vmem, size = 0x12000, scoped, tag = 'internal scratch']
  #allocation2 [shape = 's32[1]{0}', space=sflag, size = 0x4, scoped, tag = 'scoped memory for run.1']
  #allocation3 [shape = 'u8[512]{0}', space=smem, size = 0x200, scoped, tag = 'prefetched SMEM operand 0']
  #allocation4 [shape = 'f32[1,1]{1,0:T(1,128)S(1)}', space=vmem, size = 0x200, scoped, tag = 'scoped memory for run.1']
  %s0 = inlined_call_operand.smem [shape: u32[45], index: -1, kind: input, shape index: {}]
  %s1 = sld [smem:[%s0]]
  %s2 = scalar_lea.smem %s0, 1
  %s3 = sld [smem:[%s2]]
  %s4 = scalar_lea.smem %s0, 2
  %s5 = sld [smem:[%s4]]
  %s6 = scalar_lea.smem %s0, 3
  %s7 = sld [smem:[%s6]]
  %s8 = scalar_lea.smem %s0, 4
  %s9 = sld [smem:[%s8]]
  %s10 = scalar_lea.smem %s0, 5
  %s11 = sld [smem:[%s10]]
  %s12 = scalar_lea.smem %s0, 6
  %s13 = sld [smem:[%s12]]
  %s14 = scalar_lea.smem %s0, 7
  %s15 = sld [smem:[%s14]]
  %s16 = scalar_lea.smem %s0, 8
  %s17 = sld [smem:[%s16]]
  %s18 = scalar_lea.smem %s0, 9
  %s19 = sld [smem:[%s18]]
  %s20 = scalar_lea.smem %s0, 10
  %s21 = sld [smem:[%s20]]
  %s22 = scalar_lea.smem %s0, 11
  %s23 = sld [smem:[%s22]]
  %s24 = scalar_lea.smem %s0, 12
  %s25 = sld [smem:[%s24]]
  %s26 = scalar_lea.smem %s0, 13
  %s27 = sld [smem:[%s26]]
  %s28 = scalar_lea.smem %s0, 14
  %s29 = sld [smem:[%s28]]
  %s30 = scalar_lea.smem %s0, 15
  %s31 = sld [smem:[%s30]]
  %s32 = scalar_lea.smem %s0, 16
  %s33 = sld [smem:[%s32]]
  %s34 = scalar_lea.smem %s0, 17
  %s35 = sld [smem:[%s34]]
  %s36 = scalar_lea.smem %s0, 18
  %s37 = sld [smem:[%s36]]
  %s38 = scalar_lea.smem %s0, 19
  %s39 = sld [smem:[%s38]]
  %s40 = scalar_lea.smem %s0, 20
  %s41 = sld [smem:[%s40]]
  %s42 = scalar_lea.smem %s0, 21
  %s43 = sld [smem:[%s42]]
  %s44 = scalar_lea.smem %s0, 22
  %s45 = sld [smem:[%s44]]
  %s46 = scalar_lea.smem %s0, 23
  %s47 = sld [smem:[%s46]]
  %s48 = scalar_lea.smem %s0, 24
  %s49 = sld [smem:[%s48]]
  %s50 = scalar_lea.smem %s0, 25
  %s51 = sld [smem:[%s50]]
  %s52 = scalar_lea.smem %s0, 26
  %s53 = sld [smem:[%s52]]
  %s54 = scalar_lea.smem %s0, 27
  %s55 = sld [smem:[%s54]]
  %s56 = scalar_lea.smem %s0, 28
  %s57 = sld [smem:[%s56]]
  %s58 = scalar_lea.smem %s0, 29
  %s59 = sld [smem:[%s58]]
  %s60 = scalar_lea.smem %s0, 30
  %s61 = sld [smem:[%s60]]
  %s62 = scalar_lea.smem %s0, 31
  %s63 = sld [smem:[%s62]]
  %s64 = scalar_lea.smem %s0, 32
  %s65 = sld [smem:[%s64]]
  %s66 = scalar_lea.smem %s0, 33
  %s67 = sld [smem:[%s66]]
  %s68 = scalar_lea.smem %s0, 34
  %s69 = sld [smem:[%s68]]
  %s70 = scalar_lea.smem %s0, 35
  %s71 = sld [smem:[%s70]]
  %s72 = scalar_lea.smem %s0, 36
  %s73 = sld [smem:[%s72]]
  %s74 = scalar_lea.smem %s0, 37
  %s75 = sld [smem:[%s74]]
  %s76 = scalar_lea.smem %s0, 38
  %s77 = sld [smem:[%s76]]
  %s78 = scalar_lea.smem %s0, 39
  %s79 = sld [smem:[%s78]]
  %s80 = scalar_lea.smem %s0, 40
  %s81 = sld [smem:[%s80]]
  %s82 = scalar_lea.smem %s0, 41
  %s83 = sld [smem:[%s82]]
  %s84 = scalar_lea.smem %s0, 42
  %s85 = sld [smem:[%s84]]
  %s86 = scalar_lea.smem %s0, 43
  %s87 = sld [smem:[%s86]]
  %s88 = scalar_lea.smem %s0, 44
  %s89 = sld [smem:[%s88]]
  %90 = xla_tuple %s87, %s89
  %s91 = sld [smem:[#allocation0]]
  $region209: #{run.1} parent=0
    _
  %s93 = ssub.s32 1, %s91
  %s94 = scalar_select 0, %s93, %s91
  %s95 = sshll.u32 %s1, 4
  %s96 = int_to_ptr.vmem [resolvable:$true] %s95
  %98 = dma.vmem_to_smem %s96, 16, [#allocation3], [#allocation2]
  %v99 = vstv %s57
  %100 = vst [vmem:[#allocation4] sm:$0x1] %v99
  %101 = dma.done [#allocation2], 16
  %102 = sfence
  $region1: #{run.1} parent=0
    #allocation5 [shape = 'u8[1024]{0}', space=vmem, size = 0x400, scoped, tag = 'output window, operand 1']
    #allocation6 [shape = 's32[2]{0}', space=sflag, size = 0x8, scoped, tag = 'scoped memory for run.1']
    %103 = vsyncpa [#allocation6], 0
    %s104 = scalar_lea.sflag [#allocation6], 1
    %105 = vsyncpa %s104, 0
    loop: start=0, step=1, limit=4
    $region2: #{run.1} parent=1 // loop_pre_header
      _
    $region3: #{run.1} parent=1 // loop_header
      %s107 = sphi 0, %s111
      %p108 = scmp.ge.s32.totalorder %s107, 4
      %s117 = sphi 0, %s119
      %s120 = sphi 0, %s117
      %s121 = sphi 0, %s120
      %s137 = sphi 0, %s121
      %s143 = sphi 0, %s145
      %s146 = sphi 0, %s143
      %s147 = sphi 0, %s146
      %s163 = sphi 0, %s147
      %s169 = sphi 0, %s171
      %s172 = sphi 0, %s169
      %s173 = sphi 0, %s172
      %s189 = sphi 0, %s173
      %s195 = sphi 0, %s197
      %s198 = sphi 0, %s195
      %s199 = sphi 0, %s198
      %s215 = sphi 0, %s199
      %s221 = sphi 0, %s223
      %s224 = sphi 0, %s221
      %s225 = sphi 0, %s224
      %s241 = sphi 0, %s225
      %s247 = sphi 0, %s249
      %s250 = sphi 0, %s247
      %s251 = sphi 0, %s250
      %s267 = sphi 0, %s251
      %s271 = sphi 0, %s271
      %s273 = sphi 0, %s271
      %s274 = sphi 0, %s273
      %s288 = sphi 0, %s274
      %s292 = sphi 0, %s292
      %s294 = sphi 0, %s292
      %s295 = sphi 0, %s294
      %s309 = sphi 0, %s295
      %s313 = sphi 0, %s313
      %s315 = sphi 0, %s313
      %s316 = sphi 0, %s315
      %s330 = sphi 0, %s316
      %s334 = sphi 0, %s334
      %s336 = sphi 0, %s334
      %s337 = sphi 0, %s336
      %s351 = sphi 0, %s337
      %s355 = sphi 0, %s355
      %s357 = sphi 0, %s355
      %s358 = sphi 0, %s357
      %s372 = sphi 0, %s358
      %s376 = sphi 0, %s376
      %s378 = sphi 0, %s376
      %s379 = sphi 0, %s378
      %s393 = sphi 0, %s379
      %s397 = sphi 0, %s397
      %s399 = sphi 0, %s397
      %s400 = sphi 0, %s399
      %s414 = sphi 0, %s400
      %s418 = sphi 0, %s418
      %s420 = sphi 0, %s418
      %s421 = sphi 0, %s420
      %s435 = sphi 0, %s421
      %s439 = sphi 0, %s439
      %s441 = sphi 0, %s439
      %s442 = sphi 0, %s441
      %s456 = sphi 0, %s442
      %s460 = sphi 0, %s460
      %s462 = sphi 0, %s460
      %s463 = sphi 0, %s462
      %s477 = sphi 0, %s463
      %s481 = sphi 0, %s481
      %s483 = sphi 0, %s481
      %s484 = sphi 0, %s483
      %s498 = sphi 0, %s484
      %s502 = sphi 0, %s502
      %s504 = sphi 0, %s502
      %s505 = sphi 0, %s504
      %s519 = sphi 0, %s505
      %s523 = sphi 0, %s523
      %s525 = sphi 0, %s523
      %s526 = sphi 0, %s525
      %s540 = sphi 0, %s526
      %s544 = sphi 0, %s544
      %s546 = sphi 0, %s544
      %s547 = sphi 0, %s546
      %s561 = sphi 0, %s547
      %s565 = sphi 0, %s565
      %s567 = sphi 0, %s565
      %s568 = sphi 0, %s567
      %s582 = sphi 0, %s568
      %s586 = sphi 0, %s586
      %s588 = sphi 0, %s586
      %s589 = sphi 0, %s588
      %s603 = sphi 0, %s589
      %s607 = sphi 0, %s607
      %s609 = sphi 0, %s607
      %s610 = sphi 0, %s609
      %s624 = sphi 0, %s610
      %s628 = sphi 0, %s628
      %s630 = sphi 0, %s628
      %s631 = sphi 0, %s630
      %s645 = sphi 0, %s631
      %s649 = sphi 0, %s649
      %s651 = sphi 0, %s649
      %s652 = sphi 0, %s651
      %s666 = sphi 0, %s652
      %s670 = sphi 0, %s670
      %s672 = sphi 0, %s670
      %s673 = sphi 0, %s672
      %s687 = sphi 0, %s673
      %s691 = sphi 0, %s691
      %s693 = sphi 0, %s691
      %s694 = sphi 0, %s693
      %s708 = sphi 0, %s694
      %s712 = sphi 0, %s712
      %s714 = sphi 0, %s712
      %s715 = sphi 0, %s714
      %s729 = sphi 0, %s715
      %s733 = sphi 0, %s733
      %s735 = sphi 0, %s733
      %s736 = sphi 0, %s735
      %s750 = sphi 0, %s736
      %s754 = sphi 0, %s754
      %s756 = sphi 0, %s754
      %s757 = sphi 0, %s756
      %s771 = sphi 0, %s757
      %s775 = sphi 0, %s775
      %s777 = sphi 0, %s775
      %s778 = sphi 0, %s777
      %s792 = sphi 0, %s778
      %s796 = sphi 0, %s796
      %s798 = sphi 0, %s796
      %s799 = sphi 0, %s798
      %s813 = sphi 0, %s799
      %s817 = sphi 0, %s817
      %s819 = sphi 0, %s817
      %s820 = sphi 0, %s819
      %s834 = sphi 0, %s820
      %s838 = sphi 0, %s838
      %s840 = sphi 0, %s838
      %s841 = sphi 0, %s840
      %s855 = sphi 0, %s841
      %s859 = sphi 0, %s859
      %s861 = sphi 0, %s859
      %s862 = sphi 0, %s861
      %s876 = sphi 0, %s862
      %s880 = sphi 0, %s880
      %s882 = sphi 0, %s880
      %s883 = sphi 0, %s882
      %s897 = sphi 0, %s883
      %s901 = sphi 0, %s901
      %s903 = sphi 0, %s901
      %s904 = sphi 0, %s903
      %s918 = sphi 0, %s904
      %s922 = sphi 0, %s922
      %s924 = sphi 0, %s922
      %s925 = sphi 0, %s924
      %s939 = sphi 0, %s925
      %s943 = sphi 0, %s943
      %s945 = sphi 0, %s943
      %s946 = sphi 0, %s945
      %s960 = sphi 0, %s946
      %s964 = sphi 0, %s964
      %s966 = sphi 0, %s964
      %s967 = sphi 0, %s966
      %s981 = sphi 0, %s967
      %s985 = sphi 0, %s985
      %s987 = sphi 0, %s985
      %s988 = sphi 0, %s987
      %s1002 = sphi 0, %s988
      %s1006 = sphi 0, %s1006
      %s1008 = sphi 0, %s1006
      %s1009 = sphi 0, %s1008
      %s1023 = sphi 0, %s1009
      %s1029 = sphi 0, %s1031
      %s1032 = sphi 0, %s1029
      %s1033 = sphi 0, %s1032
      %s1049 = sphi 0, %s1033
      %s1055 = sphi 0, %s1057
      %s1058 = sphi 0, %s1055
      %s1059 = sphi 0, %s1058
      %s1075 = sphi 0, %s1059
    $region4: #{run.1} parent=1 // loop_header_branch
      %110 = sbr.rel (%p108) target = $region8
    $region5: #{run.1} parent=1 // loop_body
      %s112 = ssub.s32 %s107, 1
      %s113 = ssub.s32 %s107, 2
      %s114 = sadd.s32 %s107, 1
      %s115 = ssub.s32 %s107, %s114
      %p116 = scmp.eq.s32.totalorder %s115, 0
      %s118 = sadd.s32 %s117, 1
      %s119 = scalar_select %p116, %s117, %s118
      %p122 = pneg %p116
      %p123 = scmp.eq.s32.totalorder %s107, 1
      %p124 = por %p122, %p123
      %p125 = scmp.ne.s32.totalorder %s117, %s120
      %p126 = scmp.eq.s32.totalorder %s107, 0
      %p127 = por %p125, %p126
      %p128 = scmp.ne.s32.totalorder %s117, %s120
      %p129 = scmp.eq.s32.totalorder %s112, 1
      %p130 = por %p128, %p129
      %p131 = scmp.ne.s32.totalorder %s120, %s121
      %p132 = scmp.eq.s32.totalorder %s112, 0
      %p133 = por %p131, %p132
      %p134 = scmp.ne.s32.totalorder %s120, %s121
      %p135 = scmp.eq.s32.totalorder %s113, 1
      %p136 = por %p134, %p135
      %p138 = scmp.ne.s32.totalorder %s121, %s137
      %p139 = scmp.eq.s32.totalorder %s113, 0
      %p140 = por %p138, %p139
      %s141 = ssub.s32 %s107, %s114
      %p142 = scmp.eq.s32.totalorder %s141, 0
      %s144 = sadd.s32 %s143, 1
      %s145 = scalar_select %p142, %s143, %s144
      %p148 = pneg %p142
      %p149 = scmp.eq.s32.totalorder %s107, 1
      %p150 = por %p148, %p149
      %p151 = scmp.ne.s32.totalorder %s143, %s146
      %p152 = scmp.eq.s32.totalorder %s107, 0
      %p153 = por %p151, %p152
      %p154 = scmp.ne.s32.totalorder %s143, %s146
      %p155 = scmp.eq.s32.totalorder %s112, 1
      %p156 = por %p154, %p155
      %p157 = scmp.ne.s32.totalorder %s146, %s147
      %p158 = scmp.eq.s32.totalorder %s112, 0
      %p159 = por %p157, %p158
      %p160 = scmp.ne.s32.totalorder %s146, %s147
      %p161 = scmp.eq.s32.totalorder %s113, 1
      %p162 = por %p160, %p161
      %p164 = scmp.ne.s32.totalorder %s147, %s163
      %p165 = scmp.eq.s32.totalorder %s113, 0
      %p166 = por %p164, %p165
      %s167 = ssub.s32 %s107, %s114
      %p168 = scmp.eq.s32.totalorder %s167, 0
      %s170 = sadd.s32 %s169, 1
      %s171 = scalar_select %p168, %s169, %s170
      %p174 = pneg %p168
      %p175 = scmp.eq.s32.totalorder %s107, 1
      %p176 = por %p174, %p175
      %p177 = scmp.ne.s32.totalorder %s169, %s172
      %p178 = scmp.eq.s32.totalorder %s107, 0
      %p179 = por %p177, %p178
      %p180 = scmp.ne.s32.totalorder %s169, %s172
      %p181 = scmp.eq.s32.totalorder %s112, 1
      %p182 = por %p180, %p181
      %p183 = scmp.ne.s32.totalorder %s172, %s173
      %p184 = scmp.eq.s32.totalorder %s112, 0
      %p185 = por %p183, %p184
      %p186 = scmp.ne.s32.totalorder %s172, %s173
      %p187 = scmp.eq.s32.totalorder %s113, 1
      %p188 = por %p186, %p187
      %p190 = scmp.ne.s32.totalorder %s173, %s189
      %p191 = scmp.eq.s32.totalorder %s113, 0
      %p192 = por %p190, %p191
      %s193 = ssub.s32 %s107, %s114
      %p194 = scmp.eq.s32.totalorder %s193, 0
      %s196 = sadd.s32 %s195, 1
      %s197 = scalar_select %p194, %s195, %s196
      %p200 = pneg %p194
      %p201 = scmp.eq.s32.totalorder %s107, 1
      %p202 = por %p200, %p201
      %p203 = scmp.ne.s32.totalorder %s195, %s198
      %p204 = scmp.eq.s32.totalorder %s107, 0
      %p205 = por %p203, %p204
      %p206 = scmp.ne.s32.totalorder %s195, %s198
      %p207 = scmp.eq.s32.totalorder %s112, 1
      %p208 = por %p206, %p207
      %p209 = scmp.ne.s32.totalorder %s198, %s199
      %p210 = scmp.eq.s32.totalorder %s112, 0
      %p211 = por %p209, %p210
      %p212 = scmp.ne.s32.totalorder %s198, %s199
      %p213 = scmp.eq.s32.totalorder %s113, 1
      %p214 = por %p212, %p213
      %p216 = scmp.ne.s32.totalorder %s199, %s215
      %p217 = scmp.eq.s32.totalorder %s113, 0
      %p218 = por %p216, %p217
      %s219 = ssub.s32 %s107, %s114
      %p220 = scmp.eq.s32.totalorder %s219, 0
      %s222 = sadd.s32 %s221, 1
      %s223 = scalar_select %p220, %s221, %s222
      %p226 = pneg %p220
      %p227 = scmp.eq.s32.totalorder %s107, 1
      %p228 = por %p226, %p227
      %p229 = scmp.ne.s32.totalorder %s221, %s224
      %p230 = scmp.eq.s32.totalorder %s107, 0
      %p231 = por %p229, %p230
      %p232 = scmp.ne.s32.totalorder %s221, %s224
      %p233 = scmp.eq.s32.totalorder %s112, 1
      %p234 = por %p232, %p233
      %p235 = scmp.ne.s32.totalorder %s224, %s225
      %p236 = scmp.eq.s32.totalorder %s112, 0
      %p237 = por %p235, %p236
      %p238 = scmp.ne.s32.totalorder %s224, %s225
      %p239 = scmp.eq.s32.totalorder %s113, 1
      %p240 = por %p238, %p239
      %p242 = scmp.ne.s32.totalorder %s225, %s241
      %p243 = scmp.eq.s32.totalorder %s113, 0
      %p244 = por %p242, %p243
      %s245 = ssub.s32 %s107, %s114
      %p246 = scmp.eq.s32.totalorder %s245, 0
      %s248 = sadd.s32 %s247, 1
      %s249 = scalar_select %p246, %s247, %s248
      %p252 = pneg %p246
      %p253 = scmp.eq.s32.totalorder %s107, 1
      %p254 = por %p252, %p253
      %p255 = scmp.ne.s32.totalorder %s247, %s250
      %p256 = scmp.eq.s32.totalorder %s107, 0
      %p257 = por %p255, %p256
      %p258 = scmp.ne.s32.totalorder %s247, %s250
      %p259 = scmp.eq.s32.totalorder %s112, 1
      %p260 = por %p258, %p259
      %p261 = scmp.ne.s32.totalorder %s250, %s251
      %p262 = scmp.eq.s32.totalorder %s112, 0
      %p263 = por %p261, %p262
      %p264 = scmp.ne.s32.totalorder %s250, %s251
      %p265 = scmp.eq.s32.totalorder %s113, 1
      %p266 = por %p264, %p265
      %p268 = scmp.ne.s32.totalorder %s251, %s267
      %p269 = scmp.eq.s32.totalorder %s113, 0
      %p270 = por %p268, %p269
      %s272 = sadd.s32 %s271, 1
      %p275 = scmp.eq.s32.totalorder %s107, 1
      %p276 = scmp.ne.s32.totalorder %s271, %s273
      %p277 = scmp.eq.s32.totalorder %s107, 0
      %p278 = por %p276, %p277
      %p279 = scmp.ne.s32.totalorder %s271, %s273
      %p280 = scmp.eq.s32.totalorder %s112, 1
      %p281 = por %p279, %p280
      %p282 = scmp.ne.s32.totalorder %s273, %s274
      %p283 = scmp.eq.s32.totalorder %s112, 0
      %p284 = por %p282, %p283
      %p285 = scmp.ne.s32.totalorder %s273, %s274
      %p286 = scmp.eq.s32.totalorder %s113, 1
      %p287 = por %p285, %p286
      %p289 = scmp.ne.s32.totalorder %s274, %s288
      %p290 = scmp.eq.s32.totalorder %s113, 0
      %p291 = por %p289, %p290
      %s293 = sadd.s32 %s292, 1
      %p296 = scmp.eq.s32.totalorder %s107, 1
      %p297 = scmp.ne.s32.totalorder %s292, %s294
      %p298 = scmp.eq.s32.totalorder %s107, 0
      %p299 = por %p297, %p298
      %p300 = scmp.ne.s32.totalorder %s292, %s294
      %p301 = scmp.eq.s32.totalorder %s112, 1
      %p302 = por %p300, %p301
      %p303 = scmp.ne.s32.totalorder %s294, %s295
      %p304 = scmp.eq.s32.totalorder %s112, 0
      %p305 = por %p303, %p304
      %p306 = scmp.ne.s32.totalorder %s294, %s295
      %p307 = scmp.eq.s32.totalorder %s113, 1
      %p308 = por %p306, %p307
      %p310 = scmp.ne.s32.totalorder %s295, %s309
      %p311 = scmp.eq.s32.totalorder %s113, 0
      %p312 = por %p310, %p311
      %s314 = sadd.s32 %s313, 1
      %p317 = scmp.eq.s32.totalorder %s107, 1
      %p318 = scmp.ne.s32.totalorder %s313, %s315
      %p319 = scmp.eq.s32.totalorder %s107, 0
      %p320 = por %p318, %p319
      %p321 = scmp.ne.s32.totalorder %s313, %s315
      %p322 = scmp.eq.s32.totalorder %s112, 1
      %p323 = por %p321, %p322
      %p324 = scmp.ne.s32.totalorder %s315, %s316
      %p325 = scmp.eq.s32.totalorder %s112, 0
      %p326 = por %p324, %p325
      %p327 = scmp.ne.s32.totalorder %s315, %s316
      %p328 = scmp.eq.s32.totalorder %s113, 1
      %p329 = por %p327, %p328
      %p331 = scmp.ne.s32.totalorder %s316, %s330
      %p332 = scmp.eq.s32.totalorder %s113, 0
      %p333 = por %p331, %p332
      %s335 = sadd.s32 %s334, 1
      %p338 = scmp.eq.s32.totalorder %s107, 1
      %p339 = scmp.ne.s32.totalorder %s334, %s336
      %p340 = scmp.eq.s32.totalorder %s107, 0
      %p341 = por %p339, %p340
      %p342 = scmp.ne.s32.totalorder %s334, %s336
      %p343 = scmp.eq.s32.totalorder %s112, 1
      %p344 = por %p342, %p343
      %p345 = scmp.ne.s32.totalorder %s336, %s337
      %p346 = scmp.eq.s32.totalorder %s112, 0
      %p347 = por %p345, %p346
      %p348 = scmp.ne.s32.totalorder %s336, %s337
      %p349 = scmp.eq.s32.totalorder %s113, 1
      %p350 = por %p348, %p349
      %p352 = scmp.ne.s32.totalorder %s337, %s351
      %p353 = scmp.eq.s32.totalorder %s113, 0
      %p354 = por %p352, %p353
      %s356 = sadd.s32 %s355, 1
      %p359 = scmp.eq.s32.totalorder %s107, 1
      %p360 = scmp.ne.s32.totalorder %s355, %s357
      %p361 = scmp.eq.s32.totalorder %s107, 0
      %p362 = por %p360, %p361
      %p363 = scmp.ne.s32.totalorder %s355, %s357
      %p364 = scmp.eq.s32.totalorder %s112, 1
      %p365 = por %p363, %p364
      %p366 = scmp.ne.s32.totalorder %s357, %s358
      %p367 = scmp.eq.s32.totalorder %s112, 0
      %p368 = por %p366, %p367
      %p369 = scmp.ne.s32.totalorder %s357, %s358
      %p370 = scmp.eq.s32.totalorder %s113, 1
      %p371 = por %p369, %p370
      %p373 = scmp.ne.s32.totalorder %s358, %s372
      %p374 = scmp.eq.s32.totalorder %s113, 0
      %p375 = por %p373, %p374
      %s377 = sadd.s32 %s376, 1
      %p380 = scmp.eq.s32.totalorder %s107, 1
      %p381 = scmp.ne.s32.totalorder %s376, %s378
      %p382 = scmp.eq.s32.totalorder %s107, 0
      %p383 = por %p381, %p382
      %p384 = scmp.ne.s32.totalorder %s376, %s378
      %p385 = scmp.eq.s32.totalorder %s112, 1
      %p386 = por %p384, %p385
      %p387 = scmp.ne.s32.totalorder %s378, %s379
      %p388 = scmp.eq.s32.totalorder %s112, 0
      %p389 = por %p387, %p388
      %p390 = scmp.ne.s32.totalorder %s378, %s379
      %p391 = scmp.eq.s32.totalorder %s113, 1
      %p392 = por %p390, %p391
      %p394 = scmp.ne.s32.totalorder %s379, %s393
      %p395 = scmp.eq.s32.totalorder %s113, 0
      %p396 = por %p394, %p395
      %s398 = sadd.s32 %s397, 1
      %p401 = scmp.eq.s32.totalorder %s107, 1
      %p402 = scmp.ne.s32.totalorder %s397, %s399
      %p403 = scmp.eq.s32.totalorder %s107, 0
      %p404 = por %p402, %p403
      %p405 = scmp.ne.s32.totalorder %s397, %s399
      %p406 = scmp.eq.s32.totalorder %s112, 1
      %p407 = por %p405, %p406
      %p408 = scmp.ne.s32.totalorder %s399, %s400
      %p409 = scmp.eq.s32.totalorder %s112, 0
      %p410 = por %p408, %p409
      %p411 = scmp.ne.s32.totalorder %s399, %s400
      %p412 = scmp.eq.s32.totalorder %s113, 1
      %p413 = por %p411, %p412
      %p415 = scmp.ne.s32.totalorder %s400, %s414
      %p416 = scmp.eq.s32.totalorder %s113, 0
      %p417 = por %p415, %p416
      %s419 = sadd.s32 %s418, 1
      %p422 = scmp.eq.s32.totalorder %s107, 1
      %p423 = scmp.ne.s32.totalorder %s418, %s420
      %p424 = scmp.eq.s32.totalorder %s107, 0
      %p425 = por %p423, %p424
      %p426 = scmp.ne.s32.totalorder %s418, %s420
      %p427 = scmp.eq.s32.totalorder %s112, 1
      %p428 = por %p426, %p427
      %p429 = scmp.ne.s32.totalorder %s420, %s421
      %p430 = scmp.eq.s32.totalorder %s112, 0
      %p431 = por %p429, %p430
      %p432 = scmp.ne.s32.totalorder %s420, %s421
      %p433 = scmp.eq.s32.totalorder %s113, 1
      %p434 = por %p432, %p433
      %p436 = scmp.ne.s32.totalorder %s421, %s435
      %p437 = scmp.eq.s32.totalorder %s113, 0
      %p438 = por %p436, %p437
      %s440 = sadd.s32 %s439, 1
      %p443 = scmp.eq.s32.totalorder %s107, 1
      %p444 = scmp.ne.s32.totalorder %s439, %s441
      %p445 = scmp.eq.s32.totalorder %s107, 0
      %p446 = por %p444, %p445
      %p447 = scmp.ne.s32.totalorder %s439, %s441
      %p448 = scmp.eq.s32.totalorder %s112, 1
      %p449 = por %p447, %p448
      %p450 = scmp.ne.s32.totalorder %s441, %s442
      %p451 = scmp.eq.s32.totalorder %s112, 0
      %p452 = por %p450, %p451
      %p453 = scmp.ne.s32.totalorder %s441, %s442
      %p454 = scmp.eq.s32.totalorder %s113, 1
      %p455 = por %p453, %p454
      %p457 = scmp.ne.s32.totalorder %s442, %s456
      %p458 = scmp.eq.s32.totalorder %s113, 0
      %p459 = por %p457, %p458
      %s461 = sadd.s32 %s460, 1
      %p464 = scmp.eq.s32.totalorder %s107, 1
      %p465 = scmp.ne.s32.totalorder %s460, %s462
      %p466 = scmp.eq.s32.totalorder %s107, 0
      %p467 = por %p465, %p466
      %p468 = scmp.ne.s32.totalorder %s460, %s462
      %p469 = scmp.eq.s32.totalorder %s112, 1
      %p470 = por %p468, %p469
      %p471 = scmp.ne.s32.totalorder %s462, %s463
      %p472 = scmp.eq.s32.totalorder %s112, 0
      %p473 = por %p471, %p472
      %p474 = scmp.ne.s32.totalorder %s462, %s463
      %p475 = scmp.eq.s32.totalorder %s113, 1
      %p476 = por %p474, %p475
      %p478 = scmp.ne.s32.totalorder %s463, %s477
      %p479 = scmp.eq.s32.totalorder %s113, 0
      %p480 = por %p478, %p479
      %s482 = sadd.s32 %s481, 1
      %p485 = scmp.eq.s32.totalorder %s107, 1
      %p486 = scmp.ne.s32.totalorder %s481, %s483
      %p487 = scmp.eq.s32.totalorder %s107, 0
      %p488 = por %p486, %p487
      %p489 = scmp.ne.s32.totalorder %s481, %s483
      %p490 = scmp.eq.s32.totalorder %s112, 1
      %p491 = por %p489, %p490
      %p492 = scmp.ne.s32.totalorder %s483, %s484
      %p493 = scmp.eq.s32.totalorder %s112, 0
      %p494 = por %p492, %p493
      %p495 = scmp.ne.s32.totalorder %s483, %s484
      %p496 = scmp.eq.s32.totalorder %s113, 1
      %p497 = por %p495, %p496
      %p499 = scmp.ne.s32.totalorder %s484, %s498
      %p500 = scmp.eq.s32.totalorder %s113, 0
      %p501 = por %p499, %p500
      %s503 = sadd.s32 %s502, 1
      %p506 = scmp.eq.s32.totalorder %s107, 1
      %p507 = scmp.ne.s32.totalorder %s502, %s504
      %p508 = scmp.eq.s32.totalorder %s107, 0
      %p509 = por %p507, %p508
      %p510 = scmp.ne.s32.totalorder %s502, %s504
      %p511 = scmp.eq.s32.totalorder %s112, 1
      %p512 = por %p510, %p511
      %p513 = scmp.ne.s32.totalorder %s504, %s505
      %p514 = scmp.eq.s32.totalorder %s112, 0
      %p515 = por %p513, %p514
      %p516 = scmp.ne.s32.totalorder %s504, %s505
      %p517 = scmp.eq.s32.totalorder %s113, 1
      %p518 = por %p516, %p517
      %p520 = scmp.ne.s32.totalorder %s505, %s519
      %p521 = scmp.eq.s32.totalorder %s113, 0
      %p522 = por %p520, %p521
      %s524 = sadd.s32 %s523, 1
      %p527 = scmp.eq.s32.totalorder %s107, 1
      %p528 = scmp.ne.s32.totalorder %s523, %s525
      %p529 = scmp.eq.s32.totalorder %s107, 0
      %p530 = por %p528, %p529
      %p531 = scmp.ne.s32.totalorder %s523, %s525
      %p532 = scmp.eq.s32.totalorder %s112, 1
      %p533 = por %p531, %p532
      %p534 = scmp.ne.s32.totalorder %s525, %s526
      %p535 = scmp.eq.s32.totalorder %s112, 0
      %p536 = por %p534, %p535
      %p537 = scmp.ne.s32.totalorder %s525, %s526
      %p538 = scmp.eq.s32.totalorder %s113, 1
      %p539 = por %p537, %p538
      %p541 = scmp.ne.s32.totalorder %s526, %s540
      %p542 = scmp.eq.s32.totalorder %s113, 0
      %p543 = por %p541, %p542
      %s545 = sadd.s32 %s544, 1
      %p548 = scmp.eq.s32.totalorder %s107, 1
      %p549 = scmp.ne.s32.totalorder %s544, %s546
      %p550 = scmp.eq.s32.totalorder %s107, 0
      %p551 = por %p549, %p550
      %p552 = scmp.ne.s32.totalorder %s544, %s546
      %p553 = scmp.eq.s32.totalorder %s112, 1
      %p554 = por %p552, %p553
      %p555 = scmp.ne.s32.totalorder %s546, %s547
      %p556 = scmp.eq.s32.totalorder %s112, 0
      %p557 = por %p555, %p556
      %p558 = scmp.ne.s32.totalorder %s546, %s547
      %p559 = scmp.eq.s32.totalorder %s113, 1
      %p560 = por %p558, %p559
      %p562 = scmp.ne.s32.totalorder %s547, %s561
      %p563 = scmp.eq.s32.totalorder %s113, 0
      %p564 = por %p562, %p563
      %s566 = sadd.s32 %s565, 1
      %p569 = scmp.eq.s32.totalorder %s107, 1
      %p570 = scmp.ne.s32.totalorder %s565, %s567
      %p571 = scmp.eq.s32.totalorder %s107, 0
      %p572 = por %p570, %p571
      %p573 = scmp.ne.s32.totalorder %s565, %s567
      %p574 = scmp.eq.s32.totalorder %s112, 1
      %p575 = por %p573, %p574
      %p576 = scmp.ne.s32.totalorder %s567, %s568
      %p577 = scmp.eq.s32.totalorder %s112, 0
      %p578 = por %p576, %p577
      %p579 = scmp.ne.s32.totalorder %s567, %s568
      %p580 = scmp.eq.s32.totalorder %s113, 1
      %p581 = por %p579, %p580
      %p583 = scmp.ne.s32.totalorder %s568, %s582
      %p584 = scmp.eq.s32.totalorder %s113, 0
      %p585 = por %p583, %p584
      %s587 = sadd.s32 %s586, 1
      %p590 = scmp.eq.s32.totalorder %s107, 1
      %p591 = scmp.ne.s32.totalorder %s586, %s588
      %p592 = scmp.eq.s32.totalorder %s107, 0
      %p593 = por %p591, %p592
      %p594 = scmp.ne.s32.totalorder %s586, %s588
      %p595 = scmp.eq.s32.totalorder %s112, 1
      %p596 = por %p594, %p595
      %p597 = scmp.ne.s32.totalorder %s588, %s589
      %p598 = scmp.eq.s32.totalorder %s112, 0
      %p599 = por %p597, %p598
      %p600 = scmp.ne.s32.totalorder %s588, %s589
      %p601 = scmp.eq.s32.totalorder %s113, 1
      %p602 = por %p600, %p601
      %p604 = scmp.ne.s32.totalorder %s589, %s603
      %p605 = scmp.eq.s32.totalorder %s113, 0
      %p606 = por %p604, %p605
      %s608 = sadd.s32 %s607, 1
      %p611 = scmp.eq.s32.totalorder %s107, 1
      %p612 = scmp.ne.s32.totalorder %s607, %s609
      %p613 = scmp.eq.s32.totalorder %s107, 0
      %p614 = por %p612, %p613
      %p615 = scmp.ne.s32.totalorder %s607, %s609
      %p616 = scmp.eq.s32.totalorder %s112, 1
      %p617 = por %p615, %p616
      %p618 = scmp.ne.s32.totalorder %s609, %s610
      %p619 = scmp.eq.s32.totalorder %s112, 0
      %p620 = por %p618, %p619
      %p621 = scmp.ne.s32.totalorder %s609, %s610
      %p622 = scmp.eq.s32.totalorder %s113, 1
      %p623 = por %p621, %p622
      %p625 = scmp.ne.s32.totalorder %s610, %s624
      %p626 = scmp.eq.s32.totalorder %s113, 0
      %p627 = por %p625, %p626
      %s629 = sadd.s32 %s628, 1
      %p632 = scmp.eq.s32.totalorder %s107, 1
      %p633 = scmp.ne.s32.totalorder %s628, %s630
      %p634 = scmp.eq.s32.totalorder %s107, 0
      %p635 = por %p633, %p634
      %p636 = scmp.ne.s32.totalorder %s628, %s630
      %p637 = scmp.eq.s32.totalorder %s112, 1
      %p638 = por %p636, %p637
      %p639 = scmp.ne.s32.totalorder %s630, %s631
      %p640 = scmp.eq.s32.totalorder %s112, 0
      %p641 = por %p639, %p640
      %p642 = scmp.ne.s32.totalorder %s630, %s631
      %p643 = scmp.eq.s32.totalorder %s113, 1
      %p644 = por %p642, %p643
      %p646 = scmp.ne.s32.totalorder %s631, %s645
      %p647 = scmp.eq.s32.totalorder %s113, 0
      %p648 = por %p646, %p647
      %s650 = sadd.s32 %s649, 1
      %p653 = scmp.eq.s32.totalorder %s107, 1
      %p654 = scmp.ne.s32.totalorder %s649, %s651
      %p655 = scmp.eq.s32.totalorder %s107, 0
      %p656 = por %p654, %p655
      %p657 = scmp.ne.s32.totalorder %s649, %s651
      %p658 = scmp.eq.s32.totalorder %s112, 1
      %p659 = por %p657, %p658
      %p660 = scmp.ne.s32.totalorder %s651, %s652
      %p661 = scmp.eq.s32.totalorder %s112, 0
      %p662 = por %p660, %p661
      %p663 = scmp.ne.s32.totalorder %s651, %s652
      %p664 = scmp.eq.s32.totalorder %s113, 1
      %p665 = por %p663, %p664
      %p667 = scmp.ne.s32.totalorder %s652, %s666
      %p668 = scmp.eq.s32.totalorder %s113, 0
      %p669 = por %p667, %p668
      %s671 = sadd.s32 %s670, 1
      %p674 = scmp.eq.s32.totalorder %s107, 1
      %p675 = scmp.ne.s32.totalorder %s670, %s672
      %p676 = scmp.eq.s32.totalorder %s107, 0
      %p677 = por %p675, %p676
      %p678 = scmp.ne.s32.totalorder %s670, %s672
      %p679 = scmp.eq.s32.totalorder %s112, 1
      %p680 = por %p678, %p679
      %p681 = scmp.ne.s32.totalorder %s672, %s673
      %p682 = scmp.eq.s32.totalorder %s112, 0
      %p683 = por %p681, %p682
      %p684 = scmp.ne.s32.totalorder %s672, %s673
      %p685 = scmp.eq.s32.totalorder %s113, 1
      %p686 = por %p684, %p685
      %p688 = scmp.ne.s32.totalorder %s673, %s687
      %p689 = scmp.eq.s32.totalorder %s113, 0
      %p690 = por %p688, %p689
      %s692 = sadd.s32 %s691, 1
      %p695 = scmp.eq.s32.totalorder %s107, 1
      %p696 = scmp.ne.s32.totalorder %s691, %s693
      %p697 = scmp.eq.s32.totalorder %s107, 0
      %p698 = por %p696, %p697
      %p699 = scmp.ne.s32.totalorder %s691, %s693
      %p700 = scmp.eq.s32.totalorder %s112, 1
      %p701 = por %p699, %p700
      %p702 = scmp.ne.s32.totalorder %s693, %s694
      %p703 = scmp.eq.s32.totalorder %s112, 0
      %p704 = por %p702, %p703
      %p705 = scmp.ne.s32.totalorder %s693, %s694
      %p706 = scmp.eq.s32.totalorder %s113, 1
      %p707 = por %p705, %p706
      %p709 = scmp.ne.s32.totalorder %s694, %s708
      %p710 = scmp.eq.s32.totalorder %s113, 0
      %p711 = por %p709, %p710
      %s713 = sadd.s32 %s712, 1
      %p716 = scmp.eq.s32.totalorder %s107, 1
      %p717 = scmp.ne.s32.totalorder %s712, %s714
      %p718 = scmp.eq.s32.totalorder %s107, 0
      %p719 = por %p717, %p718
      %p720 = scmp.ne.s32.totalorder %s712, %s714
      %p721 = scmp.eq.s32.totalorder %s112, 1
      %p722 = por %p720, %p721
      %p723 = scmp.ne.s32.totalorder %s714, %s715
      %p724 = scmp.eq.s32.totalorder %s112, 0
      %p725 = por %p723, %p724
      %p726 = scmp.ne.s32.totalorder %s714, %s715
      %p727 = scmp.eq.s32.totalorder %s113, 1
      %p728 = por %p726, %p727
      %p730 = scmp.ne.s32.totalorder %s715, %s729
      %p731 = scmp.eq.s32.totalorder %s113, 0
      %p732 = por %p730, %p731
      %s734 = sadd.s32 %s733, 1
      %p737 = scmp.eq.s32.totalorder %s107, 1
      %p738 = scmp.ne.s32.totalorder %s733, %s735
      %p739 = scmp.eq.s32.totalorder %s107, 0
      %p740 = por %p738, %p739
      %p741 = scmp.ne.s32.totalorder %s733, %s735
      %p742 = scmp.eq.s32.totalorder %s112, 1
      %p743 = por %p741, %p742
      %p744 = scmp.ne.s32.totalorder %s735, %s736
      %p745 = scmp.eq.s32.totalorder %s112, 0
      %p746 = por %p744, %p745
      %p747 = scmp.ne.s32.totalorder %s735, %s736
      %p748 = scmp.eq.s32.totalorder %s113, 1
      %p749 = por %p747, %p748
      %p751 = scmp.ne.s32.totalorder %s736, %s750
      %p752 = scmp.eq.s32.totalorder %s113, 0
      %p753 = por %p751, %p752
      %s755 = sadd.s32 %s754, 1
      %p758 = scmp.eq.s32.totalorder %s107, 1
      %p759 = scmp.ne.s32.totalorder %s754, %s756
      %p760 = scmp.eq.s32.totalorder %s107, 0
      %p761 = por %p759, %p760
      %p762 = scmp.ne.s32.totalorder %s754, %s756
      %p763 = scmp.eq.s32.totalorder %s112, 1
      %p764 = por %p762, %p763
      %p765 = scmp.ne.s32.totalorder %s756, %s757
      %p766 = scmp.eq.s32.totalorder %s112, 0
      %p767 = por %p765, %p766
      %p768 = scmp.ne.s32.totalorder %s756, %s757
      %p769 = scmp.eq.s32.totalorder %s113, 1
      %p770 = por %p768, %p769
      %p772 = scmp.ne.s32.totalorder %s757, %s771
      %p773 = scmp.eq.s32.totalorder %s113, 0
      %p774 = por %p772, %p773
      %s776 = sadd.s32 %s775, 1
      %p779 = scmp.eq.s32.totalorder %s107, 1
      %p780 = scmp.ne.s32.totalorder %s775, %s777
      %p781 = scmp.eq.s32.totalorder %s107, 0
      %p782 = por %p780, %p781
      %p783 = scmp.ne.s32.totalorder %s775, %s777
      %p784 = scmp.eq.s32.totalorder %s112, 1
      %p785 = por %p783, %p784
      %p786 = scmp.ne.s32.totalorder %s777, %s778
      %p787 = scmp.eq.s32.totalorder %s112, 0
      %p788 = por %p786, %p787
      %p789 = scmp.ne.s32.totalorder %s777, %s778
      %p790 = scmp.eq.s32.totalorder %s113, 1
      %p791 = por %p789, %p790
      %p793 = scmp.ne.s32.totalorder %s778, %s792
      %p794 = scmp.eq.s32.totalorder %s113, 0
      %p795 = por %p793, %p794
      %s797 = sadd.s32 %s796, 1
      %p800 = scmp.eq.s32.totalorder %s107, 1
      %p801 = scmp.ne.s32.totalorder %s796, %s798
      %p802 = scmp.eq.s32.totalorder %s107, 0
      %p803 = por %p801, %p802
      %p804 = scmp.ne.s32.totalorder %s796, %s798
      %p805 = scmp.eq.s32.totalorder %s112, 1
      %p806 = por %p804, %p805
      %p807 = scmp.ne.s32.totalorder %s798, %s799
      %p808 = scmp.eq.s32.totalorder %s112, 0
      %p809 = por %p807, %p808
      %p810 = scmp.ne.s32.totalorder %s798, %s799
      %p811 = scmp.eq.s32.totalorder %s113, 1
      %p812 = por %p810, %p811
      %p814 = scmp.ne.s32.totalorder %s799, %s813
      %p815 = scmp.eq.s32.totalorder %s113, 0
      %p816 = por %p814, %p815
      %s818 = sadd.s32 %s817, 1
      %p821 = scmp.eq.s32.totalorder %s107, 1
      %p822 = scmp.ne.s32.totalorder %s817, %s819
      %p823 = scmp.eq.s32.totalorder %s107, 0
      %p824 = por %p822, %p823
      %p825 = scmp.ne.s32.totalorder %s817, %s819
      %p826 = scmp.eq.s32.totalorder %s112, 1
      %p827 = por %p825, %p826
      %p828 = scmp.ne.s32.totalorder %s819, %s820
      %p829 = scmp.eq.s32.totalorder %s112, 0
      %p830 = por %p828, %p829
      %p831 = scmp.ne.s32.totalorder %s819, %s820
      %p832 = scmp.eq.s32.totalorder %s113, 1
      %p833 = por %p831, %p832
      %p835 = scmp.ne.s32.totalorder %s820, %s834
      %p836 = scmp.eq.s32.totalorder %s113, 0
      %p837 = por %p835, %p836
      %s839 = sadd.s32 %s838, 1
      %p842 = scmp.eq.s32.totalorder %s107, 1
      %p843 = scmp.ne.s32.totalorder %s838, %s840
      %p844 = scmp.eq.s32.totalorder %s107, 0
      %p845 = por %p843, %p844
      %p846 = scmp.ne.s32.totalorder %s838, %s840
      %p847 = scmp.eq.s32.totalorder %s112, 1
      %p848 = por %p846, %p847
      %p849 = scmp.ne.s32.totalorder %s840, %s841
      %p850 = scmp.eq.s32.totalorder %s112, 0
      %p851 = por %p849, %p850
      %p852 = scmp.ne.s32.totalorder %s840, %s841
      %p853 = scmp.eq.s32.totalorder %s113, 1
      %p854 = por %p852, %p853
      %p856 = scmp.ne.s32.totalorder %s841, %s855
      %p857 = scmp.eq.s32.totalorder %s113, 0
      %p858 = por %p856, %p857
      %s860 = sadd.s32 %s859, 1
      %p863 = scmp.eq.s32.totalorder %s107, 1
      %p864 = scmp.ne.s32.totalorder %s859, %s861
      %p865 = scmp.eq.s32.totalorder %s107, 0
      %p866 = por %p864, %p865
      %p867 = scmp.ne.s32.totalorder %s859, %s861
      %p868 = scmp.eq.s32.totalorder %s112, 1
      %p869 = por %p867, %p868
      %p870 = scmp.ne.s32.totalorder %s861, %s862
      %p871 = scmp.eq.s32.totalorder %s112, 0
      %p872 = por %p870, %p871
      %p873 = scmp.ne.s32.totalorder %s861, %s862
      %p874 = scmp.eq.s32.totalorder %s113, 1
      %p875 = por %p873, %p874
      %p877 = scmp.ne.s32.totalorder %s862, %s876
      %p878 = scmp.eq.s32.totalorder %s113, 0
      %p879 = por %p877, %p878
      %s881 = sadd.s32 %s880, 1
      %p884 = scmp.eq.s32.totalorder %s107, 1
      %p885 = scmp.ne.s32.totalorder %s880, %s882
      %p886 = scmp.eq.s32.totalorder %s107, 0
      %p887 = por %p885, %p886
      %p888 = scmp.ne.s32.totalorder %s880, %s882
      %p889 = scmp.eq.s32.totalorder %s112, 1
      %p890 = por %p888, %p889
      %p891 = scmp.ne.s32.totalorder %s882, %s883
      %p892 = scmp.eq.s32.totalorder %s112, 0
      %p893 = por %p891, %p892
      %p894 = scmp.ne.s32.totalorder %s882, %s883
      %p895 = scmp.eq.s32.totalorder %s113, 1
      %p896 = por %p894, %p895
      %p898 = scmp.ne.s32.totalorder %s883, %s897
      %p899 = scmp.eq.s32.totalorder %s113, 0
      %p900 = por %p898, %p899
      %s902 = sadd.s32 %s901, 1
      %p905 = scmp.eq.s32.totalorder %s107, 1
      %p906 = scmp.ne.s32.totalorder %s901, %s903
      %p907 = scmp.eq.s32.totalorder %s107, 0
      %p908 = por %p906, %p907
      %p909 = scmp.ne.s32.totalorder %s901, %s903
      %p910 = scmp.eq.s32.totalorder %s112, 1
      %p911 = por %p909, %p910
      %p912 = scmp.ne.s32.totalorder %s903, %s904
      %p913 = scmp.eq.s32.totalorder %s112, 0
      %p914 = por %p912, %p913
      %p915 = scmp.ne.s32.totalorder %s903, %s904
      %p916 = scmp.eq.s32.totalorder %s113, 1
      %p917 = por %p915, %p916
      %p919 = scmp.ne.s32.totalorder %s904, %s918
      %p920 = scmp.eq.s32.totalorder %s113, 0
      %p921 = por %p919, %p920
      %s923 = sadd.s32 %s922, 1
      %p926 = scmp.eq.s32.totalorder %s107, 1
      %p927 = scmp.ne.s32.totalorder %s922, %s924
      %p928 = scmp.eq.s32.totalorder %s107, 0
      %p929 = por %p927, %p928
      %p930 = scmp.ne.s32.totalorder %s922, %s924
      %p931 = scmp.eq.s32.totalorder %s112, 1
      %p932 = por %p930, %p931
      %p933 = scmp.ne.s32.totalorder %s924, %s925
      %p934 = scmp.eq.s32.totalorder %s112, 0
      %p935 = por %p933, %p934
      %p936 = scmp.ne.s32.totalorder %s924, %s925
      %p937 = scmp.eq.s32.totalorder %s113, 1
      %p938 = por %p936, %p937
      %p940 = scmp.ne.s32.totalorder %s925, %s939
      %p941 = scmp.eq.s32.totalorder %s113, 0
      %p942 = por %p940, %p941
      %s944 = sadd.s32 %s943, 1
      %p947 = scmp.eq.s32.totalorder %s107, 1
      %p948 = scmp.ne.s32.totalorder %s943, %s945
      %p949 = scmp.eq.s32.totalorder %s107, 0
      %p950 = por %p948, %p949
      %p951 = scmp.ne.s32.totalorder %s943, %s945
      %p952 = scmp.eq.s32.totalorder %s112, 1
      %p953 = por %p951, %p952
      %p954 = scmp.ne.s32.totalorder %s945, %s946
      %p955 = scmp.eq.s32.totalorder %s112, 0
      %p956 = por %p954, %p955
      %p957 = scmp.ne.s32.totalorder %s945, %s946
      %p958 = scmp.eq.s32.totalorder %s113, 1
      %p959 = por %p957, %p958
      %p961 = scmp.ne.s32.totalorder %s946, %s960
      %p962 = scmp.eq.s32.totalorder %s113, 0
      %p963 = por %p961, %p962
      %s965 = sadd.s32 %s964, 1
      %p968 = scmp.eq.s32.totalorder %s107, 1
      %p969 = scmp.ne.s32.totalorder %s964, %s966
      %p970 = scmp.eq.s32.totalorder %s107, 0
      %p971 = por %p969, %p970
      %p972 = scmp.ne.s32.totalorder %s964, %s966
      %p973 = scmp.eq.s32.totalorder %s112, 1
      %p974 = por %p972, %p973
      %p975 = scmp.ne.s32.totalorder %s966, %s967
      %p976 = scmp.eq.s32.totalorder %s112, 0
      %p977 = por %p975, %p976
      %p978 = scmp.ne.s32.totalorder %s966, %s967
      %p979 = scmp.eq.s32.totalorder %s113, 1
      %p980 = por %p978, %p979
      %p982 = scmp.ne.s32.totalorder %s967, %s981
      %p983 = scmp.eq.s32.totalorder %s113, 0
      %p984 = por %p982, %p983
      %s986 = sadd.s32 %s985, 1
      %p989 = scmp.eq.s32.totalorder %s107, 1
      %p990 = scmp.ne.s32.totalorder %s985, %s987
      %p991 = scmp.eq.s32.totalorder %s107, 0
      %p992 = por %p990, %p991
      %p993 = scmp.ne.s32.totalorder %s985, %s987
      %p994 = scmp.eq.s32.totalorder %s112, 1
      %p995 = por %p993, %p994
      %p996 = scmp.ne.s32.totalorder %s987, %s988
      %p997 = scmp.eq.s32.totalorder %s112, 0
      %p998 = por %p996, %p997
      %p999 = scmp.ne.s32.totalorder %s987, %s988
      %p1000 = scmp.eq.s32.totalorder %s113, 1
      %p1001 = por %p999, %p1000
      %p1003 = scmp.ne.s32.totalorder %s988, %s1002
      %p1004 = scmp.eq.s32.totalorder %s113, 0
      %p1005 = por %p1003, %p1004
      %s1007 = sadd.s32 %s1006, 1
      %p1010 = scmp.eq.s32.totalorder %s107, 1
      %p1011 = scmp.ne.s32.totalorder %s1006, %s1008
      %p1012 = scmp.eq.s32.totalorder %s107, 0
      %p1013 = por %p1011, %p1012
      %p1014 = scmp.ne.s32.totalorder %s1006, %s1008
      %p1015 = scmp.eq.s32.totalorder %s112, 1
      %p1016 = por %p1014, %p1015
      %p1017 = scmp.ne.s32.totalorder %s1008, %s1009
      %p1018 = scmp.eq.s32.totalorder %s112, 0
      %p1019 = por %p1017, %p1018
      %p1020 = scmp.ne.s32.totalorder %s1008, %s1009
      %p1021 = scmp.eq.s32.totalorder %s113, 1
      %p1022 = por %p1020, %p1021
      %p1024 = scmp.ne.s32.totalorder %s1009, %s1023
      %p1025 = scmp.eq.s32.totalorder %s113, 0
      %p1026 = por %p1024, %p1025
      %s1027 = ssub.s32 %s107, %s114
      %p1028 = scmp.eq.s32.totalorder %s1027, 0
      %s1030 = sadd.s32 %s1029, 1
      %s1031 = scalar_select %p1028, %s1029, %s1030
      %p1034 = pneg %p1028
      %p1035 = scmp.eq.s32.totalorder %s107, 1
      %p1036 = por %p1034, %p1035
      %p1037 = scmp.ne.s32.totalorder %s1029, %s1032
      %p1038 = scmp.eq.s32.totalorder %s107, 0
      %p1039 = por %p1037, %p1038
      %p1040 = scmp.ne.s32.totalorder %s1029, %s1032
      %p1041 = scmp.eq.s32.totalorder %s112, 1
      %p1042 = por %p1040, %p1041
      %p1043 = scmp.ne.s32.totalorder %s1032, %s1033
      %p1044 = scmp.eq.s32.totalorder %s112, 0
      %p1045 = por %p1043, %p1044
      %p1046 = scmp.ne.s32.totalorder %s1032, %s1033
      %p1047 = scmp.eq.s32.totalorder %s113, 1
      %p1048 = por %p1046, %p1047
      %p1050 = scmp.ne.s32.totalorder %s1033, %s1049
      %p1051 = scmp.eq.s32.totalorder %s113, 0
      %p1052 = por %p1050, %p1051
      %s1053 = ssub.s32 %s107, %s114
      %p1054 = scmp.eq.s32.totalorder %s1053, 0
      %s1056 = sadd.s32 %s1055, 1
      %s1057 = scalar_select %p1054, %s1055, %s1056
      %p1060 = pneg %p1054
      %p1061 = scmp.eq.s32.totalorder %s107, 1
      %p1062 = por %p1060, %p1061
      %p1063 = scmp.ne.s32.totalorder %s1055, %s1058
      %p1064 = scmp.eq.s32.totalorder %s107, 0
      %p1065 = por %p1063, %p1064
      %p1066 = scmp.ne.s32.totalorder %s1055, %s1058
      %p1067 = scmp.eq.s32.totalorder %s112, 1
      %p1068 = por %p1066, %p1067
      %p1069 = scmp.ne.s32.totalorder %s1058, %s1059
      %p1070 = scmp.eq.s32.totalorder %s112, 0
      %p1071 = por %p1069, %p1070
      %p1072 = scmp.ne.s32.totalorder %s1058, %s1059
      %p1073 = scmp.eq.s32.totalorder %s113, 1
      %p1074 = por %p1072, %p1073
      %p1076 = scmp.ne.s32.totalorder %s1059, %s1075
      %p1077 = scmp.eq.s32.totalorder %s113, 0
      %p1078 = por %p1076, %p1077
      %p1079 = scmp.le.s32.totalorder 1, %s107
      %p1080 = scmp.lt.s32.totalorder %s107, 3
      %p1081 = pnand %p1079, %p1080
      %p1082 = pneg %p1081
      // Predicated region
      $region9: #{run.1} parent=5 // pred_check
        _
      $region10: #{run.1} parent=5 // pred_check_branch
        %1084 = sbr.rel (%p1081) target = $region12
      $region11: #{run.1} parent=5 // pred_region
        %s1085 = ssub.s32 %s107, 1
        // Predicated region
        $region13: #{run.1} parent=11 // pred_check
          %p1086 = pneg %p284
        $region14: #{run.1} parent=11 // pred_check_branch
          %1088 = sbr.rel (%p1086) target = $region16
        $region15: #{run.1} parent=11 // pred_region
          _
        $region16: #{run.1} parent=11 // pred_fallthru
          _
        // Predicated region
        $region17: #{run.1} parent=11 // pred_check
          %p1089 = pneg %p305
        $region18: #{run.1} parent=11 // pred_check_branch
          %1091 = sbr.rel (%p1089) target = $region20
        $region19: #{run.1} parent=11 // pred_region
          _
        $region20: #{run.1} parent=11 // pred_fallthru
          _
        // Predicated region
        $region21: #{run.1} parent=11 // pred_check
          %p1092 = pneg %p326
        $region22: #{run.1} parent=11 // pred_check_branch
          %1094 = sbr.rel (%p1092) target = $region24
        $region23: #{run.1} parent=11 // pred_region
          _
        $region24: #{run.1} parent=11 // pred_fallthru
          _
        // Predicated region
        $region25: #{run.1} parent=11 // pred_check
          %p1095 = pneg %p347
        $region26: #{run.1} parent=11 // pred_check_branch
          %1097 = sbr.rel (%p1095) target = $region28
        $region27: #{run.1} parent=11 // pred_region
          _
        $region28: #{run.1} parent=11 // pred_fallthru
          _
        // Predicated region
        $region29: #{run.1} parent=11 // pred_check
          %p1098 = pneg %p368
        $region30: #{run.1} parent=11 // pred_check_branch
          %1100 = sbr.rel (%p1098) target = $region32
        $region31: #{run.1} parent=11 // pred_region
          _
        $region32: #{run.1} parent=11 // pred_fallthru
          _
        // Predicated region
        $region33: #{run.1} parent=11 // pred_check
          %p1101 = pneg %p389
        $region34: #{run.1} parent=11 // pred_check_branch
          %1103 = sbr.rel (%p1101) target = $region36
        $region35: #{run.1} parent=11 // pred_region
          _
        $region36: #{run.1} parent=11 // pred_fallthru
          _
        // Predicated region
        $region37: #{run.1} parent=11 // pred_check
          %p1104 = pneg %p410
        $region38: #{run.1} parent=11 // pred_check_branch
          %1106 = sbr.rel (%p1104) target = $region40
        $region39: #{run.1} parent=11 // pred_region
          _
        $region40: #{run.1} parent=11 // pred_fallthru
          _
        // Predicated region
        $region41: #{run.1} parent=11 // pred_check
          %p1107 = pneg %p431
        $region42: #{run.1} parent=11 // pred_check_branch
          %1109 = sbr.rel (%p1107) target = $region44
        $region43: #{run.1} parent=11 // pred_region
          _
        $region44: #{run.1} parent=11 // pred_fallthru
          _
        // Predicated region
        $region45: #{run.1} parent=11 // pred_check
          %p1110 = pneg %p452
        $region46: #{run.1} parent=11 // pred_check_branch
          %1112 = sbr.rel (%p1110) target = $region48
        $region47: #{run.1} parent=11 // pred_region
          _
        $region48: #{run.1} parent=11 // pred_fallthru
          _
        // Predicated region
        $region49: #{run.1} parent=11 // pred_check
          %p1113 = pneg %p473
        $region50: #{run.1} parent=11 // pred_check_branch
          %1115 = sbr.rel (%p1113) target = $region52
        $region51: #{run.1} parent=11 // pred_region
          _
        $region52: #{run.1} parent=11 // pred_fallthru
          _
        // Predicated region
        $region53: #{run.1} parent=11 // pred_check
          %p1116 = pneg %p494
        $region54: #{run.1} parent=11 // pred_check_branch
          %1118 = sbr.rel (%p1116) target = $region56
        $region55: #{run.1} parent=11 // pred_region
          _
        $region56: #{run.1} parent=11 // pred_fallthru
          _
        // Predicated region
        $region57: #{run.1} parent=11 // pred_check
          %p1119 = pneg %p515
        $region58: #{run.1} parent=11 // pred_check_branch
          %1121 = sbr.rel (%p1119) target = $region60
        $region59: #{run.1} parent=11 // pred_region
          _
        $region60: #{run.1} parent=11 // pred_fallthru
          _
        // Predicated region
        $region61: #{run.1} parent=11 // pred_check
          %p1122 = pneg %p536
        $region62: #{run.1} parent=11 // pred_check_branch
          %1124 = sbr.rel (%p1122) target = $region64
        $region63: #{run.1} parent=11 // pred_region
          _
        $region64: #{run.1} parent=11 // pred_fallthru
          _
        // Predicated region
        $region65: #{run.1} parent=11 // pred_check
          %p1125 = pneg %p557
        $region66: #{run.1} parent=11 // pred_check_branch
          %1127 = sbr.rel (%p1125) target = $region68
        $region67: #{run.1} parent=11 // pred_region
          _
        $region68: #{run.1} parent=11 // pred_fallthru
          _
        // Predicated region
        $region69: #{run.1} parent=11 // pred_check
          %p1128 = pneg %p578
        $region70: #{run.1} parent=11 // pred_check_branch
          %1130 = sbr.rel (%p1128) target = $region72
        $region71: #{run.1} parent=11 // pred_region
          _
        $region72: #{run.1} parent=11 // pred_fallthru
          _
        // Predicated region
        $region73: #{run.1} parent=11 // pred_check
          %p1131 = pneg %p599
        $region74: #{run.1} parent=11 // pred_check_branch
          %1133 = sbr.rel (%p1131) target = $region76
        $region75: #{run.1} parent=11 // pred_region
          _
        $region76: #{run.1} parent=11 // pred_fallthru
          _
        // Predicated region
        $region77: #{run.1} parent=11 // pred_check
          %p1134 = pneg %p620
        $region78: #{run.1} parent=11 // pred_check_branch
          %1136 = sbr.rel (%p1134) target = $region80
        $region79: #{run.1} parent=11 // pred_region
          _
        $region80: #{run.1} parent=11 // pred_fallthru
          _
        // Predicated region
        $region81: #{run.1} parent=11 // pred_check
          %p1137 = pneg %p641
        $region82: #{run.1} parent=11 // pred_check_branch
          %1139 = sbr.rel (%p1137) target = $region84
        $region83: #{run.1} parent=11 // pred_region
          _
        $region84: #{run.1} parent=11 // pred_fallthru
          _
        // Predicated region
        $region85: #{run.1} parent=11 // pred_check
          %p1140 = pneg %p662
        $region86: #{run.1} parent=11 // pred_check_branch
          %1142 = sbr.rel (%p1140) target = $region88
        $region87: #{run.1} parent=11 // pred_region
          _
        $region88: #{run.1} parent=11 // pred_fallthru
          _
        // Predicated region
        $region89: #{run.1} parent=11 // pred_check
          %p1143 = pneg %p683
        $region90: #{run.1} parent=11 // pred_check_branch
          %1145 = sbr.rel (%p1143) target = $region92
        $region91: #{run.1} parent=11 // pred_region
          _
        $region92: #{run.1} parent=11 // pred_fallthru
          _
        // Predicated region
        $region93: #{run.1} parent=11 // pred_check
          %p1146 = pneg %p704
        $region94: #{run.1} parent=11 // pred_check_branch
          %1148 = sbr.rel (%p1146) target = $region96
        $region95: #{run.1} parent=11 // pred_region
          _
        $region96: #{run.1} parent=11 // pred_fallthru
          _
        // Predicated region
        $region97: #{run.1} parent=11 // pred_check
          %p1149 = pneg %p725
        $region98: #{run.1} parent=11 // pred_check_branch
          %1151 = sbr.rel (%p1149) target = $region100
        $region99: #{run.1} parent=11 // pred_region
          _
        $region100: #{run.1} parent=11 // pred_fallthru
          _
        // Predicated region
        $region101: #{run.1} parent=11 // pred_check
          %p1152 = pneg %p746
        $region102: #{run.1} parent=11 // pred_check_branch
          %1154 = sbr.rel (%p1152) target = $region104
        $region103: #{run.1} parent=11 // pred_region
          _
        $region104: #{run.1} parent=11 // pred_fallthru
          _
        // Predicated region
        $region105: #{run.1} parent=11 // pred_check
          %p1155 = pneg %p767
        $region106: #{run.1} parent=11 // pred_check_branch
          %1157 = sbr.rel (%p1155) target = $region108
        $region107: #{run.1} parent=11 // pred_region
          _
        $region108: #{run.1} parent=11 // pred_fallthru
          _
        // Predicated region
        $region109: #{run.1} parent=11 // pred_check
          %p1158 = pneg %p788
        $region110: #{run.1} parent=11 // pred_check_branch
          %1160 = sbr.rel (%p1158) target = $region112
        $region111: #{run.1} parent=11 // pred_region
          _
        $region112: #{run.1} parent=11 // pred_fallthru
          _
        // Predicated region
        $region113: #{run.1} parent=11 // pred_check
          %p1161 = pneg %p809
        $region114: #{run.1} parent=11 // pred_check_branch
          %1163 = sbr.rel (%p1161) target = $region116
        $region115: #{run.1} parent=11 // pred_region
          _
        $region116: #{run.1} parent=11 // pred_fallthru
          _
        // Predicated region
        $region117: #{run.1} parent=11 // pred_check
          %p1164 = pneg %p830
        $region118: #{run.1} parent=11 // pred_check_branch
          %1166 = sbr.rel (%p1164) target = $region120
        $region119: #{run.1} parent=11 // pred_region
          _
        $region120: #{run.1} parent=11 // pred_fallthru
          _
        // Predicated region
        $region121: #{run.1} parent=11 // pred_check
          %p1167 = pneg %p851
        $region122: #{run.1} parent=11 // pred_check_branch
          %1169 = sbr.rel (%p1167) target = $region124
        $region123: #{run.1} parent=11 // pred_region
          _
        $region124: #{run.1} parent=11 // pred_fallthru
          _
        // Predicated region
        $region125: #{run.1} parent=11 // pred_check
          %p1170 = pneg %p872
        $region126: #{run.1} parent=11 // pred_check_branch
          %1172 = sbr.rel (%p1170) target = $region128
        $region127: #{run.1} parent=11 // pred_region
          _
        $region128: #{run.1} parent=11 // pred_fallthru
          _
        // Predicated region
        $region129: #{run.1} parent=11 // pred_check
          %p1173 = pneg %p893
        $region130: #{run.1} parent=11 // pred_check_branch
          %1175 = sbr.rel (%p1173) target = $region132
        $region131: #{run.1} parent=11 // pred_region
          _
        $region132: #{run.1} parent=11 // pred_fallthru
          _
        // Predicated region
        $region133: #{run.1} parent=11 // pred_check
          %p1176 = pneg %p914
        $region134: #{run.1} parent=11 // pred_check_branch
          %1178 = sbr.rel (%p1176) target = $region136
        $region135: #{run.1} parent=11 // pred_region
          _
        $region136: #{run.1} parent=11 // pred_fallthru
          _
        // Predicated region
        $region137: #{run.1} parent=11 // pred_check
          %p1179 = pneg %p935
        $region138: #{run.1} parent=11 // pred_check_branch
          %1181 = sbr.rel (%p1179) target = $region140
        $region139: #{run.1} parent=11 // pred_region
          _
        $region140: #{run.1} parent=11 // pred_fallthru
          _
        // Predicated region
        $region141: #{run.1} parent=11 // pred_check
          %p1182 = pneg %p956
        $region142: #{run.1} parent=11 // pred_check_branch
          %1184 = sbr.rel (%p1182) target = $region144
        $region143: #{run.1} parent=11 // pred_region
          _
        $region144: #{run.1} parent=11 // pred_fallthru
          _
        // Predicated region
        $region145: #{run.1} parent=11 // pred_check
          %p1185 = pneg %p977
        $region146: #{run.1} parent=11 // pred_check_branch
          %1187 = sbr.rel (%p1185) target = $region148
        $region147: #{run.1} parent=11 // pred_region
          _
        $region148: #{run.1} parent=11 // pred_fallthru
          _
        // Predicated region
        $region149: #{run.1} parent=11 // pred_check
          %p1188 = pneg %p998
        $region150: #{run.1} parent=11 // pred_check_branch
          %1190 = sbr.rel (%p1188) target = $region152
        $region151: #{run.1} parent=11 // pred_region
          _
        $region152: #{run.1} parent=11 // pred_fallthru
          _
        // Predicated region
        $region153: #{run.1} parent=11 // pred_check
          %p1191 = pneg %p1019
        $region154: #{run.1} parent=11 // pred_check_branch
          %1193 = sbr.rel (%p1191) target = $region156
        $region155: #{run.1} parent=11 // pred_region
          _
        $region156: #{run.1} parent=11 // pred_fallthru
          _
      $region12: #{run.1} parent=5 // pred_fallthru
        _
      %p1194 = scmp.lt.s32.totalorder %s107, 2
      // Predicated region
      $region157: #{run.1} parent=5 // pred_check
        %p1195 = pneg %p1194
      $region158: #{run.1} parent=5 // pred_check_branch
        %1197 = sbr.rel (%p1195) target = $region160
      $region159: #{run.1} parent=5 // pred_region
        // Predicated region
        $region161: #{run.1} parent=159 // pred_check
          %p1198 = pneg %p127
        $region162: #{run.1} parent=159 // pred_check_branch
          %1200 = sbr.rel (%p1198) target = $region164
        $region163: #{run.1} parent=159 // pred_region
          %p1201 = scmp.lt.s32.totalorder %s107, 1
          %s1202 = scalar_select %p1201, %s107, 1
          %s1203 = smul.addr %s1202, 8
          %s1204 = scalar_lea.vmem %s3, %s1203
        $region164: #{run.1} parent=159 // pred_fallthru
          _
        // Predicated region
        $region165: #{run.1} parent=159 // pred_check
          %p1205 = pneg %p153
        $region166: #{run.1} parent=159 // pred_check_branch
          %1207 = sbr.rel (%p1205) target = $region168
        $region167: #{run.1} parent=159 // pred_region
          %p1208 = scmp.lt.s32.totalorder %s107, 1
          %s1209 = scalar_select %p1208, %s107, 1
          %s1210 = smul.addr %s1209, 8
          %s1211 = scalar_lea.vmem %s5, %s1210
        $region168: #{run.1} parent=159 // pred_fallthru
          _
        // Predicated region
        $region169: #{run.1} parent=159 // pred_check
          %p1212 = pneg %p179
        $region170: #{run.1} parent=159 // pred_check_branch
          %1214 = sbr.rel (%p1212) target = $region172
        $region171: #{run.1} parent=159 // pred_region
          %p1215 = scmp.lt.s32.totalorder %s107, 1
          %s1216 = scalar_select %p1215, %s107, 1
          %s1217 = scalar_lea.vmem %s7, %s1216
        $region172: #{run.1} parent=159 // pred_fallthru
          _
        // Predicated region
        $region173: #{run.1} parent=159 // pred_check
          %p1218 = pneg %p205
        $region174: #{run.1} parent=159 // pred_check_branch
          %1220 = sbr.rel (%p1218) target = $region176
        $region175: #{run.1} parent=159 // pred_region
          %p1221 = scmp.lt.s32.totalorder %s107, 1
          %s1222 = scalar_select %p1221, %s107, 1
          %s1223 = scalar_lea.vmem %s9, %s1222
        $region176: #{run.1} parent=159 // pred_fallthru
          _
        // Predicated region
        $region177: #{run.1} parent=159 // pred_check
          %p1224 = pneg %p231
        $region178: #{run.1} parent=159 // pred_check_branch
          %1226 = sbr.rel (%p1224) target = $region180
        $region179: #{run.1} parent=159 // pred_region
          %p1227 = scmp.lt.s32.totalorder %s107, 1
          %s1228 = scalar_select %p1227, %s107, 1
          %s1229 = smul.addr %s1228, 2
          %s1230 = smul.addr %s1229, 8
          %s1231 = scalar_lea.vmem %s11, %s1230
        $region180: #{run.1} parent=159 // pred_fallthru
          _
        // Predicated region
        $region181: #{run.1} parent=159 // pred_check
          %p1232 = pneg %p257
        $region182: #{run.1} parent=159 // pred_check_branch
          %1234 = sbr.rel (%p1232) target = $region184
        $region183: #{run.1} parent=159 // pred_region
          %p1235 = scmp.lt.s32.totalorder %s107, 1
          %s1236 = scalar_select %p1235, %s107, 1
          %s1237 = smul.addr %s1236, 2
          %s1238 = smul.addr %s1237, 8
          %s1239 = scalar_lea.vmem %s13, %s1238
        $region184: #{run.1} parent=159 // pred_fallthru
          _
      $region160: #{run.1} parent=5 // pred_fallthru
        _
      %p1240 = scmp.le.s32.totalorder 1, %s107
      %p1241 = scmp.lt.s32.totalorder %s107, 3
      %p1242 = pnand %p1240, %p1241
      %p1243 = pneg %p1242
      // Predicated region
      $region185: #{run.1} parent=5 // pred_check
        _
      $region186: #{run.1} parent=5 // pred_check_branch
        %1245 = sbr.rel (%p1242) target = $region188
      $region187: #{run.1} parent=5 // pred_region
        %s1246 = ssub.s32 %s107, 1
        %p1247 = scmp.lt.s32.totalorder %s112, 1
        %s1248 = scalar_select %p1247, %s112, 1
        %s1249 = smul.addr %s1248, 8
        %s1250 = scalar_lea.vmem %s3, %s1249
        %p1251 = pneg %p133
        %p1252 = pneg %p130
        %p1253 = scmp.lt.s32.totalorder %s112, 1
        %s1254 = scalar_select %p1253, %s112, 1
        %s1255 = smul.addr %s1254, 8
        %s1256 = scalar_lea.vmem %s5, %s1255
        %p1257 = pneg %p159
        %p1258 = pneg %p156
        %p1259 = scmp.lt.s32.totalorder %s112, 1
        %s1260 = scalar_select %p1259, %s112, 1
        %s1261 = scalar_lea.vmem %s7, %s1260
        %p1262 = pneg %p185
        %p1263 = pneg %p182
        %p1264 = scmp.lt.s32.totalorder %s112, 1
        %s1265 = scalar_select %p1264, %s112, 1
        %s1266 = scalar_lea.vmem %s9, %s1265
        %p1267 = pneg %p211
        %p1268 = pneg %p208
        %p1269 = scmp.lt.s32.totalorder %s112, 1
        %s1270 = scalar_select %p1269, %s112, 1
        %s1271 = smul.addr %s1270, 2
        %s1272 = smul.addr %s1271, 8
        %s1273 = scalar_lea.vmem %s11, %s1272
        %p1274 = pneg %p237
        %p1275 = pneg %p234
        %p1276 = scmp.lt.s32.totalorder %s112, 1
        %s1277 = scalar_select %p1276, %s112, 1
        %s1278 = smul.addr %s1277, 2
        %s1279 = smul.addr %s1278, 8
        %s1280 = scalar_lea.vmem %s13, %s1279
        %p1281 = pneg %p263
        %p1282 = pneg %p260
        %p1283 = pneg %p284
        %p1284 = pneg %p281
        %p1285 = pneg %p305
        %p1286 = pneg %p302
        %p1287 = pneg %p326
        %p1288 = pneg %p323
        %p1289 = pneg %p347
        %p1290 = pneg %p344
        %p1291 = pneg %p368
        %p1292 = pneg %p365
        %p1293 = pneg %p389
        %p1294 = pneg %p386
        %p1295 = pneg %p410
        %p1296 = pneg %p407
        %p1297 = pneg %p431
        %p1298 = pneg %p428
        %p1299 = pneg %p452
        %p1300 = pneg %p449
        %p1301 = pneg %p473
        %p1302 = pneg %p470
        %p1303 = pneg %p494
        %p1304 = pneg %p491
        %p1305 = pneg %p515
        %p1306 = pneg %p512
        %p1307 = pneg %p536
        %p1308 = pneg %p533
        %p1309 = pneg %p557
        %p1310 = pneg %p554
        %p1311 = pneg %p578
        %p1312 = pneg %p575
        %p1313 = pneg %p599
        %p1314 = pneg %p596
        %p1315 = pneg %p620
        %p1316 = pneg %p617
        %p1317 = pneg %p641
        %p1318 = pneg %p638
        %p1319 = pneg %p662
        %p1320 = pneg %p659
        %p1321 = pneg %p683
        %p1322 = pneg %p680
        %p1323 = pneg %p704
        %p1324 = pneg %p701
        %p1325 = pneg %p725
        %p1326 = pneg %p722
        %p1327 = pneg %p746
        %p1328 = pneg %p743
        %p1329 = pneg %p767
        %p1330 = pneg %p764
        %p1331 = pneg %p788
        %p1332 = pneg %p785
        %p1333 = pneg %p809
        %p1334 = pneg %p806
        %p1335 = pneg %p830
        %p1336 = pneg %p827
        %p1337 = pneg %p851
        %p1338 = pneg %p848
        %p1339 = pneg %p872
        %p1340 = pneg %p869
        %p1341 = pneg %p893
        %p1342 = pneg %p890
        %p1343 = pneg %p914
        %p1344 = pneg %p911
        %p1345 = pneg %p935
        %p1346 = pneg %p932
        %p1347 = pneg %p956
        %p1348 = pneg %p953
        %p1349 = pneg %p977
        %p1350 = pneg %p974
        %p1351 = pneg %p998
        %p1352 = pneg %p995
        %p1353 = pneg %p1019
        %p1354 = pneg %p1016
        %p1355 = pneg %p1045
        %p1356 = pneg %p1042
        %p1357 = scmp.lt.s32.totalorder %s112, 1
        %s1358 = scalar_select %p1357, %s112, 1
        %s1359 = smul.addr %s1358, 2
        %s1360 = smul.addr %s1359, 8
        %s1361 = scalar_lea.vmem %s87, %s1360
        %p1362 = pneg %p1071
        %p1363 = pneg %p1068
        %s1364 = sand.u32 %s1058, 1
        %s1365 = scalar_lea.sflag [#allocation6], %s1364
        %s1366 = sand.u32 %s1058, 1
        %s1367 = scalar_lea.vmem [#allocation5], %s1366
        %p1368 = scmp.lt.s32.totalorder %s112, 1
        %s1369 = scalar_select %p1368, %s112, 1
        %s1370 = smul.addr %s1369, 8
        %s1371 = scalar_lea.vmem %s3, %s1370
        %p1372 = scmp.lt.s32.totalorder %s112, 1
        %s1373 = scalar_select %p1372, %s112, 1
        %s1374 = smul.addr %s1373, 8
        %s1375 = scalar_lea.vmem %s5, %s1374
        %p1376 = scmp.lt.s32.totalorder %s112, 1
        %s1377 = scalar_select %p1376, %s112, 1
        %s1378 = scalar_lea.vmem %s7, %s1377
        %p1379 = scmp.lt.s32.totalorder %s112, 1
        %s1380 = scalar_select %p1379, %s112, 1
        %s1381 = scalar_lea.vmem %s9, %s1380
        %p1382 = scmp.lt.s32.totalorder %s112, 1
        %s1383 = scalar_select %p1382, %s112, 1
        %s1384 = smul.addr %s1383, 2
        %s1385 = smul.addr %s1384, 8
        %s1386 = scalar_lea.vmem %s11, %s1385
        %p1387 = scmp.lt.s32.totalorder %s112, 1
        %s1388 = scalar_select %p1387, %s112, 1
        %s1389 = smul.addr %s1388, 2
        %s1390 = smul.addr %s1389, 8
        %s1391 = scalar_lea.vmem %s13, %s1390
        %p1392 = scmp.lt.s32.totalorder %s112, 1
        %s1393 = scalar_select %p1392, %s112, 1
        %s1394 = smul.addr %s1393, 2
        %s1395 = smul.addr %s1394, 8
        %s1396 = scalar_lea.vmem %s87, %s1395
        %v1398 = vld [vmem:[%s1371] sm:$0xff]
        %v1399 = vld [vmem:[%s1375] sm:$0xff]
        %v1400 = vpack.c.bf16 %v1398, %v1398
        %v1401 = vld [vmem:[%s15] sm:$0xf]
        %v1402 = vld [vmem:[%s15 + $0x4] sm:$0xf]
        %v1403 = vld [vmem:[%s15 + $0x8] sm:$0xf]
        %v1404 = vld [vmem:[%s15 + $0xc] sm:$0xf]
        %v1405 = vld [vmem:[%s17] sm:$0x1]
        %v1407 = vlaneseq
        %v1408 = vshrl.u32 %v1407, 7
        %v1409 = vsub.s32 0, %v1408
        %v1410 = vrot.slane %v1405, %v1409
        %v1416 = vunpack.c.l.b16 %v1401
        %v1417 = vunpack.c.l.b16 %v1402
        %v1418 = vunpack.c.l.b16 %v1403
        %v1419 = vunpack.c.l.b16 %v1404
        %v1420 = vpack.c.b16 %v1417, %v1416
        %v1421 = vpack.c.b16 %v1419, %v1418
        %vm1424 = vcmask 261120
        %v1426 = vsel %vm1424, %v1400, 0
        %1428 = vmatprep.subr.bf16.mxu0 0
        %1429 = vmatpush1.bf16.msra.mxu0 %v1420
        %1430 = vmatprep.subr.bf16.mxu0 0
        %1431 = vmatpush1.bf16.msra.mxu0 %v1421
        %1432 = vmatprep.subr.bf16.mxu0 0
        %1433 = vmatpush1.bf16.msra.mxu0 0
        %1434 = vmatprep.subr.bf16.mxu0 0
        %1435 = vmatpush1.bf16.msra.mxu0 0
        %1436 = vmatprep.subr.bf16.mxu0 0
        %1437 = vmatpush1.bf16.msra.mxu0 0
        %1438 = vmatprep.subr.bf16.mxu0 0
        %1439 = vmatpush1.bf16.msra.mxu0 0
        %1440 = vmatprep.subr.bf16.mxu0 0
        %1441 = vmatpush1.bf16.msra.mxu0 0
        %1442 = vmatprep.subr.bf16.mxu0 0
        %1443 = vmatpush1.bf16.msra.mxu0 0
        %1444 = vmatprep.subr.bf16.mxu0 0
        %1445 = vmatpush1.bf16.msra.mxu0 0
        %1446 = vmatprep.subr.bf16.mxu0 0
        %1447 = vmatpush1.bf16.msra.mxu0 0
        %1448 = vmatprep.subr.bf16.mxu0 0
        %1449 = vmatpush1.bf16.msra.mxu0 0
        %1450 = vmatprep.subr.bf16.mxu0 0
        %1451 = vmatpush1.bf16.msra.mxu0 0
        %1452 = vmatprep.subr.bf16.mxu0 0
        %1453 = vmatpush1.bf16.msra.mxu0 0
        %1454 = vmatprep.subr.bf16.mxu0 0
        %1455 = vmatpush1.bf16.msra.mxu0 0
        %1456 = vmatprep.subr.bf16.mxu0 0
        %1457 = vmatpush1.bf16.msra.mxu0 0
        %1458 = vmatprep.subr.bf16.mxu0 0
        %1459 = vmatpush1.bf16.msra.mxu0 0
        %1460 = vmatprep.mubr.bf16.mxu0 0
        %1461 = vmatmul.mubr.bf16.gmra.mrb[0].mxu0 %v1426
        %v1462 = vpop.f32.mrb[0].mxu0
        %v1463 = vadd.f32 %v1410, %v1462
        %v1464 = vpop.f32.mrb[0].mxu0
        %v1465 = vpop.f32.mrb[0].mxu0
        %v1466 = vpop.f32.mrb[0].mxu0
        %1467 = vdwg.mxu0
        %v1468 = vld [vmem:[%s19] sm:$0xf]
        %v1469 = vld [vmem:[%s19 + $0x4] sm:$0xf]
        %v1470 = vld [vmem:[%s19 + $0x8] sm:$0xf]
        %v1471 = vld [vmem:[%s19 + $0xc] sm:$0xf]
        %v1472 = vpack.c.bf16 %v1463, %v1463
        %1474 = vrot.lane.b32.xlu0 %v1472, 96
        %v1475 = vpop.permute.xlu0 %1474
        %vm1476 = vcmask 130048
        %v1478 = vsel %vm1476, %v1472, 0
        %v1481 = vsel %vm1476, %v1475, 0
        %1483 = vmatprep.subr.bf16.mxu0 0
        %1484 = vmatpush1.bf16.xpose.msra.mxu0 %v1481
        %1485 = vmatprep.subr.bf16.mxu0 0
        %1486 = vmatpush1.bf16.xpose.msra.mxu0 0
        %1487 = vmatprep.subr.bf16.mxu0 0
        %1488 = vmatpush1.bf16.xpose.msra.mxu0 0
        %1489 = vmatprep.subr.bf16.mxu0 0
        %1490 = vmatpush1.bf16.xpose.msra.mxu0 0
        %1491 = vmatprep.subr.bf16.mxu0 0
        %1492 = vmatpush1.bf16.xpose.msra.mxu0 0
        %1493 = vmatprep.subr.bf16.mxu0 0
        %1494 = vmatpush1.bf16.xpose.msra.mxu0 0
        %1495 = vmatprep.subr.bf16.mxu0 0
        %1496 = vmatpush1.bf16.xpose.msra.mxu0 0
        %1497 = vmatprep.subr.bf16.mxu0 0
        %1498 = vmatpush1.bf16.xpose.msra.mxu0 0
        %1499 = vmatprep.subr.bf16.mxu0 0
        %1500 = vmatpush1.bf16.xpose.msra.mxu0 0
        %1501 = vmatprep.subr.bf16.mxu0 0
        %1502 = vmatpush1.bf16.xpose.msra.mxu0 0
        %1503 = vmatprep.subr.bf16.mxu0 0
        %1504 = vmatpush1.bf16.xpose.msra.mxu0 0
        %1505 = vmatprep.subr.bf16.mxu0 0
        %1506 = vmatpush1.bf16.xpose.msra.mxu0 0
        %1507 = vmatprep.subr.bf16.mxu0 0
        %1508 = vmatpush1.bf16.xpose.msra.mxu0 0
        %1509 = vmatprep.subr.bf16.mxu0 0
        %1510 = vmatpush1.bf16.xpose.msra.mxu0 0
        %1511 = vmatprep.subr.bf16.mxu0 0
        %1512 = vmatpush1.bf16.xpose.msra.mxu0 0
        %1513 = vmatprep.subr.bf16.mxu0 0
        %1514 = vmatpush1.bf16.xpose.msra.mxu0 0
        %1515 = vmatprep.mubr.bf16.mxu0 0
        %1516 = vmatmul.mubr.bf16.gmra.mrb[0].mxu0 %v1478
        %v1517 = vpop.f32.mrb[0].mxu0
        %v1518 = vadd.f32 0.0, %v1517
        %v1519 = vpop.f32.mrb[0].mxu0
        %v1520 = vpop.f32.mrb[0].mxu0
        %v1521 = vpop.f32.mrb[0].mxu0
        %1522 = vdwg.mxu0
        %v1523 = vmul.f32 %v1518, 0.25
        %vm1524 = vcmask 64512
        %v1525 = vsel %vm1524, %v1523, -inf
        %1526 = vmax.xlane.f32.xlu0 %v1525
        %v1527 = vpop.xlane.xlu0 %1526
        %v1528 = vsub.f32 %v1523, %v1527
        %v1529 = vmul.f32 %v1528, 1.442695
        %v1530 = vpow.pop %v1529
        %v1531 = vsel %vm1524, %v1530, 0.0
        %1532 = vadd.xlane.f32.xlu0 %v1531
        %v1533 = vpop.xlane.xlu0 %1532
        %v1534 = vrcp.pop %v1533
        %v1535 = vmul.f32 %v1530, %v1534
        %v1536 = vmul.f32 %v1535, 1.442695
        %v1537 = vpow.pop %v1536
        %v1538 = vsel %vm1524, %v1537, 0.0
        %1539 = vadd.xlane.f32.xlu0 %v1538
        %v1540 = vpop.xlane.xlu0 %1539
        %v1541 = vrcp.pop %v1540
        %v1542 = vmul.f32 %v1537, %v1541
        %v1543 = vpack.c.bf16 %v1542, %v1542
        %1544 = vrot.lane.b32.xlu0 %v1472, 64
        %v1545 = vpop.permute.xlu0 %1544
        %v1547 = vsel %vm1524, %v1543, 0
        %vm1549 = vcmask 1043456
        %v1551 = vsel %vm1549, %v1545, 0
        %1553 = vmatprep.subr.bf16.mxu0 0
        %1554 = vmatpush1.bf16.msra.mxu0 %v1551
        %1555 = vmatprep.subr.bf16.mxu0 0
        %1556 = vmatpush1.bf16.msra.mxu0 0
        %1557 = vmatprep.subr.bf16.mxu0 0
        %1558 = vmatpush1.bf16.msra.mxu0 0
        %1559 = vmatprep.subr.bf16.mxu0 0
        %1560 = vmatpush1.bf16.msra.mxu0 0
        %1561 = vmatprep.subr.bf16.mxu0 0
        %1562 = vmatpush1.bf16.msra.mxu0 0
        %1563 = vmatprep.subr.bf16.mxu0 0
        %1564 = vmatpush1.bf16.msra.mxu0 0
        %1565 = vmatprep.subr.bf16.mxu0 0
        %1566 = vmatpush1.bf16.msra.mxu0 0
        %1567 = vmatprep.subr.bf16.mxu0 0
        %1568 = vmatpush1.bf16.msra.mxu0 0
        %1569 = vmatprep.subr.bf16.mxu0 0
        %1570 = vmatpush1.bf16.msra.mxu0 0
        %1571 = vmatprep.subr.bf16.mxu0 0
        %1572 = vmatpush1.bf16.msra.mxu0 0
        %1573 = vmatprep.subr.bf16.mxu0 0
        %1574 = vmatpush1.bf16.msra.mxu0 0
        %1575 = vmatprep.subr.bf16.mxu0 0
        %1576 = vmatpush1.bf16.msra.mxu0 0
        %1577 = vmatprep.subr.bf16.mxu0 0
        %1578 = vmatpush1.bf16.msra.mxu0 0
        %1579 = vmatprep.subr.bf16.mxu0 0
        %1580 = vmatpush1.bf16.msra.mxu0 0
        %1581 = vmatprep.subr.bf16.mxu0 0
        %1582 = vmatpush1.bf16.msra.mxu0 0
        %1583 = vmatprep.subr.bf16.mxu0 0
        %1584 = vmatpush1.bf16.msra.mxu0 0
        %1585 = vmatprep.mubr.bf16.mxu0 0
        %1586 = vmatmul.mubr.bf16.gmra.mrb[0].mxu0 %v1547
        %v1587 = vpop.f32.mrb[0].mxu0
        %v1588 = vadd.f32 0.0, %v1587
        %v1589 = vpop.f32.mrb[0].mxu0
        %v1590 = vpop.f32.mrb[0].mxu0
        %v1591 = vpop.f32.mrb[0].mxu0
        %1592 = vdwg.mxu0
        %v1593 = vpack.c.bf16 %v1588, %v1588
        %1594 = vrot.lane.b32.xlu0 %v1472, 112
        %v1595 = vpop.permute.xlu0 %1594
        %1596 = vrot.lane.b32.xlu0 %v1472, 80
        %v1597 = vpop.permute.xlu0 %1596
        %v1599 = vsel %vm1476, %v1595, 0
        %v1602 = vsel %vm1476, %v1597, 0
        %1604 = vmatprep.subr.bf16.mxu0 0
        %1605 = vmatpush1.bf16.xpose.msra.mxu0 %v1602
        %1606 = vmatprep.subr.bf16.mxu0 0
        %1607 = vmatpush1.bf16.xpose.msra.mxu0 0
        %1608 = vmatprep.subr.bf16.mxu0 0
        %1609 = vmatpush1.bf16.xpose.msra.mxu0 0
        %1610 = vmatprep.subr.bf16.mxu0 0
        %1611 = vmatpush1.bf16.xpose.msra.mxu0 0
        %1612 = vmatprep.subr.bf16.mxu0 0
        %1613 = vmatpush1.bf16.xpose.msra.mxu0 0
        %1614 = vmatprep.subr.bf16.mxu0 0
        %1615 = vmatpush1.bf16.xpose.msra.mxu0 0
        %1616 = vmatprep.subr.bf16.mxu0 0
        %1617 = vmatpush1.bf16.xpose.msra.mxu0 0
        %1618 = vmatprep.subr.bf16.mxu0 0
        %1619 = vmatpush1.bf16.xpose.msra.mxu0 0
        %1620 = vmatprep.subr.bf16.mxu0 0
        %1621 = vmatpush1.bf16.xpose.msra.mxu0 0
        %1622 = vmatprep.subr.bf16.mxu0 0
        %1623 = vmatpush1.bf16.xpose.msra.mxu0 0
        %1624 = vmatprep.subr.bf16.mxu0 0
        %1625 = vmatpush1.bf16.xpose.msra.mxu0 0
        %1626 = vmatprep.subr.bf16.mxu0 0
        %1627 = vmatpush1.bf16.xpose.msra.mxu0 0
        %1628 = vmatprep.subr.bf16.mxu0 0
        %1629 = vmatpush1.bf16.xpose.msra.mxu0 0
        %1630 = vmatprep.subr.bf16.mxu0 0
        %1631 = vmatpush1.bf16.xpose.msra.mxu0 0
        %1632 = vmatprep.subr.bf16.mxu0 0
        %1633 = vmatpush1.bf16.xpose.msra.mxu0 0
        %1634 = vmatprep.subr.bf16.mxu0 0
        %1635 = vmatpush1.bf16.xpose.msra.mxu0 0
        %1636 = vmatprep.mubr.bf16.mxu0 0
        %1637 = vmatmul.mubr.bf16.gmra.mrb[0].mxu0 %v1599
        %v1638 = vpop.f32.mrb[0].mxu0
        %v1639 = vadd.f32 0.0, %v1638
        %v1640 = vpop.f32.mrb[0].mxu0
        %v1641 = vpop.f32.mrb[0].mxu0
        %v1642 = vpop.f32.mrb[0].mxu0
        %1643 = vdwg.mxu0
        %v1644 = vmul.f32 %v1639, 0.25
        %v1645 = vsel %vm1524, %v1644, -inf
        %1646 = vmax.xlane.f32.xlu0 %v1645
        %v1647 = vpop.xlane.xlu0 %1646
        %v1648 = vsub.f32 %v1644, %v1647
        %v1649 = vmul.f32 %v1648, 1.442695
        %v1650 = vpow.pop %v1649
        %v1651 = vsel %vm1524, %v1650, 0.0
        %1652 = vadd.xlane.f32.xlu0 %v1651
        %v1653 = vpop.xlane.xlu0 %1652
        %v1654 = vrcp.pop %v1653
        %v1655 = vmul.f32 %v1650, %v1654
        %v1656 = vmul.f32 %v1655, 1.442695
        %v1657 = vpow.pop %v1656
        %v1658 = vsel %vm1524, %v1657, 0.0
        %1659 = vadd.xlane.f32.xlu0 %v1658
        %v1660 = vpop.xlane.xlu0 %1659
        %v1661 = vrcp.pop %v1660
        %v1662 = vmul.f32 %v1657, %v1661
        %v1663 = vpack.c.bf16 %v1662, %v1662
        %1664 = vrot.lane.b32.xlu0 %v1472, 48
        %v1665 = vpop.permute.xlu0 %1664
        %v1667 = vsel %vm1524, %v1663, 0
        %v1670 = vsel %vm1549, %v1665, 0
        %1672 = vmatprep.subr.bf16.mxu0 0
        %1673 = vmatpush1.bf16.msra.mxu0 %v1670
        %1674 = vmatprep.subr.bf16.mxu0 0
        %1675 = vmatpush1.bf16.msra.mxu0 0
        %1676 = vmatprep.subr.bf16.mxu0 0
        %1677 = vmatpush1.bf16.msra.mxu0 0
        %1678 = vmatprep.subr.bf16.mxu0 0
        %1679 = vmatpush1.bf16.msra.mxu0 0
        %1680 = vmatprep.subr.bf16.mxu0 0
        %1681 = vmatpush1.bf16.msra.mxu0 0
        %1682 = vmatprep.subr.bf16.mxu0 0
        %1683 = vmatpush1.bf16.msra.mxu0 0
        %1684 = vmatprep.subr.bf16.mxu0 0
        %1685 = vmatpush1.bf16.msra.mxu0 0
        %1686 = vmatprep.subr.bf16.mxu0 0
        %1687 = vmatpush1.bf16.msra.mxu0 0
        %1688 = vmatprep.subr.bf16.mxu0 0
        %1689 = vmatpush1.bf16.msra.mxu0 0
        %1690 = vmatprep.subr.bf16.mxu0 0
        %1691 = vmatpush1.bf16.msra.mxu0 0
        %1692 = vmatprep.subr.bf16.mxu0 0
        %1693 = vmatpush1.bf16.msra.mxu0 0
        %1694 = vmatprep.subr.bf16.mxu0 0
        %1695 = vmatpush1.bf16.msra.mxu0 0
        %1696 = vmatprep.subr.bf16.mxu0 0
        %1697 = vmatpush1.bf16.msra.mxu0 0
        %1698 = vmatprep.subr.bf16.mxu0 0
        %1699 = vmatpush1.bf16.msra.mxu0 0
        %1700 = vmatprep.subr.bf16.mxu0 0
        %1701 = vmatpush1.bf16.msra.mxu0 0
        %1702 = vmatprep.subr.bf16.mxu0 0
        %1703 = vmatpush1.bf16.msra.mxu0 0
        %1704 = vmatprep.mubr.bf16.mxu0 0
        %1705 = vmatmul.mubr.bf16.gmra.mrb[0].mxu0 %v1667
        %v1706 = vpop.f32.mrb[0].mxu0
        %v1707 = vadd.f32 0.0, %v1706
        %v1708 = vpop.f32.mrb[0].mxu0
        %v1709 = vpop.f32.mrb[0].mxu0
        %v1710 = vpop.f32.mrb[0].mxu0
        %1711 = vdwg.mxu0
        %v1712 = vpack.c.bf16 %v1707, %v1707
        %v1715 = vunpack.c.l.b16 %v1470
        %v1716 = vunpack.c.l.b16 %v1471
        %v1717 = vpack.c.b16 %v1716, %v1715
        %v1720 = vsel %vm1476, %v1712, 0
        %1722 = vmatprep.subr.bf16.mxu0 0
        %1723 = vmatpush1.bf16.msra.mxu0 %v1717
        %1724 = vmatprep.subr.bf16.mxu0 0
        %1725 = vmatpush1.bf16.msra.mxu0 0
        %1726 = vmatprep.subr.bf16.mxu0 0
        %1727 = vmatpush1.bf16.msra.mxu0 0
        %1728 = vmatprep.subr.bf16.mxu0 0
        %1729 = vmatpush1.bf16.msra.mxu0 0
        %1730 = vmatprep.subr.bf16.mxu0 0
        %1731 = vmatpush1.bf16.msra.mxu0 0
        %1732 = vmatprep.subr.bf16.mxu0 0
        %1733 = vmatpush1.bf16.msra.mxu0 0
        %1734 = vmatprep.subr.bf16.mxu0 0
        %1735 = vmatpush1.bf16.msra.mxu0 0
        %1736 = vmatprep.subr.bf16.mxu0 0
        %1737 = vmatpush1.bf16.msra.mxu0 0
        %1738 = vmatprep.subr.bf16.mxu0 0
        %1739 = vmatpush1.bf16.msra.mxu0 0
        %1740 = vmatprep.subr.bf16.mxu0 0
        %1741 = vmatpush1.bf16.msra.mxu0 0
        %1742 = vmatprep.subr.bf16.mxu0 0
        %1743 = vmatpush1.bf16.msra.mxu0 0
        %1744 = vmatprep.subr.bf16.mxu0 0
        %1745 = vmatpush1.bf16.msra.mxu0 0
        %1746 = vmatprep.subr.bf16.mxu0 0
        %1747 = vmatpush1.bf16.msra.mxu0 0
        %1748 = vmatprep.subr.bf16.mxu0 0
        %1749 = vmatpush1.bf16.msra.mxu0 0
        %1750 = vmatprep.subr.bf16.mxu0 0
        %1751 = vmatpush1.bf16.msra.mxu0 0
        %1752 = vmatprep.subr.bf16.mxu0 0
        %1753 = vmatpush1.bf16.msra.mxu0 0
        %1754 = vmatprep.mubr.bf16.mxu0 0
        %1755 = vmatmul.mubr.bf16.gmra.mrb[0].mxu0 %v1720
        %v1756 = vpop.f32.mrb[0].mxu0
        %v1757 = vadd.f32 0.0, %v1756
        %v1758 = vpop.f32.mrb[0].mxu0
        %v1759 = vpop.f32.mrb[0].mxu0
        %v1760 = vpop.f32.mrb[0].mxu0
        %1761 = vdwg.mxu0
        %v1764 = vunpack.c.l.b16 %v1468
        %v1765 = vunpack.c.l.b16 %v1469
        %v1766 = vpack.c.b16 %v1765, %v1764
        %v1769 = vsel %vm1476, %v1593, 0
        %1771 = vmatprep.subr.bf16.mxu0 0
        %1772 = vmatpush1.bf16.msra.mxu0 %v1766
        %1773 = vmatprep.subr.bf16.mxu0 0
        %1774 = vmatpush1.bf16.msra.mxu0 0
        %1775 = vmatprep.subr.bf16.mxu0 0
        %1776 = vmatpush1.bf16.msra.mxu0 0
        %1777 = vmatprep.subr.bf16.mxu0 0
        %1778 = vmatpush1.bf16.msra.mxu0 0
        %1779 = vmatprep.subr.bf16.mxu0 0
        %1780 = vmatpush1.bf16.msra.mxu0 0
        %1781 = vmatprep.subr.bf16.mxu0 0
        %1782 = vmatpush1.bf16.msra.mxu0 0
        %1783 = vmatprep.subr.bf16.mxu0 0
        %1784 = vmatpush1.bf16.msra.mxu0 0
        %1785 = vmatprep.subr.bf16.mxu0 0
        %1786 = vmatpush1.bf16.msra.mxu0 0
        %1787 = vmatprep.subr.bf16.mxu0 0
        %1788 = vmatpush1.bf16.msra.mxu0 0
        %1789 = vmatprep.subr.bf16.mxu0 0
        %1790 = vmatpush1.bf16.msra.mxu0 0
        %1791 = vmatprep.subr.bf16.mxu0 0
        %1792 = vmatpush1.bf16.msra.mxu0 0
        %1793 = vmatprep.subr.bf16.mxu0 0
        %1794 = vmatpush1.bf16.msra.mxu0 0
        %1795 = vmatprep.subr.bf16.mxu0 0
        %1796 = vmatpush1.bf16.msra.mxu0 0
        %1797 = vmatprep.subr.bf16.mxu0 0
        %1798 = vmatpush1.bf16.msra.mxu0 0
        %1799 = vmatprep.subr.bf16.mxu0 0
        %1800 = vmatpush1.bf16.msra.mxu0 0
        %1801 = vmatprep.subr.bf16.mxu0 0
        %1802 = vmatpush1.bf16.msra.mxu0 0
        %1803 = vmatprep.mubr.bf16.mxu0 0
        %1804 = vmatmul.mubr.bf16.gmra.mrb[0].mxu0 %v1769
        %v1805 = vpop.f32.mrb[0].mxu0
        %v1806 = vadd.f32 %v1757, %v1805
        %v1807 = vpop.f32.mrb[0].mxu0
        %v1808 = vpop.f32.mrb[0].mxu0
        %v1809 = vpop.f32.mrb[0].mxu0
        %1810 = vdwg.mxu0
        %v1811 = vld [vmem:[%s21] sm:$0x1]
        %v1813 = vlaneseq
        %v1814 = vshrl.u32 %v1813, 7
        %v1815 = vsub.s32 0, %v1814
        %v1816 = vrot.slane %v1811, %v1815
        %v1818 = vadd.f32 %v1806, %v1816
        %v1819 = vadd.f32 %v1818, %v1398
        %v1820 = vld [vmem:[%s23] sm:$0x1]
        %v1821 = vld [vmem:[%s25] sm:$0x1]
        %v1822 = vsel %vm1424, %v1819, 0.0
        %1823 = vadd.xlane.f32.xlu0 %v1822
        %v1824 = vpop.xlane.xlu0 %1823
        %v1825 = vrcp.pop 32.0
        %v1826 = vmul.f32 %v1824, %v1825
        %v1827 = vsub.f32 %v1819, %v1826
        %v1828 = vmul.f32 %v1827, %v1827
        %v1829 = vsel %vm1424, %v1828, 0.0
        %1830 = vadd.xlane.f32.xlu0 %v1829
        %v1831 = vpop.xlane.xlu0 %1830
        %v1832 = vmul.f32 %v1831, %v1825
        %v1833 = vadd.f32 %v1832, 1e-05
        %v1834 = vrsqrt.pop %v1833
        %v1835 = vmul.f32 %v1827, %v1834
        %v1837 = vlaneseq
        %v1838 = vshrl.u32 %v1837, 7
        %v1839 = vsub.s32 0, %v1838
        %v1840 = vrot.slane %v1820, %v1839
        %v1842 = vmul.f32 %v1835, %v1840
        %v1844 = vlaneseq
        %v1845 = vshrl.u32 %v1844, 7
        %v1846 = vsub.s32 0, %v1845
        %v1847 = vrot.slane %v1821, %v1846
        %v1849 = vadd.f32 %v1842, %v1847
        %1851 = vset.pattern.permute.xlu0 0
        %1852 = vperm.xlu0 %1851, %v1399
        %v1853 = vpop.permute.xlu0 %1852
        %v1855 = vmul.f32 %v1849, %v1853
        %v1857 = vrot.slane %v1855, 4
        %v1859 = vsel %vm1549, 0.0, %v1857
        %v1860 = vsel %vm1549, %v1857, 0.0
        %vm1863 = vcmask 1046528
        %v1864 = vrot.slane %v1859, 1
        %v1865 = vrot.slane %v1860, 1
        %v1866 = vsel %vm1863, %v1864, %v1865
        %1867 = vrot.lane.b32.xlu0 %v1866, 32
        %v1868 = vpop.permute.xlu0 %1867
        %vm1870 = vcmask 1045504
        %v1871 = vrot.slane %v1859, 2
        %v1872 = vrot.slane %v1860, 2
        %v1873 = vsel %vm1870, %v1871, %v1872
        %1874 = vrot.lane.b32.xlu0 %v1873, 64
        %v1875 = vpop.permute.xlu0 %1874
        %vm1877 = vcmask 1044480
        %v1878 = vrot.slane %v1859, 3
        %v1879 = vrot.slane %v1860, 3
        %v1880 = vsel %vm1877, %v1878, %v1879
        %1881 = vrot.lane.b32.xlu0 %v1880, 96
        %v1882 = vpop.permute.xlu0 %1881
        %v1884 = vrot.slane %v1859, 4
        %v1885 = vrot.slane %v1860, 4
        %v1886 = vsel %vm1549, %v1884, %v1885
        %vm1888 = vcmask 1042432
        %v1889 = vrot.slane %v1859, 5
        %v1890 = vrot.slane %v1860, 5
        %v1891 = vsel %vm1888, %v1889, %v1890
        %1892 = vrot.lane.b32.xlu0 %v1891, 32
        %v1893 = vpop.permute.xlu0 %1892
        %vm1895 = vcmask 1041408
        %v1896 = vrot.slane %v1859, 6
        %v1897 = vrot.slane %v1860, 6
        %v1898 = vsel %vm1895, %v1896, %v1897
        %1899 = vrot.lane.b32.xlu0 %v1898, 64
        %v1900 = vpop.permute.xlu0 %1899
        %vm1902 = vcmask 1040384
        %v1903 = vrot.slane %v1859, 7
        %v1904 = vrot.slane %v1860, 7
        %v1905 = vsel %vm1902, %v1903, %v1904
        %1906 = vrot.lane.b32.xlu0 %v1905, 96
        %v1907 = vpop.permute.xlu0 %1906
        %v1909 = vsel %vm1424, %v1859, %v1868
        %vm1910 = vcmask 523264
        %v1911 = vsel %vm1910, %v1909, %v1875
        %vm1912 = vcmask 785408
        %v1913 = vsel %vm1912, %v1911, %v1882
        %v1914 = vsel %vm1424, %v1886, %v1893
        %v1915 = vsel %vm1910, %v1914, %v1900
        %v1916 = vsel %vm1912, %v1915, %v1907
        %v1917 = vpack.c.bf16 %v1913, %v1913
        %v1918 = vpack.c.bf16 %v1916, %v1916
        %v1919 = vpack.c.bf16 %v1860, %v1860
        %v1920 = vld [vmem:[%s27] sm:$0xf]
        %v1921 = vld [vmem:[%s27 + $0x4] sm:$0xf]
        %v1922 = vld [vmem:[%s27 + $0x8] sm:$0xf]
        %v1923 = vld [vmem:[%s27 + $0xc] sm:$0xf]
        %v1924 = vld [vmem:[%s27 + $0x10] sm:$0xf]
        %v1925 = vld [vmem:[%s27 + $0x14] sm:$0xf]
        %v1926 = vld [vmem:[%s27 + $0x18] sm:$0xf]
        %v1927 = vld [vmem:[%s27 + $0x1c] sm:$0xf]
        %v1928 = vld [vmem:[%s27 + $0x20] sm:$0xf]
        %v1929 = vld [vmem:[%s27 + $0x24] sm:$0xf]
        %v1930 = vld [vmem:[%s27 + $0x28] sm:$0xf]
        %v1931 = vld [vmem:[%s27 + $0x2c] sm:$0xf]
        %v1932 = vld [vmem:[%s27 + $0x30] sm:$0xf]
        %v1933 = vld [vmem:[%s27 + $0x34] sm:$0xf]
        %v1934 = vld [vmem:[%s27 + $0x38] sm:$0xf]
        %v1935 = vld [vmem:[%s27 + $0x3c] sm:$0xf]
        %v1936 = vld [vmem:[%s27 + $0x40] sm:$0xf]
        %v1937 = vld [vmem:[%s27 + $0x44] sm:$0xf]
        %v1938 = vld [vmem:[%s27 + $0x48] sm:$0xf]
        %v1939 = vld [vmem:[%s27 + $0x4c] sm:$0xf]
        %v1940 = vld [vmem:[%s27 + $0x50] sm:$0xf]
        %v1941 = vld [vmem:[%s27 + $0x54] sm:$0xf]
        %v1942 = vld [vmem:[%s27 + $0x58] sm:$0xf]
        %v1943 = vld [vmem:[%s27 + $0x5c] sm:$0xf]
        %v1944 = vld [vmem:[%s27 + $0x60] sm:$0xf]
        %v1945 = vld [vmem:[%s27 + $0x64] sm:$0xf]
        %v1946 = vld [vmem:[%s27 + $0x68] sm:$0xf]
        %v1947 = vld [vmem:[%s27 + $0x6c] sm:$0xf]
        %v1948 = vld [vmem:[%s27 + $0x70] sm:$0xf]
        %v1949 = vld [vmem:[%s27 + $0x74] sm:$0xf]
        %v1950 = vld [vmem:[%s27 + $0x78] sm:$0xf]
        %v1951 = vld [vmem:[%s27 + $0x7c] sm:$0xf]
        %v1952 = vld [vmem:[%s27 + $0x80] sm:$0xf]
        %v1953 = vld [vmem:[%s27 + $0x84] sm:$0xf]
        %v1954 = vld [vmem:[%s27 + $0x88] sm:$0xf]
        %v1955 = vld [vmem:[%s27 + $0x8c] sm:$0xf]
        %v1956 = vld [vmem:[%s29] sm:$0x1]
        %v1958 = vlaneseq
        %v1959 = vshrl.u32 %v1958, 7
        %v1960 = vsub.s32 0, %v1959
        %v1961 = vrot.slane %v1956, %v1960
        %v1999 = vunpack.c.l.b16 %v1920
        %v2000 = vunpack.c.l.b16 %v1921
        %v2001 = vunpack.c.l.b16 %v1922
        %v2002 = vunpack.c.l.b16 %v1923
        %v2003 = vunpack.c.l.b16 %v1924
        %v2004 = vunpack.c.l.b16 %v1925
        %v2005 = vunpack.c.l.b16 %v1926
        %v2006 = vunpack.c.l.b16 %v1927
        %v2007 = vunpack.c.l.b16 %v1928
        %v2008 = vunpack.c.l.b16 %v1929
        %v2009 = vunpack.c.l.b16 %v1930
        %v2010 = vunpack.c.l.b16 %v1931
        %v2011 = vunpack.c.l.b16 %v1932
        %v2012 = vunpack.c.l.b16 %v1933
        %v2013 = vunpack.c.l.b16 %v1934
        %v2014 = vunpack.c.l.b16 %v1935
        %v2015 = vunpack.c.l.b16 %v1936
        %v2016 = vunpack.c.l.b16 %v1937
        %v2017 = vunpack.c.l.b16 %v1938
        %v2018 = vunpack.c.l.b16 %v1939
        %v2019 = vunpack.c.l.b16 %v1940
        %v2020 = vunpack.c.l.b16 %v1941
        %v2021 = vunpack.c.l.b16 %v1942
        %v2022 = vunpack.c.l.b16 %v1943
        %v2023 = vunpack.c.l.b16 %v1944
        %v2024 = vunpack.c.l.b16 %v1945
        %v2025 = vunpack.c.l.b16 %v1946
        %v2026 = vunpack.c.l.b16 %v1947
        %v2027 = vunpack.c.l.b16 %v1948
        %v2028 = vunpack.c.l.b16 %v1949
        %v2029 = vunpack.c.l.b16 %v1950
        %v2030 = vunpack.c.l.b16 %v1951
        %v2031 = vunpack.c.l.b16 %v1952
        %v2032 = vunpack.c.l.b16 %v1953
        %v2033 = vunpack.c.l.b16 %v1954
        %v2034 = vunpack.c.l.b16 %v1955
        %v2035 = vpack.c.b16 %v2000, %v1999
        %v2036 = vpack.c.b16 %v2002, %v2001
        %v2037 = vpack.c.b16 %v2004, %v2003
        %v2038 = vpack.c.b16 %v2006, %v2005
        %v2039 = vpack.c.b16 %v2008, %v2007
        %v2040 = vpack.c.b16 %v2010, %v2009
        %v2041 = vpack.c.b16 %v2012, %v2011
        %v2042 = vpack.c.b16 %v2014, %v2013
        %v2043 = vpack.c.b16 %v2016, %v2015
        %v2044 = vpack.c.b16 %v2018, %v2017
        %v2045 = vpack.c.b16 %v2020, %v2019
        %v2046 = vpack.c.b16 %v2022, %v2021
        %v2047 = vpack.c.b16 %v2024, %v2023
        %v2048 = vpack.c.b16 %v2026, %v2025
        %v2049 = vpack.c.b16 %v2028, %v2027
        %v2050 = vpack.c.b16 %v2030, %v2029
        %v2051 = vpack.c.b16 %v2032, %v2031
        %v2052 = vpack.c.b16 %v2034, %v2033
        %v2072 = vsel %vm1424, %v1919, 0
        %2074 = vmatprep.subr.bf16.mxu0 0
        %2075 = vmatpush1.bf16.msra.mxu0 %v2035
        %2076 = vmatprep.subr.bf16.mxu0 0
        %2077 = vmatpush1.bf16.msra.mxu0 %v2036
        %2078 = vmatprep.subr.bf16.mxu0 0
        %2079 = vmatpush1.bf16.msra.mxu0 %v2037
        %2080 = vmatprep.subr.bf16.mxu0 0
        %2081 = vmatpush1.bf16.msra.mxu0 %v2038
        %2082 = vmatprep.subr.bf16.mxu0 0
        %2083 = vmatpush1.bf16.msra.mxu0 %v2039
        %2084 = vmatprep.subr.bf16.mxu0 0
        %2085 = vmatpush1.bf16.msra.mxu0 %v2040
        %2086 = vmatprep.subr.bf16.mxu0 0
        %2087 = vmatpush1.bf16.msra.mxu0 %v2041
        %2088 = vmatprep.subr.bf16.mxu0 0
        %2089 = vmatpush1.bf16.msra.mxu0 %v2042
        %2090 = vmatprep.subr.bf16.mxu0 0
        %2091 = vmatpush1.bf16.msra.mxu0 %v2043
        %2092 = vmatprep.subr.bf16.mxu0 0
        %2093 = vmatpush1.bf16.msra.mxu0 %v2044
        %2094 = vmatprep.subr.bf16.mxu0 0
        %2095 = vmatpush1.bf16.msra.mxu0 %v2045
        %2096 = vmatprep.subr.bf16.mxu0 0
        %2097 = vmatpush1.bf16.msra.mxu0 %v2046
        %2098 = vmatprep.subr.bf16.mxu0 0
        %2099 = vmatpush1.bf16.msra.mxu0 %v2047
        %2100 = vmatprep.subr.bf16.mxu0 0
        %2101 = vmatpush1.bf16.msra.mxu0 %v2048
        %2102 = vmatprep.subr.bf16.mxu0 0
        %2103 = vmatpush1.bf16.msra.mxu0 %v2049
        %2104 = vmatprep.subr.bf16.mxu0 0
        %2105 = vmatpush1.bf16.msra.mxu0 %v2050
        %2106 = vmatprep.mubr.bf16.mxu0 %v1918
        %2107 = vmatmul.mubr.bf16.gmra.mrb[0].mxu0 %v1917
        %v2108 = vpop.f32.mrb[0].mxu0
        %v2109 = vadd.f32 %v1961, %v2108
        %v2110 = vpop.f32.mrb[0].mxu0
        %v2111 = vpop.f32.mrb[0].mxu0
        %v2112 = vpop.f32.mrb[0].mxu0
        %2113 = vdwg.mxu0
        %2114 = vmatprep.subr.bf16.mxu0 0
        %2115 = vmatpush1.bf16.msra.mxu0 %v2051
        %2116 = vmatprep.subr.bf16.mxu0 0
        %2117 = vmatpush1.bf16.msra.mxu0 %v2052
        %2118 = vmatprep.subr.bf16.mxu0 0
        %2119 = vmatpush1.bf16.msra.mxu0 0
        %2120 = vmatprep.subr.bf16.mxu0 0
        %2121 = vmatpush1.bf16.msra.mxu0 0
        %2122 = vmatprep.subr.bf16.mxu0 0
        %2123 = vmatpush1.bf16.msra.mxu0 0
        %2124 = vmatprep.subr.bf16.mxu0 0
        %2125 = vmatpush1.bf16.msra.mxu0 0
        %2126 = vmatprep.subr.bf16.mxu0 0
        %2127 = vmatpush1.bf16.msra.mxu0 0
        %2128 = vmatprep.subr.bf16.mxu0 0
        %2129 = vmatpush1.bf16.msra.mxu0 0
        %2130 = vmatprep.subr.bf16.mxu0 0
        %2131 = vmatpush1.bf16.msra.mxu0 0
        %2132 = vmatprep.subr.bf16.mxu0 0
        %2133 = vmatpush1.bf16.msra.mxu0 0
        %2134 = vmatprep.subr.bf16.mxu0 0
        %2135 = vmatpush1.bf16.msra.mxu0 0
        %2136 = vmatprep.subr.bf16.mxu0 0
        %2137 = vmatpush1.bf16.msra.mxu0 0
        %2138 = vmatprep.subr.bf16.mxu0 0
        %2139 = vmatpush1.bf16.msra.mxu0 0
        %2140 = vmatprep.subr.bf16.mxu0 0
        %2141 = vmatpush1.bf16.msra.mxu0 0
        %2142 = vmatprep.subr.bf16.mxu0 0
        %2143 = vmatpush1.bf16.msra.mxu0 0
        %2144 = vmatprep.subr.bf16.mxu0 0
        %2145 = vmatpush1.bf16.msra.mxu0 0
        %2146 = vmatprep.mubr.bf16.mxu0 0
        %2147 = vmatmul.mubr.bf16.gmra.mrb[0].mxu0 %v2072
        %v2148 = vpop.f32.mrb[0].mxu0
        %v2149 = vadd.f32 %v2109, %v2148
        %v2150 = vpop.f32.mrb[0].mxu0
        %v2151 = vpop.f32.mrb[0].mxu0
        %v2152 = vpop.f32.mrb[0].mxu0
        %2153 = vdwg.mxu0
        %v2154 = vmax.f32 %v2149, 0.0
        %v2155 = vpack.c.bf16 %v2154, %v2154
        %v2156 = vld [vmem:[%s31] sm:$0xf]
        %v2157 = vld [vmem:[%s31 + $0x4] sm:$0xf]
        %v2158 = vld [vmem:[%s31 + $0x8] sm:$0xf]
        %v2159 = vld [vmem:[%s31 + $0xc] sm:$0xf]
        %v2160 = vld [vmem:[%s31 + $0x10] sm:$0xf]
        %v2161 = vld [vmem:[%s31 + $0x14] sm:$0xf]
        %v2162 = vld [vmem:[%s31 + $0x18] sm:$0xf]
        %v2163 = vld [vmem:[%s31 + $0x1c] sm:$0xf]
        %v2164 = vld [vmem:[%s33] sm:$0x1]
        %v2166 = vlaneseq
        %v2167 = vshrl.u32 %v2166, 7
        %v2168 = vsub.s32 0, %v2167
        %v2169 = vrot.slane %v2164, %v2168
        %v2179 = vunpack.c.l.b16 %v2156
        %v2180 = vunpack.c.l.b16 %v2157
        %v2181 = vunpack.c.l.b16 %v2158
        %v2182 = vunpack.c.l.b16 %v2159
        %v2183 = vunpack.c.l.b16 %v2160
        %v2184 = vunpack.c.l.b16 %v2161
        %v2185 = vunpack.c.l.b16 %v2162
        %v2186 = vunpack.c.l.b16 %v2163
        %v2187 = vpack.c.b16 %v2180, %v2179
        %v2188 = vpack.c.b16 %v2182, %v2181
        %v2189 = vpack.c.b16 %v2184, %v2183
        %v2190 = vpack.c.b16 %v2186, %v2185
        %v2196 = vsel %vm1910, %v2155, 0
        %2198 = vmatprep.subr.bf16.mxu0 0
        %2199 = vmatpush1.bf16.msra.mxu0 %v2187
        %2200 = vmatprep.subr.bf16.mxu0 0
        %2201 = vmatpush1.bf16.msra.mxu0 %v2188
        %2202 = vmatprep.subr.bf16.mxu0 0
        %2203 = vmatpush1.bf16.msra.mxu0 %v2189
        %2204 = vmatprep.subr.bf16.mxu0 0
        %2205 = vmatpush1.bf16.msra.mxu0 %v2190
        %2206 = vmatprep.subr.bf16.mxu0 0
        %2207 = vmatpush1.bf16.msra.mxu0 0
        %2208 = vmatprep.subr.bf16.mxu0 0
        %2209 = vmatpush1.bf16.msra.mxu0 0
        %2210 = vmatprep.subr.bf16.mxu0 0
        %2211 = vmatpush1.bf16.msra.mxu0 0
        %2212 = vmatprep.subr.bf16.mxu0 0
        %2213 = vmatpush1.bf16.msra.mxu0 0
        %2214 = vmatprep.subr.bf16.mxu0 0
        %2215 = vmatpush1.bf16.msra.mxu0 0
        %2216 = vmatprep.subr.bf16.mxu0 0
        %2217 = vmatpush1.bf16.msra.mxu0 0
        %2218 = vmatprep.subr.bf16.mxu0 0
        %2219 = vmatpush1.bf16.msra.mxu0 0
        %2220 = vmatprep.subr.bf16.mxu0 0
        %2221 = vmatpush1.bf16.msra.mxu0 0
        %2222 = vmatprep.subr.bf16.mxu0 0
        %2223 = vmatpush1.bf16.msra.mxu0 0
        %2224 = vmatprep.subr.bf16.mxu0 0
        %2225 = vmatpush1.bf16.msra.mxu0 0
        %2226 = vmatprep.subr.bf16.mxu0 0
        %2227 = vmatpush1.bf16.msra.mxu0 0
        %2228 = vmatprep.subr.bf16.mxu0 0
        %2229 = vmatpush1.bf16.msra.mxu0 0
        %2230 = vmatprep.mubr.bf16.mxu0 0
        %2231 = vmatmul.mubr.bf16.gmra.mrb[0].mxu0 %v2196
        %v2232 = vpop.f32.mrb[0].mxu0
        %v2233 = vadd.f32 %v2169, %v2232
        %v2234 = vpop.f32.mrb[0].mxu0
        %v2235 = vpop.f32.mrb[0].mxu0
        %v2236 = vpop.f32.mrb[0].mxu0
        %2237 = vdwg.mxu0
        %v2238 = vadd.f32 %v2233, %v1855
        %v2239 = vld [vmem:[%s35] sm:$0x1]
        %v2240 = vld [vmem:[%s37] sm:$0x1]
        %v2241 = vsel %vm1424, %v2238, 0.0
        %2242 = vadd.xlane.f32.xlu0 %v2241
        %v2243 = vpop.xlane.xlu0 %2242
        %v2244 = vmul.f32 %v2243, %v1825
        %v2245 = vsub.f32 %v2238, %v2244
        %v2246 = vmul.f32 %v2245, %v2245
        %v2247 = vsel %vm1424, %v2246, 0.0
        %2248 = vadd.xlane.f32.xlu0 %v2247
        %v2249 = vpop.xlane.xlu0 %2248
        %v2250 = vmul.f32 %v2249, %v1825
        %v2251 = vadd.f32 %v2250, 1e-05
        %v2252 = vrsqrt.pop %v2251
        %v2253 = vmul.f32 %v2245, %v2252
        %v2255 = vlaneseq
        %v2256 = vshrl.u32 %v2255, 7
        %v2257 = vsub.s32 0, %v2256
        %v2258 = vrot.slane %v2239, %v2257
        %v2260 = vmul.f32 %v2253, %v2258
        %v2262 = vlaneseq
        %v2263 = vshrl.u32 %v2262, 7
        %v2264 = vsub.s32 0, %v2263
        %v2265 = vrot.slane %v2240, %v2264
        %v2267 = vadd.f32 %v2260, %v2265
        %v2268 = vmul.f32 %v2267, %v1853
        %v2270 = vrot.slane %v2268, 7
        %v2272 = vsel %vm1902, 0.0, %v2270
        %v2273 = vsel %vm1902, %v2270, 0.0
        %v2276 = vrot.slane %v2272, 1
        %v2277 = vrot.slane %v2273, 1
        %v2278 = vsel %vm1863, %v2276, %v2277
        %2279 = vrot.lane.b32.xlu0 %v2278, 32
        %v2280 = vpop.permute.xlu0 %2279
        %v2282 = vrot.slane %v2272, 2
        %v2283 = vrot.slane %v2273, 2
        %v2284 = vsel %vm1870, %v2282, %v2283
        %2285 = vrot.lane.b32.xlu0 %v2284, 64
        %v2286 = vpop.permute.xlu0 %2285
        %v2288 = vsel %vm1424, %v2272, %v2280
        %v2289 = vsel %vm1910, %v2288, %v2286
        %v2290 = vpack.c.bf16 %v2289, %v2289
        %v2291 = vld [vmem:[%s39] sm:$0xf]
        %v2292 = vld [vmem:[%s39 + $0x4] sm:$0xf]
        %v2293 = vld [vmem:[%s39 + $0x8] sm:$0xf]
        %v2294 = vld [vmem:[%s39 + $0xc] sm:$0xf]
        %v2295 = vld [vmem:[%s39 + $0x10] sm:$0xf]
        %v2296 = vld [vmem:[%s39 + $0x14] sm:$0xf]
        %v2297 = vld [vmem:[%s39 + $0x18] sm:$0xf]
        %v2298 = vld [vmem:[%s39 + $0x1c] sm:$0xf]
        %v2299 = vld [vmem:[%s39 + $0x20] sm:$0xf]
        %v2300 = vld [vmem:[%s39 + $0x24] sm:$0xf]
        %v2301 = vld [vmem:[%s39 + $0x28] sm:$0xf]
        %v2302 = vld [vmem:[%s39 + $0x2c] sm:$0xf]
        %v2303 = vld [vmem:[%s41] sm:$0x1]
        %v2305 = vlaneseq
        %v2306 = vshrl.u32 %v2305, 7
        %v2307 = vsub.s32 0, %v2306
        %v2308 = vrot.slane %v2303, %v2307
        %v2322 = vunpack.c.l.b16 %v2291
        %v2323 = vunpack.c.l.b16 %v2292
        %v2324 = vunpack.c.l.b16 %v2293
        %v2325 = vunpack.c.l.b16 %v2294
        %v2326 = vunpack.c.l.b16 %v2295
        %v2327 = vunpack.c.l.b16 %v2296
        %v2328 = vunpack.c.l.b16 %v2297
        %v2329 = vunpack.c.l.b16 %v2298
        %v2330 = vunpack.c.l.b16 %v2299
        %v2331 = vunpack.c.l.b16 %v2300
        %v2332 = vunpack.c.l.b16 %v2301
        %v2333 = vunpack.c.l.b16 %v2302
        %v2334 = vpack.c.b16 %v2323, %v2322
        %v2335 = vpack.c.b16 %v2325, %v2324
        %v2336 = vpack.c.b16 %v2327, %v2326
        %v2337 = vpack.c.b16 %v2329, %v2328
        %v2338 = vpack.c.b16 %v2331, %v2330
        %v2339 = vpack.c.b16 %v2333, %v2332
        %v2347 = vsel %vm1912, %v2290, 0
        %2349 = vmatprep.subr.bf16.mxu0 0
        %2350 = vmatpush1.bf16.msra.mxu0 %v2334
        %2351 = vmatprep.subr.bf16.mxu0 0
        %2352 = vmatpush1.bf16.msra.mxu0 %v2335
        %2353 = vmatprep.subr.bf16.mxu0 0
        %2354 = vmatpush1.bf16.msra.mxu0 %v2336
        %2355 = vmatprep.subr.bf16.mxu0 0
        %2356 = vmatpush1.bf16.msra.mxu0 %v2337
        %2357 = vmatprep.subr.bf16.mxu0 0
        %2358 = vmatpush1.bf16.msra.mxu0 %v2338
        %2359 = vmatprep.subr.bf16.mxu0 0
        %2360 = vmatpush1.bf16.msra.mxu0 %v2339
        %2361 = vmatprep.subr.bf16.mxu0 0
        %2362 = vmatpush1.bf16.msra.mxu0 0
        %2363 = vmatprep.subr.bf16.mxu0 0
        %2364 = vmatpush1.bf16.msra.mxu0 0
        %2365 = vmatprep.subr.bf16.mxu0 0
        %2366 = vmatpush1.bf16.msra.mxu0 0
        %2367 = vmatprep.subr.bf16.mxu0 0
        %2368 = vmatpush1.bf16.msra.mxu0 0
        %2369 = vmatprep.subr.bf16.mxu0 0
        %2370 = vmatpush1.bf16.msra.mxu0 0
        %2371 = vmatprep.subr.bf16.mxu0 0
        %2372 = vmatpush1.bf16.msra.mxu0 0
        %2373 = vmatprep.subr.bf16.mxu0 0
        %2374 = vmatpush1.bf16.msra.mxu0 0
        %2375 = vmatprep.subr.bf16.mxu0 0
        %2376 = vmatpush1.bf16.msra.mxu0 0
        %2377 = vmatprep.subr.bf16.mxu0 0
        %2378 = vmatpush1.bf16.msra.mxu0 0
        %2379 = vmatprep.subr.bf16.mxu0 0
        %2380 = vmatpush1.bf16.msra.mxu0 0
        %2381 = vmatprep.mubr.bf16.mxu0 0
        %2382 = vmatmul.mubr.bf16.gmra.mrb[0].mxu0 %v2347
        %v2383 = vpop.f32.mrb[0].mxu0
        %v2384 = vadd.f32 %v2308, %v2383
        %v2385 = vpop.f32.mrb[0].mxu0
        %v2386 = vpop.f32.mrb[0].mxu0
        %v2387 = vpop.f32.mrb[0].mxu0
        %2388 = vdwg.mxu0
        %v2389 = vld [vmem:[%s43] sm:$0x1]
        %v2390 = vld [vmem:[%s45] sm:$0x1]
        %v2391 = vsel %vm1424, %v2384, 0.0
        %2392 = vadd.xlane.f32.xlu0 %v2391
        %v2393 = vpop.xlane.xlu0 %2392
        %v2394 = vmul.f32 %v2393, %v1825
        %v2395 = vsub.f32 %v2384, %v2394
        %v2396 = vmul.f32 %v2395, %v2395
        %v2397 = vsel %vm1424, %v2396, 0.0
        %2398 = vadd.xlane.f32.xlu0 %v2397
        %v2399 = vpop.xlane.xlu0 %2398
        %v2400 = vmul.f32 %v2399, %v1825
        %v2401 = vadd.f32 %v2400, 1e-05
        %v2402 = vrsqrt.pop %v2401
        %v2403 = vmul.f32 %v2395, %v2402
        %v2405 = vlaneseq
        %v2406 = vshrl.u32 %v2405, 7
        %v2407 = vsub.s32 0, %v2406
        %v2408 = vrot.slane %v2389, %v2407
        %v2410 = vmul.f32 %v2403, %v2408
        %v2412 = vlaneseq
        %v2413 = vshrl.u32 %v2412, 7
        %v2414 = vsub.s32 0, %v2413
        %v2415 = vrot.slane %v2390, %v2414
        %v2417 = vadd.f32 %v2410, %v2415
        %v2418 = vmax.f32 %v2417, 0.0
        %v2420 = vrot.slane %v2418, 7
        %v2422 = vsel %vm1902, 0.0, %v2420
        %v2423 = vsel %vm1902, %v2420, 0.0
        %v2426 = vrot.slane %v2422, 1
        %v2427 = vrot.slane %v2423, 1
        %v2428 = vsel %vm1863, %v2426, %v2427
        %2429 = vrot.lane.b32.xlu0 %v2428, 32
        %v2430 = vpop.permute.xlu0 %2429
        %v2432 = vrot.slane %v2422, 2
        %v2433 = vrot.slane %v2423, 2
        %v2434 = vsel %vm1870, %v2432, %v2433
        %2435 = vrot.lane.b32.xlu0 %v2434, 64
        %v2436 = vpop.permute.xlu0 %2435
        %v2438 = vsel %vm1424, %v2422, %v2430
        %v2439 = vsel %vm1910, %v2438, %v2436
        %v2440 = vpack.c.bf16 %v2439, %v2439
        %v2441 = vld [vmem:[%s47] sm:$0xf]
        %v2442 = vld [vmem:[%s47 + $0x4] sm:$0xf]
        %v2443 = vld [vmem:[%s47 + $0x8] sm:$0xf]
        %v2444 = vld [vmem:[%s47 + $0xc] sm:$0xf]
        %v2445 = vld [vmem:[%s47 + $0x10] sm:$0xf]
        %v2446 = vld [vmem:[%s47 + $0x14] sm:$0xf]
        %v2447 = vld [vmem:[%s47 + $0x18] sm:$0xf]
        %v2448 = vld [vmem:[%s47 + $0x1c] sm:$0xf]
        %v2449 = vld [vmem:[%s47 + $0x20] sm:$0xf]
        %v2450 = vld [vmem:[%s47 + $0x24] sm:$0xf]
        %v2451 = vld [vmem:[%s47 + $0x28] sm:$0xf]
        %v2452 = vld [vmem:[%s47 + $0x2c] sm:$0xf]
        %v2453 = vld [vmem:[%s49] sm:$0x1]
        %v2455 = vlaneseq
        %v2456 = vshrl.u32 %v2455, 7
        %v2457 = vsub.s32 0, %v2456
        %v2458 = vrot.slane %v2453, %v2457
        %v2472 = vunpack.c.l.b16 %v2441
        %v2473 = vunpack.c.l.b16 %v2442
        %v2474 = vunpack.c.l.b16 %v2443
        %v2475 = vunpack.c.l.b16 %v2444
        %v2476 = vunpack.c.l.b16 %v2445
        %v2477 = vunpack.c.l.b16 %v2446
        %v2478 = vunpack.c.l.b16 %v2447
        %v2479 = vunpack.c.l.b16 %v2448
        %v2480 = vunpack.c.l.b16 %v2449
        %v2481 = vunpack.c.l.b16 %v2450
        %v2482 = vunpack.c.l.b16 %v2451
        %v2483 = vunpack.c.l.b16 %v2452
        %v2484 = vpack.c.b16 %v2473, %v2472
        %v2485 = vpack.c.b16 %v2475, %v2474
        %v2486 = vpack.c.b16 %v2477, %v2476
        %v2487 = vpack.c.b16 %v2479, %v2478
        %v2488 = vpack.c.b16 %v2481, %v2480
        %v2489 = vpack.c.b16 %v2483, %v2482
        %v2497 = vsel %vm1912, %v2440, 0
        %2499 = vmatprep.subr.bf16.mxu0 0
        %2500 = vmatpush1.bf16.msra.mxu0 %v2484
        %2501 = vmatprep.subr.bf16.mxu0 0
        %2502 = vmatpush1.bf16.msra.mxu0 %v2485
        %2503 = vmatprep.subr.bf16.mxu0 0
        %2504 = vmatpush1.bf16.msra.mxu0 %v2486
        %2505 = vmatprep.subr.bf16.mxu0 0
        %2506 = vmatpush1.bf16.msra.mxu0 %v2487
        %2507 = vmatprep.subr.bf16.mxu0 0
        %2508 = vmatpush1.bf16.msra.mxu0 %v2488
        %2509 = vmatprep.subr.bf16.mxu0 0
        %2510 = vmatpush1.bf16.msra.mxu0 %v2489
        %2511 = vmatprep.subr.bf16.mxu0 0
        %2512 = vmatpush1.bf16.msra.mxu0 0
        %2513 = vmatprep.subr.bf16.mxu0 0
        %2514 = vmatpush1.bf16.msra.mxu0 0
        %2515 = vmatprep.subr.bf16.mxu0 0
        %2516 = vmatpush1.bf16.msra.mxu0 0
        %2517 = vmatprep.subr.bf16.mxu0 0
        %2518 = vmatpush1.bf16.msra.mxu0 0
        %2519 = vmatprep.subr.bf16.mxu0 0
        %2520 = vmatpush1.bf16.msra.mxu0 0
        %2521 = vmatprep.subr.bf16.mxu0 0
        %2522 = vmatpush1.bf16.msra.mxu0 0
        %2523 = vmatprep.subr.bf16.mxu0 0
        %2524 = vmatpush1.bf16.msra.mxu0 0
        %2525 = vmatprep.subr.bf16.mxu0 0
        %2526 = vmatpush1.bf16.msra.mxu0 0
        %2527 = vmatprep.subr.bf16.mxu0 0
        %2528 = vmatpush1.bf16.msra.mxu0 0
        %2529 = vmatprep.subr.bf16.mxu0 0
        %2530 = vmatpush1.bf16.msra.mxu0 0
        %2531 = vmatprep.mubr.bf16.mxu0 0
        %2532 = vmatmul.mubr.bf16.gmra.mrb[0].mxu0 %v2497
        %v2533 = vpop.f32.mrb[0].mxu0
        %v2534 = vadd.f32 %v2458, %v2533
        %v2535 = vpop.f32.mrb[0].mxu0
        %v2536 = vpop.f32.mrb[0].mxu0
        %v2537 = vpop.f32.mrb[0].mxu0
        %2538 = vdwg.mxu0
        %v2539 = vld [vmem:[%s51] sm:$0x1]
        %v2540 = vld [vmem:[%s53] sm:$0x1]
        %v2541 = vsel %vm1424, %v2534, 0.0
        %2542 = vadd.xlane.f32.xlu0 %v2541
        %v2543 = vpop.xlane.xlu0 %2542
        %v2544 = vmul.f32 %v2543, %v1825
        %v2545 = vsub.f32 %v2534, %v2544
        %v2546 = vmul.f32 %v2545, %v2545
        %v2547 = vsel %vm1424, %v2546, 0.0
        %2548 = vadd.xlane.f32.xlu0 %v2547
        %v2549 = vpop.xlane.xlu0 %2548
        %v2550 = vmul.f32 %v2549, %v1825
        %v2551 = vadd.f32 %v2550, 1e-05
        %v2552 = vrsqrt.pop %v2551
        %v2553 = vmul.f32 %v2545, %v2552
        %v2555 = vlaneseq
        %v2556 = vshrl.u32 %v2555, 7
        %v2557 = vsub.s32 0, %v2556
        %v2558 = vrot.slane %v2539, %v2557
        %v2560 = vmul.f32 %v2553, %v2558
        %v2562 = vlaneseq
        %v2563 = vshrl.u32 %v2562, 7
        %v2564 = vsub.s32 0, %v2563
        %v2565 = vrot.slane %v2540, %v2564
        %v2567 = vadd.f32 %v2560, %v2565
        %v2568 = vmax.f32 %v2567, 0.0
        %v2569 = vld [vmem:[%s55] sm:$0x1]
        %v2570 = vpack.c.bf16 %v2568, %v2568
        %v2571 = vld [vmem:[#allocation4] sm:$0x1]
        %2573 = vset.pattern.permute.xlu0 0
        %2574 = vperm.xlu0 %2573, %v2571
        %v2575 = vpop.permute.xlu0 %2574
        %v2577 = vlaneseq
        %v2578 = vshrl.u32 %v2577, 7
        %v2579 = vsub.s32 0, %v2578
        %v2580 = vrot.slane %v2575, %v2579
        %v2582 = vsel %vm1424, %v2569, 0
        %v2585 = vsel %vm1424, %v2570, 0
        %2587 = vmatprep.subr.bf16.mxu0 0
        %2588 = vmatpush1.bf16.xpose.msra.mxu0 %v2585
        %2589 = vmatprep.subr.bf16.mxu0 0
        %2590 = vmatpush1.bf16.xpose.msra.mxu0 0
        %2591 = vmatprep.subr.bf16.mxu0 0
        %2592 = vmatpush1.bf16.xpose.msra.mxu0 0
        %2593 = vmatprep.subr.bf16.mxu0 0
        %2594 = vmatpush1.bf16.xpose.msra.mxu0 0
        %2595 = vmatprep.subr.bf16.mxu0 0
        %2596 = vmatpush1.bf16.xpose.msra.mxu0 0
        %2597 = vmatprep.subr.bf16.mxu0 0
        %2598 = vmatpush1.bf16.xpose.msra.mxu0 0
        %2599 = vmatprep.subr.bf16.mxu0 0
        %2600 = vmatpush1.bf16.xpose.msra.mxu0 0
        %2601 = vmatprep.subr.bf16.mxu0 0
        %2602 = vmatpush1.bf16.xpose.msra.mxu0 0
        %2603 = vmatprep.subr.bf16.mxu0 0
        %2604 = vmatpush1.bf16.xpose.msra.mxu0 0
        %2605 = vmatprep.subr.bf16.mxu0 0
        %2606 = vmatpush1.bf16.xpose.msra.mxu0 0
        %2607 = vmatprep.subr.bf16.mxu0 0
        %2608 = vmatpush1.bf16.xpose.msra.mxu0 0
        %2609 = vmatprep.subr.bf16.mxu0 0
        %2610 = vmatpush1.bf16.xpose.msra.mxu0 0
        %2611 = vmatprep.subr.bf16.mxu0 0
        %2612 = vmatpush1.bf16.xpose.msra.mxu0 0
        %2613 = vmatprep.subr.bf16.mxu0 0
        %2614 = vmatpush1.bf16.xpose.msra.mxu0 0
        %2615 = vmatprep.subr.bf16.mxu0 0
        %2616 = vmatpush1.bf16.xpose.msra.mxu0 0
        %2617 = vmatprep.subr.bf16.mxu0 0
        %2618 = vmatpush1.bf16.xpose.msra.mxu0 0
        %2619 = vmatprep.mubr.bf16.mxu0 0
        %2620 = vmatmul.mubr.bf16.gmra.mrb[0].mxu0 %v2582
        %v2621 = vpop.f32.mrb[0].mxu0
        %v2622 = vadd.f32 %v2580, %v2621
        %v2623 = vpop.f32.mrb[0].mxu0
        %v2624 = vpop.f32.mrb[0].mxu0
        %v2625 = vpop.f32.mrb[0].mxu0
        %2626 = vdwg.mxu0
        %v2627 = vmax.f32 %v2622, 0.0
        %vm2628 = vcmask 57344
        %2629 = vst.msk [vmem:[%s1367] sm:$0x1] %vm2628, %v2627
        %v2630 = vlaneseq
        %v2631 = vshrl.u32 %v2630, 7
        %v2632 = vadd.s32 %v2631, 8
        %v2633 = vld [vmem:[%s1378] sm:$0x1]
        %v2634 = vlaneseq
        %v2635 = vshrl.u32 %v2634, 7
        %v2636 = vsub.s32 0, %v2635
        %v2637 = vrot.slane %v2633, %v2636
        %vm2638 = vcmp.ge.s32.totalorder %v2631, %v2637
        %vm2639 = vcmp.ge.s32.totalorder %v2632, %v2637
        %v2640 = vld [vmem:[%s1381] sm:$0x1]
        %v2641 = vlaneseq
        %v2642 = vshrl.u32 %v2641, 7
        %v2643 = vsub.s32 0, %v2642
        %v2644 = vrot.slane %v2640, %v2643
        %vm2645 = vcmp.lt.s32.totalorder %v2631, %v2644
        %vm2646 = vcmp.lt.s32.totalorder %v2632, %v2644
        %vm2647 = vmand %vm2638, %vm2645
        %vm2648 = vmand %vm2639, %vm2646
        %v2649 = vsel %vm2647, 1, 0
        %v2650 = vsel %vm2648, 1, 0
        %v2651 = vcvt.s32.f32 %v2649
        %v2652 = vcvt.s32.f32 %v2650
        %v2653 = vld [vmem:[%s1386] sm:$0xff]
        %v2654 = vld [vmem:[%s1386 + $0x8] sm:$0xff]
        %v2656 = vsel %vm1524, %v2651, 0
        %v2659 = vsel %vm1524, %v2652, 0
        %2661 = vmatprep.subr.mxu0 0.0
        %2662 = vmatpush1.msra.mxu0 %v2268
        %2663 = vmatprep.subr.mxu0 0.0
        %2664 = vmatpush1.msra.mxu0 0.0
        %2665 = vmatprep.subr.mxu0 0.0
        %2666 = vmatpush1.msra.mxu0 0.0
        %2667 = vmatprep.subr.mxu0 0.0
        %2668 = vmatpush1.msra.mxu0 0.0
        %2669 = vmatprep.subr.mxu0 0.0
        %2670 = vmatpush1.msra.mxu0 0.0
        %2671 = vmatprep.subr.mxu0 0.0
        %2672 = vmatpush1.msra.mxu0 0.0
        %2673 = vmatprep.subr.mxu0 0.0
        %2674 = vmatpush1.msra.mxu0 0.0
        %2675 = vmatprep.subr.mxu0 0.0
        %2676 = vmatpush1.msra.mxu0 0.0
        %2677 = vmatprep.subr.mxu0 0.0
        %2678 = vmatpush1.msra.mxu0 0.0
        %2679 = vmatprep.subr.mxu0 0.0
        %2680 = vmatpush1.msra.mxu0 0.0
        %2681 = vmatprep.subr.mxu0 0.0
        %2682 = vmatpush1.msra.mxu0 0.0
        %2683 = vmatprep.subr.mxu0 0.0
        %2684 = vmatpush1.msra.mxu0 0.0
        %2685 = vmatprep.subr.mxu0 0.0
        %2686 = vmatpush1.msra.mxu0 0.0
        %2687 = vmatprep.subr.mxu0 0.0
        %2688 = vmatpush1.msra.mxu0 0.0
        %2689 = vmatprep.subr.mxu0 0.0
        %2690 = vmatpush1.msra.mxu0 0.0
        %2691 = vmatprep.subr.mxu0 0.0
        %2692 = vmatpush1.msra.mxu0 0.0
        %2693 = vmatprep.subr.mxu0 0.0
        %2694 = vmatpush1.msra.mxu0 0.0
        %2695 = vmatprep.subr.mxu0 0.0
        %2696 = vmatpush1.msra.mxu0 0.0
        %2697 = vmatprep.subr.mxu0 0.0
        %2698 = vmatpush1.msra.mxu0 0.0
        %2699 = vmatprep.subr.mxu0 0.0
        %2700 = vmatpush1.msra.mxu0 0.0
        %2701 = vmatprep.subr.mxu0 0.0
        %2702 = vmatpush1.msra.mxu0 0.0
        %2703 = vmatprep.subr.mxu0 0.0
        %2704 = vmatpush1.msra.mxu0 0.0
        %2705 = vmatprep.subr.mxu0 0.0
        %2706 = vmatpush1.msra.mxu0 0.0
        %2707 = vmatprep.subr.mxu0 0.0
        %2708 = vmatpush1.msra.mxu0 0.0
        %2709 = vmatprep.subr.mxu0 0.0
        %2710 = vmatpush1.msra.mxu0 0.0
        %2711 = vmatprep.subr.mxu0 0.0
        %2712 = vmatpush1.msra.mxu0 0.0
        %2713 = vmatprep.subr.mxu0 0.0
        %2714 = vmatpush1.msra.mxu0 0.0
        %2715 = vmatprep.subr.mxu0 0.0
        %2716 = vmatpush1.msra.mxu0 0.0
        %2717 = vmatprep.subr.mxu0 0.0
        %2718 = vmatpush1.msra.mxu0 0.0
        %2719 = vmatprep.subr.mxu0 0.0
        %2720 = vmatpush1.msra.mxu0 0.0
        %2721 = vmatprep.subr.mxu0 0.0
        %2722 = vmatpush1.msra.mxu0 0.0
        %2723 = vmatprep.subr.mxu0 0.0
        %2724 = vmatpush1.msra.mxu0 0.0
        %2725 = vmatprep.mubr.f32.mxu0 0.0
        %2726 = vmatmul.mubr.f32.gmra.mrb[0].mxu0 %v2656
        %v2727 = vpop.f32.mrb[0].mxu0
        %v2728 = vadd.f32 %v2653, %v2727
        %v2729 = vpop.f32.mrb[0].mxu0
        %2730 = vmatprep.mubr.f32.mxu0 0.0
        %2731 = vmatmul.mubr.f32.gmra.mrb[0].mxu0 %v2659
        %v2732 = vpop.f32.mrb[0].mxu0
        %v2733 = vadd.f32 %v2654, %v2732
        %v2734 = vpop.f32.mrb[0].mxu0
        %2735 = vdwg.mxu0
        %v2736 = vld [vmem:[%s1391] sm:$0xff]
        %v2737 = vld [vmem:[%s1391 + $0x8] sm:$0xff]
        %v2738 = vpack.c.bf16 %v2733, %v2728
        %v2739 = vld [vmem:[%s59] sm:$0xf]
        %v2740 = vld [vmem:[%s59 + $0x4] sm:$0xf]
        %v2741 = vld [vmem:[%s59 + $0x8] sm:$0xf]
        %v2742 = vld [vmem:[%s59 + $0xc] sm:$0xf]
        %v2743 = vld [vmem:[%s61] sm:$0x1]
        %v2745 = vlaneseq
        %v2746 = vshrl.u32 %v2745, 7
        %v2747 = vsub.s32 0, %v2746
        %v2748 = vrot.slane %v2743, %v2747
        %v2754 = vunpack.c.l.b16 %v2739
        %v2755 = vunpack.c.l.b16 %v2740
        %v2756 = vunpack.c.l.b16 %v2741
        %v2757 = vunpack.c.l.b16 %v2742
        %v2758 = vpack.c.b16 %v2755, %v2754
        %v2759 = vpack.c.b16 %v2757, %v2756
        %v2763 = vsel %vm1424, %v2738, 0
        %2765 = vmatprep.subr.bf16.mxu0 0
        %2766 = vmatpush1.bf16.msra.mxu0 %v2758
        %2767 = vmatprep.subr.bf16.mxu0 0
        %2768 = vmatpush1.bf16.msra.mxu0 %v2759
        %2769 = vmatprep.subr.bf16.mxu0 0
        %2770 = vmatpush1.bf16.msra.mxu0 0
        %2771 = vmatprep.subr.bf16.mxu0 0
        %2772 = vmatpush1.bf16.msra.mxu0 0
        %2773 = vmatprep.subr.bf16.mxu0 0
        %2774 = vmatpush1.bf16.msra.mxu0 0
        %2775 = vmatprep.subr.bf16.mxu0 0
        %2776 = vmatpush1.bf16.msra.mxu0 0
        %2777 = vmatprep.subr.bf16.mxu0 0
        %2778 = vmatpush1.bf16.msra.mxu0 0
        %2779 = vmatprep.subr.bf16.mxu0 0
        %2780 = vmatpush1.bf16.msra.mxu0 0
        %2781 = vmatprep.subr.bf16.mxu0 0
        %2782 = vmatpush1.bf16.msra.mxu0 0
        %2783 = vmatprep.subr.bf16.mxu0 0
        %2784 = vmatpush1.bf16.msra.mxu0 0
        %2785 = vmatprep.subr.bf16.mxu0 0
        %2786 = vmatpush1.bf16.msra.mxu0 0
        %2787 = vmatprep.subr.bf16.mxu0 0
        %2788 = vmatpush1.bf16.msra.mxu0 0
        %2789 = vmatprep.subr.bf16.mxu0 0
        %2790 = vmatpush1.bf16.msra.mxu0 0
        %2791 = vmatprep.subr.bf16.mxu0 0
        %2792 = vmatpush1.bf16.msra.mxu0 0
        %2793 = vmatprep.subr.bf16.mxu0 0
        %2794 = vmatpush1.bf16.msra.mxu0 0
        %2795 = vmatprep.subr.bf16.mxu0 0
        %2796 = vmatpush1.bf16.msra.mxu0 0
        %2797 = vmatprep.mubr.bf16.mxu0 0
        %2798 = vmatmul.mubr.bf16.gmra.mrb[0].mxu0 %v2763
        %v2799 = vpop.f32.mrb[0].mxu0
        %v2800 = vadd.f32 %v2748, %v2799
        %v2801 = vpop.f32.mrb[0].mxu0
        %v2802 = vpop.f32.mrb[0].mxu0
        %v2803 = vadd.f32 %v2748, %v2802
        %v2804 = vpop.f32.mrb[0].mxu0
        %2805 = vdwg.mxu0
        %v2806 = vld [vmem:[%s63] sm:$0xf]
        %v2807 = vld [vmem:[%s63 + $0x4] sm:$0xf]
        %v2808 = vld [vmem:[%s63 + $0x8] sm:$0xf]
        %v2809 = vld [vmem:[%s63 + $0xc] sm:$0xf]
        %v2810 = vpack.c.bf16 %v2803, %v2800
        %2812 = vrot.lane.b32.xlu0 %v2810, 96
        %v2813 = vpop.permute.xlu0 %2812
        %v2815 = vsel %vm1476, %v2810, 0
        %v2818 = vsel %vm1476, %v2813, 0
        %2820 = vmatprep.subr.bf16.mxu0 0
        %2821 = vmatpush1.bf16.xpose.msra.mxu0 %v2818
        %2822 = vmatprep.subr.bf16.mxu0 0
        %2823 = vmatpush1.bf16.xpose.msra.mxu0 0
        %2824 = vmatprep.subr.bf16.mxu0 0
        %2825 = vmatpush1.bf16.xpose.msra.mxu0 0
        %2826 = vmatprep.subr.bf16.mxu0 0
        %2827 = vmatpush1.bf16.xpose.msra.mxu0 0
        %2828 = vmatprep.subr.bf16.mxu0 0
        %2829 = vmatpush1.bf16.xpose.msra.mxu0 0
        %2830 = vmatprep.subr.bf16.mxu0 0
        %2831 = vmatpush1.bf16.xpose.msra.mxu0 0
        %2832 = vmatprep.subr.bf16.mxu0 0
        %2833 = vmatpush1.bf16.xpose.msra.mxu0 0
        %2834 = vmatprep.subr.bf16.mxu0 0
        %2835 = vmatpush1.bf16.xpose.msra.mxu0 0
        %2836 = vmatprep.subr.bf16.mxu0 0
        %2837 = vmatpush1.bf16.xpose.msra.mxu0 0
        %2838 = vmatprep.subr.bf16.mxu0 0
        %2839 = vmatpush1.bf16.xpose.msra.mxu0 0
        %2840 = vmatprep.subr.bf16.mxu0 0
        %2841 = vmatpush1.bf16.xpose.msra.mxu0 0
        %2842 = vmatprep.subr.bf16.mxu0 0
        %2843 = vmatpush1.bf16.xpose.msra.mxu0 0
        %2844 = vmatprep.subr.bf16.mxu0 0
        %2845 = vmatpush1.bf16.xpose.msra.mxu0 0
        %2846 = vmatprep.subr.bf16.mxu0 0
        %2847 = vmatpush1.bf16.xpose.msra.mxu0 0
        %2848 = vmatprep.subr.bf16.mxu0 0
        %2849 = vmatpush1.bf16.xpose.msra.mxu0 0
        %2850 = vmatprep.subr.bf16.mxu0 0
        %2851 = vmatpush1.bf16.xpose.msra.mxu0 0
        %2852 = vmatprep.mubr.bf16.mxu0 0
        %2853 = vmatmul.mubr.bf16.gmra.mrb[0].mxu0 %v2815
        %v2854 = vpop.f32.mrb[0].mxu0
        %v2855 = vadd.f32 0.0, %v2854
        %v2856 = vpop.f32.mrb[0].mxu0
        %v2857 = vpop.f32.mrb[0].mxu0
        %v2858 = vadd.f32 0.0, %v2857
        %v2859 = vpop.f32.mrb[0].mxu0
        %2860 = vdwg.mxu0
        %v2861 = vmul.f32 %v2855, 0.25
        %v2862 = vmul.f32 %v2858, 0.25
        %v2863 = vsel %vm1476, %v2861, -inf
        %2864 = vmax.xlane.f32.xlu0 %v2863
        %v2865 = vpop.xlane.xlu0 %2864
        %v2866 = vsel %vm1476, %v2862, -inf
        %2867 = vmax.xlane.f32.xlu0 %v2866
        %v2868 = vpop.xlane.xlu0 %2867
        %v2869 = vsub.f32 %v2861, %v2865
        %v2870 = vsub.f32 %v2862, %v2868
        %v2871 = vmul.f32 %v2869, 1.442695
        %v2872 = vpow.pop %v2871
        %v2873 = vmul.f32 %v2870, 1.442695
        %v2874 = vpow.pop %v2873
        %v2875 = vsel %vm1476, %v2872, 0.0
        %2876 = vadd.xlane.f32.xlu0 %v2875
        %v2877 = vpop.xlane.xlu0 %2876
        %v2878 = vsel %vm1476, %v2874, 0.0
        %2879 = vadd.xlane.f32.xlu0 %v2878
        %v2880 = vpop.xlane.xlu0 %2879
        %v2881 = vrcp.pop %v2877
        %v2882 = vrcp.pop %v2880
        %v2883 = vmul.f32 %v2872, %v2881
        %v2884 = vmul.f32 %v2874, %v2882
        %v2885 = vmul.f32 %v2883, 1.442695
        %v2886 = vpow.pop %v2885
        %v2887 = vmul.f32 %v2884, 1.442695
        %v2888 = vpow.pop %v2887
        %v2889 = vsel %vm1476, %v2886, 0.0
        %2890 = vadd.xlane.f32.xlu0 %v2889
        %v2891 = vpop.xlane.xlu0 %2890
        %v2892 = vsel %vm1476, %v2888, 0.0
        %2893 = vadd.xlane.f32.xlu0 %v2892
        %v2894 = vpop.xlane.xlu0 %2893
        %v2895 = vrcp.pop %v2891
        %v2896 = vrcp.pop %v2894
        %v2897 = vmul.f32 %v2886, %v2895
        %v2898 = vmul.f32 %v2888, %v2896
        %v2899 = vpack.c.bf16 %v2898, %v2897
        %2900 = vrot.lane.b32.xlu0 %v2810, 64
        %v2901 = vpop.permute.xlu0 %2900
        %v2904 = vsel %vm1476, %v2899, 0
        %2906 = vmatprep.subr.bf16.mxu0 0
        %2907 = vmatpush1.bf16.msra.mxu0 %v2901
        %2908 = vmatprep.subr.bf16.mxu0 0
        %2909 = vmatpush1.bf16.msra.mxu0 0
        %2910 = vmatprep.subr.bf16.mxu0 0
        %2911 = vmatpush1.bf16.msra.mxu0 0
        %2912 = vmatprep.subr.bf16.mxu0 0
        %2913 = vmatpush1.bf16.msra.mxu0 0
        %2914 = vmatprep.subr.bf16.mxu0 0
        %2915 = vmatpush1.bf16.msra.mxu0 0
        %2916 = vmatprep.subr.bf16.mxu0 0
        %2917 = vmatpush1.bf16.msra.mxu0 0
        %2918 = vmatprep.subr.bf16.mxu0 0
        %2919 = vmatpush1.bf16.msra.mxu0 0
        %2920 = vmatprep.subr.bf16.mxu0 0
        %2921 = vmatpush1.bf16.msra.mxu0 0
        %2922 = vmatprep.subr.bf16.mxu0 0
        %2923 = vmatpush1.bf16.msra.mxu0 0
        %2924 = vmatprep.subr.bf16.mxu0 0
        %2925 = vmatpush1.bf16.msra.mxu0 0
        %2926 = vmatprep.subr.bf16.mxu0 0
        %2927 = vmatpush1.bf16.msra.mxu0 0
        %2928 = vmatprep.subr.bf16.mxu0 0
        %2929 = vmatpush1.bf16.msra.mxu0 0
        %2930 = vmatprep.subr.bf16.mxu0 0
        %2931 = vmatpush1.bf16.msra.mxu0 0
        %2932 = vmatprep.subr.bf16.mxu0 0
        %2933 = vmatpush1.bf16.msra.mxu0 0
        %2934 = vmatprep.subr.bf16.mxu0 0
        %2935 = vmatpush1.bf16.msra.mxu0 0
        %2936 = vmatprep.subr.bf16.mxu0 0
        %2937 = vmatpush1.bf16.msra.mxu0 0
        %2938 = vmatprep.mubr.bf16.mxu0 0
        %2939 = vmatmul.mubr.bf16.gmra.mrb[0].mxu0 %v2904
        %v2940 = vpop.f32.mrb[0].mxu0
        %v2941 = vadd.f32 0.0, %v2940
        %v2942 = vpop.f32.mrb[0].mxu0
        %v2943 = vpop.f32.mrb[0].mxu0
        %v2944 = vadd.f32 0.0, %v2943
        %v2945 = vpop.f32.mrb[0].mxu0
        %2946 = vdwg.mxu0
        %v2947 = vpack.c.bf16 %v2944, %v2941
        %2948 = vrot.lane.b32.xlu0 %v2810, 112
        %v2949 = vpop.permute.xlu0 %2948
        %2950 = vrot.lane.b32.xlu0 %v2810, 80
        %v2951 = vpop.permute.xlu0 %2950
        %v2953 = vsel %vm1476, %v2949, 0
        %v2956 = vsel %vm1476, %v2951, 0
        %2958 = vmatprep.subr.bf16.mxu0 0
        %2959 = vmatpush1.bf16.xpose.msra.mxu0 %v2956
        %2960 = vmatprep.subr.bf16.mxu0 0
        %2961 = vmatpush1.bf16.xpose.msra.mxu0 0
        %2962 = vmatprep.subr.bf16.mxu0 0
        %2963 = vmatpush1.bf16.xpose.msra.mxu0 0
        %2964 = vmatprep.subr.bf16.mxu0 0
        %2965 = vmatpush1.bf16.xpose.msra.mxu0 0
        %2966 = vmatprep.subr.bf16.mxu0 0
        %2967 = vmatpush1.bf16.xpose.msra.mxu0 0
        %2968 = vmatprep.subr.bf16.mxu0 0
        %2969 = vmatpush1.bf16.xpose.msra.mxu0 0
        %2970 = vmatprep.subr.bf16.mxu0 0
        %2971 = vmatpush1.bf16.xpose.msra.mxu0 0
        %2972 = vmatprep.subr.bf16.mxu0 0
        %2973 = vmatpush1.bf16.xpose.msra.mxu0 0
        %2974 = vmatprep.subr.bf16.mxu0 0
        %2975 = vmatpush1.bf16.xpose.msra.mxu0 0
        %2976 = vmatprep.subr.bf16.mxu0 0
        %2977 = vmatpush1.bf16.xpose.msra.mxu0 0
        %2978 = vmatprep.subr.bf16.mxu0 0
        %2979 = vmatpush1.bf16.xpose.msra.mxu0 0
        %2980 = vmatprep.subr.bf16.mxu0 0
        %2981 = vmatpush1.bf16.xpose.msra.mxu0 0
        %2982 = vmatprep.subr.bf16.mxu0 0
        %2983 = vmatpush1.bf16.xpose.msra.mxu0 0
        %2984 = vmatprep.subr.bf16.mxu0 0
        %2985 = vmatpush1.bf16.xpose.msra.mxu0 0
        %2986 = vmatprep.subr.bf16.mxu0 0
        %2987 = vmatpush1.bf16.xpose.msra.mxu0 0
        %2988 = vmatprep.subr.bf16.mxu0 0
        %2989 = vmatpush1.bf16.xpose.msra.mxu0 0
        %2990 = vmatprep.mubr.bf16.mxu0 0
        %2991 = vmatmul.mubr.bf16.gmra.mrb[0].mxu0 %v2953
        %v2992 = vpop.f32.mrb[0].mxu0
        %v2993 = vadd.f32 0.0, %v2992
        %v2994 = vpop.f32.mrb[0].mxu0
        %v2995 = vpop.f32.mrb[0].mxu0
        %v2996 = vadd.f32 0.0, %v2995
        %v2997 = vpop.f32.mrb[0].mxu0
        %2998 = vdwg.mxu0
        %v2999 = vmul.f32 %v2993, 0.25
        %v3000 = vmul.f32 %v2996, 0.25
        %v3001 = vsel %vm1476, %v2999, -inf
        %3002 = vmax.xlane.f32.xlu0 %v3001
        %v3003 = vpop.xlane.xlu0 %3002
        %v3004 = vsel %vm1476, %v3000, -inf
        %3005 = vmax.xlane.f32.xlu0 %v3004
        %v3006 = vpop.xlane.xlu0 %3005
        %v3007 = vsub.f32 %v2999, %v3003
        %v3008 = vsub.f32 %v3000, %v3006
        %v3009 = vmul.f32 %v3007, 1.442695
        %v3010 = vpow.pop %v3009
        %v3011 = vmul.f32 %v3008, 1.442695
        %v3012 = vpow.pop %v3011
        %v3013 = vsel %vm1476, %v3010, 0.0
        %3014 = vadd.xlane.f32.xlu0 %v3013
        %v3015 = vpop.xlane.xlu0 %3014
        %v3016 = vsel %vm1476, %v3012, 0.0
        %3017 = vadd.xlane.f32.xlu0 %v3016
        %v3018 = vpop.xlane.xlu0 %3017
        %v3019 = vrcp.pop %v3015
        %v3020 = vrcp.pop %v3018
        %v3021 = vmul.f32 %v3010, %v3019
        %v3022 = vmul.f32 %v3012, %v3020
        %v3023 = vmul.f32 %v3021, 1.442695
        %v3024 = vpow.pop %v3023
        %v3025 = vmul.f32 %v3022, 1.442695
        %v3026 = vpow.pop %v3025
        %v3027 = vsel %vm1476, %v3024, 0.0
        %3028 = vadd.xlane.f32.xlu0 %v3027
        %v3029 = vpop.xlane.xlu0 %3028
        %v3030 = vsel %vm1476, %v3026, 0.0
        %3031 = vadd.xlane.f32.xlu0 %v3030
        %v3032 = vpop.xlane.xlu0 %3031
        %v3033 = vrcp.pop %v3029
        %v3034 = vrcp.pop %v3032
        %v3035 = vmul.f32 %v3024, %v3033
        %v3036 = vmul.f32 %v3026, %v3034
        %v3037 = vpack.c.bf16 %v3036, %v3035
        %3038 = vrot.lane.b32.xlu0 %v2810, 48
        %v3039 = vpop.permute.xlu0 %3038
        %v3042 = vsel %vm1476, %v3037, 0
        %3044 = vmatprep.subr.bf16.mxu0 0
        %3045 = vmatpush1.bf16.msra.mxu0 %v3039
        %3046 = vmatprep.subr.bf16.mxu0 0
        %3047 = vmatpush1.bf16.msra.mxu0 0
        %3048 = vmatprep.subr.bf16.mxu0 0
        %3049 = vmatpush1.bf16.msra.mxu0 0
        %3050 = vmatprep.subr.bf16.mxu0 0
        %3051 = vmatpush1.bf16.msra.mxu0 0
        %3052 = vmatprep.subr.bf16.mxu0 0
        %3053 = vmatpush1.bf16.msra.mxu0 0
        %3054 = vmatprep.subr.bf16.mxu0 0
        %3055 = vmatpush1.bf16.msra.mxu0 0
        %3056 = vmatprep.subr.bf16.mxu0 0
        %3057 = vmatpush1.bf16.msra.mxu0 0
        %3058 = vmatprep.subr.bf16.mxu0 0
        %3059 = vmatpush1.bf16.msra.mxu0 0
        %3060 = vmatprep.subr.bf16.mxu0 0
        %3061 = vmatpush1.bf16.msra.mxu0 0
        %3062 = vmatprep.subr.bf16.mxu0 0
        %3063 = vmatpush1.bf16.msra.mxu0 0
        %3064 = vmatprep.subr.bf16.mxu0 0
        %3065 = vmatpush1.bf16.msra.mxu0 0
        %3066 = vmatprep.subr.bf16.mxu0 0
        %3067 = vmatpush1.bf16.msra.mxu0 0
        %3068 = vmatprep.subr.bf16.mxu0 0
        %3069 = vmatpush1.bf16.msra.mxu0 0
        %3070 = vmatprep.subr.bf16.mxu0 0
        %3071 = vmatpush1.bf16.msra.mxu0 0
        %3072 = vmatprep.subr.bf16.mxu0 0
        %3073 = vmatpush1.bf16.msra.mxu0 0
        %3074 = vmatprep.subr.bf16.mxu0 0
        %3075 = vmatpush1.bf16.msra.mxu0 0
        %3076 = vmatprep.mubr.bf16.mxu0 0
        %3077 = vmatmul.mubr.bf16.gmra.mrb[0].mxu0 %v3042
        %v3078 = vpop.f32.mrb[0].mxu0
        %v3079 = vadd.f32 0.0, %v3078
        %v3080 = vpop.f32.mrb[0].mxu0
        %v3081 = vpop.f32.mrb[0].mxu0
        %v3082 = vadd.f32 0.0, %v3081
        %v3083 = vpop.f32.mrb[0].mxu0
        %3084 = vdwg.mxu0
        %v3085 = vpack.c.bf16 %v3082, %v3079
        %v3088 = vunpack.c.l.b16 %v2808
        %v3089 = vunpack.c.l.b16 %v2809
        %v3090 = vpack.c.b16 %v3089, %v3088
        %v3093 = vsel %vm1476, %v3085, 0
        %3095 = vmatprep.subr.bf16.mxu0 0
        %3096 = vmatpush1.bf16.msra.mxu0 %v3090
        %3097 = vmatprep.subr.bf16.mxu0 0
        %3098 = vmatpush1.bf16.msra.mxu0 0
        %3099 = vmatprep.subr.bf16.mxu0 0
        %3100 = vmatpush1.bf16.msra.mxu0 0
        %3101 = vmatprep.subr.bf16.mxu0 0
        %3102 = vmatpush1.bf16.msra.mxu0 0
        %3103 = vmatprep.subr.bf16.mxu0 0
        %3104 = vmatpush1.bf16.msra.mxu0 0
        %3105 = vmatprep.subr.bf16.mxu0 0
        %3106 = vmatpush1.bf16.msra.mxu0 0
        %3107 = vmatprep.subr.bf16.mxu0 0
        %3108 = vmatpush1.bf16.msra.mxu0 0
        %3109 = vmatprep.subr.bf16.mxu0 0
        %3110 = vmatpush1.bf16.msra.mxu0 0
        %3111 = vmatprep.subr.bf16.mxu0 0
        %3112 = vmatpush1.bf16.msra.mxu0 0
        %3113 = vmatprep.subr.bf16.mxu0 0
        %3114 = vmatpush1.bf16.msra.mxu0 0
        %3115 = vmatprep.subr.bf16.mxu0 0
        %3116 = vmatpush1.bf16.msra.mxu0 0
        %3117 = vmatprep.subr.bf16.mxu0 0
        %3118 = vmatpush1.bf16.msra.mxu0 0
        %3119 = vmatprep.subr.bf16.mxu0 0
        %3120 = vmatpush1.bf16.msra.mxu0 0
        %3121 = vmatprep.subr.bf16.mxu0 0
        %3122 = vmatpush1.bf16.msra.mxu0 0
        %3123 = vmatprep.subr.bf16.mxu0 0
        %3124 = vmatpush1.bf16.msra.mxu0 0
        %3125 = vmatprep.subr.bf16.mxu0 0
        %3126 = vmatpush1.bf16.msra.mxu0 0
        %3127 = vmatprep.mubr.bf16.mxu0 0
        %3128 = vmatmul.mubr.bf16.gmra.mrb[0].mxu0 %v3093
        %v3129 = vpop.f32.mrb[0].mxu0
        %v3130 = vadd.f32 0.0, %v3129
        %v3131 = vpop.f32.mrb[0].mxu0
        %v3132 = vpop.f32.mrb[0].mxu0
        %v3133 = vadd.f32 0.0, %v3132
        %v3134 = vpop.f32.mrb[0].mxu0
        %3135 = vdwg.mxu0
        %v3138 = vunpack.c.l.b16 %v2806
        %v3139 = vunpack.c.l.b16 %v2807
        %v3140 = vpack.c.b16 %v3139, %v3138
        %v3143 = vsel %vm1476, %v2947, 0
        %3145 = vmatprep.subr.bf16.mxu0 0
        %3146 = vmatpush1.bf16.msra.mxu0 %v3140
        %3147 = vmatprep.subr.bf16.mxu0 0
        %3148 = vmatpush1.bf16.msra.mxu0 0
        %3149 = vmatprep.subr.bf16.mxu0 0
        %3150 = vmatpush1.bf16.msra.mxu0 0
        %3151 = vmatprep.subr.bf16.mxu0 0
        %3152 = vmatpush1.bf16.msra.mxu0 0
        %3153 = vmatprep.subr.bf16.mxu0 0
        %3154 = vmatpush1.bf16.msra.mxu0 0
        %3155 = vmatprep.subr.bf16.mxu0 0
        %3156 = vmatpush1.bf16.msra.mxu0 0
        %3157 = vmatprep.subr.bf16.mxu0 0
        %3158 = vmatpush1.bf16.msra.mxu0 0
        %3159 = vmatprep.subr.bf16.mxu0 0
        %3160 = vmatpush1.bf16.msra.mxu0 0
        %3161 = vmatprep.subr.bf16.mxu0 0
        %3162 = vmatpush1.bf16.msra.mxu0 0
        %3163 = vmatprep.subr.bf16.mxu0 0
        %3164 = vmatpush1.bf16.msra.mxu0 0
        %3165 = vmatprep.subr.bf16.mxu0 0
        %3166 = vmatpush1.bf16.msra.mxu0 0
        %3167 = vmatprep.subr.bf16.mxu0 0
        %3168 = vmatpush1.bf16.msra.mxu0 0
        %3169 = vmatprep.subr.bf16.mxu0 0
        %3170 = vmatpush1.bf16.msra.mxu0 0
        %3171 = vmatprep.subr.bf16.mxu0 0
        %3172 = vmatpush1.bf16.msra.mxu0 0
        %3173 = vmatprep.subr.bf16.mxu0 0
        %3174 = vmatpush1.bf16.msra.mxu0 0
        %3175 = vmatprep.subr.bf16.mxu0 0
        %3176 = vmatpush1.bf16.msra.mxu0 0
        %3177 = vmatprep.mubr.bf16.mxu0 0
        %3178 = vmatmul.mubr.bf16.gmra.mrb[0].mxu0 %v3143
        %v3179 = vpop.f32.mrb[0].mxu0
        %v3180 = vadd.f32 %v3130, %v3179
        %v3181 = vpop.f32.mrb[0].mxu0
        %v3182 = vpop.f32.mrb[0].mxu0
        %v3183 = vadd.f32 %v3133, %v3182
        %v3184 = vpop.f32.mrb[0].mxu0
        %3185 = vdwg.mxu0
        %v3186 = vld [vmem:[%s65] sm:$0x1]
        %v3188 = vlaneseq
        %v3189 = vshrl.u32 %v3188, 7
        %v3190 = vsub.s32 0, %v3189
        %v3191 = vrot.slane %v3186, %v3190
        %v3193 = vadd.f32 %v3180, %v3191
        %v3194 = vadd.f32 %v3183, %v3191
        %v3195 = vadd.f32 %v3193, %v2728
        %v3196 = vadd.f32 %v3194, %v2733
        %v3197 = vld [vmem:[%s67] sm:$0x1]
        %v3198 = vld [vmem:[%s69] sm:$0x1]
        %v3199 = vsel %vm1424, %v3195, 0.0
        %3200 = vadd.xlane.f32.xlu0 %v3199
        %v3201 = vpop.xlane.xlu0 %3200
        %v3202 = vsel %vm1424, %v3196, 0.0
        %3203 = vadd.xlane.f32.xlu0 %v3202
        %v3204 = vpop.xlane.xlu0 %3203
        %v3205 = vmul.f32 %v3201, %v1825
        %v3206 = vmul.f32 %v3204, %v1825
        %v3207 = vsub.f32 %v3195, %v3205
        %v3208 = vsub.f32 %v3196, %v3206
        %v3209 = vmul.f32 %v3207, %v3207
        %v3210 = vmul.f32 %v3208, %v3208
        %v3211 = vsel %vm1424, %v3209, 0.0
        %3212 = vadd.xlane.f32.xlu0 %v3211
        %v3213 = vpop.xlane.xlu0 %3212
        %v3214 = vsel %vm1424, %v3210, 0.0
        %3215 = vadd.xlane.f32.xlu0 %v3214
        %v3216 = vpop.xlane.xlu0 %3215
        %v3217 = vmul.f32 %v3213, %v1825
        %v3218 = vmul.f32 %v3216, %v1825
        %v3219 = vadd.f32 %v3217, 1e-05
        %v3220 = vadd.f32 %v3218, 1e-05
        %v3221 = vrsqrt.pop %v3219
        %v3222 = vrsqrt.pop %v3220
        %v3223 = vmul.f32 %v3207, %v3221
        %v3224 = vmul.f32 %v3208, %v3222
        %v3226 = vlaneseq
        %v3227 = vshrl.u32 %v3226, 7
        %v3228 = vsub.s32 0, %v3227
        %v3229 = vrot.slane %v3197, %v3228
        %v3231 = vmul.f32 %v3223, %v3229
        %v3232 = vmul.f32 %v3224, %v3229
        %v3234 = vlaneseq
        %v3235 = vshrl.u32 %v3234, 7
        %v3236 = vsub.s32 0, %v3235
        %v3237 = vrot.slane %v3198, %v3236
        %v3239 = vadd.f32 %v3231, %v3237
        %v3240 = vadd.f32 %v3232, %v3237
        %3242 = vset.pattern.permute.xlu0 0
        %3243 = vperm.xlu0 %3242, %v2736
        %v3244 = vpop.permute.xlu0 %3243
        %3247 = vset.pattern.permute.xlu0 0
        %3248 = vperm.xlu0 %3247, %v2737
        %v3249 = vpop.permute.xlu0 %3248
        %v3251 = vmul.f32 %v3239, %v3244
        %v3252 = vmul.f32 %v3240, %v3249
        %v3255 = vrot.slane %v3251, 4
        %v3256 = vrot.slane %v3252, 4
        %v3257 = vsel %vm1549, %v3255, %v3256
        %v3261 = vsel %vm1549, 0.0, %v3255
        %v3262 = vsel %vm1549, %v3256, 0.0
        %v3265 = vrot.slane %v3261, 1
        %v3266 = vrot.slane %v3257, 1
        %v3267 = vsel %vm1863, %v3265, %v3266
        %v3268 = vrot.slane %v3262, 1
        %v3269 = vsel %vm1863, %v3266, %v3268
        %3270 = vrot.lane.b32.xlu0 %v3267, 32
        %v3271 = vpop.permute.xlu0 %3270
        %3272 = vrot.lane.b32.xlu0 %v3269, 32
        %v3273 = vpop.permute.xlu0 %3272
        %v3276 = vrot.slane %v3261, 2
        %v3277 = vrot.slane %v3257, 2
        %v3278 = vsel %vm1870, %v3276, %v3277
        %v3279 = vrot.slane %v3262, 2
        %v3280 = vsel %vm1870, %v3277, %v3279
        %3281 = vrot.lane.b32.xlu0 %v3278, 64
        %v3282 = vpop.permute.xlu0 %3281
        %3283 = vrot.lane.b32.xlu0 %v3280, 64
        %v3284 = vpop.permute.xlu0 %3283
        %v3287 = vrot.slane %v3261, 3
        %v3288 = vrot.slane %v3257, 3
        %v3289 = vsel %vm1877, %v3287, %v3288
        %v3290 = vrot.slane %v3262, 3
        %v3291 = vsel %vm1877, %v3288, %v3290
        %3292 = vrot.lane.b32.xlu0 %v3289, 96
        %v3293 = vpop.permute.xlu0 %3292
        %3294 = vrot.lane.b32.xlu0 %v3291, 96
        %v3295 = vpop.permute.xlu0 %3294
        %v3298 = vrot.slane %v3261, 4
        %v3299 = vrot.slane %v3257, 4
        %v3300 = vsel %vm1549, %v3298, %v3299
        %v3301 = vrot.slane %v3262, 4
        %v3302 = vsel %vm1549, %v3299, %v3301
        %v3305 = vrot.slane %v3261, 5
        %v3306 = vrot.slane %v3257, 5
        %v3307 = vsel %vm1888, %v3305, %v3306
        %v3308 = vrot.slane %v3262, 5
        %v3309 = vsel %vm1888, %v3306, %v3308
        %3310 = vrot.lane.b32.xlu0 %v3307, 32
        %v3311 = vpop.permute.xlu0 %3310
        %3312 = vrot.lane.b32.xlu0 %v3309, 32
        %v3313 = vpop.permute.xlu0 %3312
        %v3316 = vrot.slane %v3261, 6
        %v3317 = vrot.slane %v3257, 6
        %v3318 = vsel %vm1895, %v3316, %v3317
        %v3319 = vrot.slane %v3262, 6
        %v3320 = vsel %vm1895, %v3317, %v3319
        %3321 = vrot.lane.b32.xlu0 %v3318, 64
        %v3322 = vpop.permute.xlu0 %3321
        %3323 = vrot.lane.b32.xlu0 %v3320, 64
        %v3324 = vpop.permute.xlu0 %3323
        %v3327 = vrot.slane %v3261, 7
        %v3328 = vrot.slane %v3257, 7
        %v3329 = vsel %vm1902, %v3327, %v3328
        %v3330 = vrot.slane %v3262, 7
        %v3331 = vsel %vm1902, %v3328, %v3330
        %3332 = vrot.lane.b32.xlu0 %v3329, 96
        %v3333 = vpop.permute.xlu0 %3332
        %3334 = vrot.lane.b32.xlu0 %v3331, 96
        %v3335 = vpop.permute.xlu0 %3334
        %v3338 = vsel %vm1424, %v3261, %v3271
        %v3339 = vsel %vm1424, %v3257, %v3273
        %v3340 = vsel %vm1910, %v3338, %v3282
        %v3341 = vsel %vm1910, %v3339, %v3284
        %v3342 = vsel %vm1912, %v3340, %v3293
        %v3343 = vsel %vm1912, %v3341, %v3295
        %v3344 = vsel %vm1424, %v3300, %v3311
        %v3345 = vsel %vm1424, %v3302, %v3313
        %v3346 = vsel %vm1910, %v3344, %v3322
        %v3347 = vsel %vm1910, %v3345, %v3324
        %v3348 = vsel %vm1912, %v3346, %v3333
        %v3349 = vsel %vm1912, %v3347, %v3335
        %v3350 = vpack.c.bf16 %v3343, %v3342
        %v3351 = vpack.c.bf16 %v3349, %v3348
        %v3352 = vpack.c.bf16 %v3262, %v3257
        %v3353 = vld [vmem:[%s71] sm:$0xf]
        %v3354 = vld [vmem:[%s71 + $0x4] sm:$0xf]
        %v3355 = vld [vmem:[%s71 + $0x8] sm:$0xf]
        %v3356 = vld [vmem:[%s71 + $0xc] sm:$0xf]
        %v3357 = vld [vmem:[%s71 + $0x10] sm:$0xf]
        %v3358 = vld [vmem:[%s71 + $0x14] sm:$0xf]
        %v3359 = vld [vmem:[%s71 + $0x18] sm:$0xf]
        %v3360 = vld [vmem:[%s71 + $0x1c] sm:$0xf]
        %v3361 = vld [vmem:[%s71 + $0x20] sm:$0xf]
        %v3362 = vld [vmem:[%s71 + $0x24] sm:$0xf]
        %v3363 = vld [vmem:[%s71 + $0x28] sm:$0xf]
        %v3364 = vld [vmem:[%s71 + $0x2c] sm:$0xf]
        %v3365 = vld [vmem:[%s71 + $0x30] sm:$0xf]
        %v3366 = vld [vmem:[%s71 + $0x34] sm:$0xf]
        %v3367 = vld [vmem:[%s71 + $0x38] sm:$0xf]
        %v3368 = vld [vmem:[%s71 + $0x3c] sm:$0xf]
        %v3369 = vld [vmem:[%s71 + $0x40] sm:$0xf]
        %v3370 = vld [vmem:[%s71 + $0x44] sm:$0xf]
        %v3371 = vld [vmem:[%s71 + $0x48] sm:$0xf]
        %v3372 = vld [vmem:[%s71 + $0x4c] sm:$0xf]
        %v3373 = vld [vmem:[%s71 + $0x50] sm:$0xf]
        %v3374 = vld [vmem:[%s71 + $0x54] sm:$0xf]
        %v3375 = vld [vmem:[%s71 + $0x58] sm:$0xf]
        %v3376 = vld [vmem:[%s71 + $0x5c] sm:$0xf]
        %v3377 = vld [vmem:[%s71 + $0x60] sm:$0xf]
        %v3378 = vld [vmem:[%s71 + $0x64] sm:$0xf]
        %v3379 = vld [vmem:[%s71 + $0x68] sm:$0xf]
        %v3380 = vld [vmem:[%s71 + $0x6c] sm:$0xf]
        %v3381 = vld [vmem:[%s71 + $0x70] sm:$0xf]
        %v3382 = vld [vmem:[%s71 + $0x74] sm:$0xf]
        %v3383 = vld [vmem:[%s71 + $0x78] sm:$0xf]
        %v3384 = vld [vmem:[%s71 + $0x7c] sm:$0xf]
        %v3385 = vld [vmem:[%s71 + $0x80] sm:$0xf]
        %v3386 = vld [vmem:[%s71 + $0x84] sm:$0xf]
        %v3387 = vld [vmem:[%s71 + $0x88] sm:$0xf]
        %v3388 = vld [vmem:[%s71 + $0x8c] sm:$0xf]
        %v3389 = vld [vmem:[%s73] sm:$0x1]
        %v3391 = vlaneseq
        %v3392 = vshrl.u32 %v3391, 7
        %v3393 = vsub.s32 0, %v3392
        %v3394 = vrot.slane %v3389, %v3393
        %v3432 = vunpack.c.l.b16 %v3353
        %v3433 = vunpack.c.l.b16 %v3354
        %v3434 = vunpack.c.l.b16 %v3355
        %v3435 = vunpack.c.l.b16 %v3356
        %v3436 = vunpack.c.l.b16 %v3357
        %v3437 = vunpack.c.l.b16 %v3358
        %v3438 = vunpack.c.l.b16 %v3359
        %v3439 = vunpack.c.l.b16 %v3360
        %v3440 = vunpack.c.l.b16 %v3361
        %v3441 = vunpack.c.l.b16 %v3362
        %v3442 = vunpack.c.l.b16 %v3363
        %v3443 = vunpack.c.l.b16 %v3364
        %v3444 = vunpack.c.l.b16 %v3365
        %v3445 = vunpack.c.l.b16 %v3366
        %v3446 = vunpack.c.l.b16 %v3367
        %v3447 = vunpack.c.l.b16 %v3368
        %v3448 = vunpack.c.l.b16 %v3369
        %v3449 = vunpack.c.l.b16 %v3370
        %v3450 = vunpack.c.l.b16 %v3371
        %v3451 = vunpack.c.l.b16 %v3372
        %v3452 = vunpack.c.l.b16 %v3373
        %v3453 = vunpack.c.l.b16 %v3374
        %v3454 = vunpack.c.l.b16 %v3375
        %v3455 = vunpack.c.l.b16 %v3376
        %v3456 = vunpack.c.l.b16 %v3377
        %v3457 = vunpack.c.l.b16 %v3378
        %v3458 = vunpack.c.l.b16 %v3379
        %v3459 = vunpack.c.l.b16 %v3380
        %v3460 = vunpack.c.l.b16 %v3381
        %v3461 = vunpack.c.l.b16 %v3382
        %v3462 = vunpack.c.l.b16 %v3383
        %v3463 = vunpack.c.l.b16 %v3384
        %v3464 = vunpack.c.l.b16 %v3385
        %v3465 = vunpack.c.l.b16 %v3386
        %v3466 = vunpack.c.l.b16 %v3387
        %v3467 = vunpack.c.l.b16 %v3388
        %v3468 = vpack.c.b16 %v3433, %v3432
        %v3469 = vpack.c.b16 %v3435, %v3434
        %v3470 = vpack.c.b16 %v3437, %v3436
        %v3471 = vpack.c.b16 %v3439, %v3438
        %v3472 = vpack.c.b16 %v3441, %v3440
        %v3473 = vpack.c.b16 %v3443, %v3442
        %v3474 = vpack.c.b16 %v3445, %v3444
        %v3475 = vpack.c.b16 %v3447, %v3446
        %v3476 = vpack.c.b16 %v3449, %v3448
        %v3477 = vpack.c.b16 %v3451, %v3450
        %v3478 = vpack.c.b16 %v3453, %v3452
        %v3479 = vpack.c.b16 %v3455, %v3454
        %v3480 = vpack.c.b16 %v3457, %v3456
        %v3481 = vpack.c.b16 %v3459, %v3458
        %v3482 = vpack.c.b16 %v3461, %v3460
        %v3483 = vpack.c.b16 %v3463, %v3462
        %v3484 = vpack.c.b16 %v3465, %v3464
        %v3485 = vpack.c.b16 %v3467, %v3466
        %v3505 = vsel %vm1424, %v3352, 0
        %3507 = vmatprep.subr.bf16.mxu0 0
        %3508 = vmatpush1.bf16.msra.mxu0 %v3468
        %3509 = vmatprep.subr.bf16.mxu0 0
        %3510 = vmatpush1.bf16.msra.mxu0 %v3469
        %3511 = vmatprep.subr.bf16.mxu0 0
        %3512 = vmatpush1.bf16.msra.mxu0 %v3470
        %3513 = vmatprep.subr.bf16.mxu0 0
        %3514 = vmatpush1.bf16.msra.mxu0 %v3471
        %3515 = vmatprep.subr.bf16.mxu0 0
        %3516 = vmatpush1.bf16.msra.mxu0 %v3472
        %3517 = vmatprep.subr.bf16.mxu0 0
        %3518 = vmatpush1.bf16.msra.mxu0 %v3473
        %3519 = vmatprep.subr.bf16.mxu0 0
        %3520 = vmatpush1.bf16.msra.mxu0 %v3474
        %3521 = vmatprep.subr.bf16.mxu0 0
        %3522 = vmatpush1.bf16.msra.mxu0 %v3475
        %3523 = vmatprep.subr.bf16.mxu0 0
        %3524 = vmatpush1.bf16.msra.mxu0 %v3476
        %3525 = vmatprep.subr.bf16.mxu0 0
        %3526 = vmatpush1.bf16.msra.mxu0 %v3477
        %3527 = vmatprep.subr.bf16.mxu0 0
        %3528 = vmatpush1.bf16.msra.mxu0 %v3478
        %3529 = vmatprep.subr.bf16.mxu0 0
        %3530 = vmatpush1.bf16.msra.mxu0 %v3479
        %3531 = vmatprep.subr.bf16.mxu0 0
        %3532 = vmatpush1.bf16.msra.mxu0 %v3480
        %3533 = vmatprep.subr.bf16.mxu0 0
        %3534 = vmatpush1.bf16.msra.mxu0 %v3481
        %3535 = vmatprep.subr.bf16.mxu0 0
        %3536 = vmatpush1.bf16.msra.mxu0 %v3482
        %3537 = vmatprep.subr.bf16.mxu0 0
        %3538 = vmatpush1.bf16.msra.mxu0 %v3483
        %3539 = vmatprep.mubr.bf16.mxu0 %v3351
        %3540 = vmatmul.mubr.bf16.gmra.mrb[0].mxu0 %v3350
        %v3541 = vpop.f32.mrb[0].mxu0
        %v3542 = vadd.f32 %v3394, %v3541
        %v3543 = vpop.f32.mrb[0].mxu0
        %v3544 = vpop.f32.mrb[0].mxu0
        %v3545 = vadd.f32 %v3394, %v3544
        %v3546 = vpop.f32.mrb[0].mxu0
        %3547 = vdwg.mxu0
        %3548 = vmatprep.subr.bf16.mxu0 0
        %3549 = vmatpush1.bf16.msra.mxu0 %v3484
        %3550 = vmatprep.subr.bf16.mxu0 0
        %3551 = vmatpush1.bf16.msra.mxu0 %v3485
        %3552 = vmatprep.subr.bf16.mxu0 0
        %3553 = vmatpush1.bf16.msra.mxu0 0
        %3554 = vmatprep.subr.bf16.mxu0 0
        %3555 = vmatpush1.bf16.msra.mxu0 0
        %3556 = vmatprep.subr.bf16.mxu0 0
        %3557 = vmatpush1.bf16.msra.mxu0 0
        %3558 = vmatprep.subr.bf16.mxu0 0
        %3559 = vmatpush1.bf16.msra.mxu0 0
        %3560 = vmatprep.subr.bf16.mxu0 0
        %3561 = vmatpush1.bf16.msra.mxu0 0
        %3562 = vmatprep.subr.bf16.mxu0 0
        %3563 = vmatpush1.bf16.msra.mxu0 0
        %3564 = vmatprep.subr.bf16.mxu0 0
        %3565 = vmatpush1.bf16.msra.mxu0 0
        %3566 = vmatprep.subr.bf16.mxu0 0
        %3567 = vmatpush1.bf16.msra.mxu0 0
        %3568 = vmatprep.subr.bf16.mxu0 0
        %3569 = vmatpush1.bf16.msra.mxu0 0
        %3570 = vmatprep.subr.bf16.mxu0 0
        %3571 = vmatpush1.bf16.msra.mxu0 0
        %3572 = vmatprep.subr.bf16.mxu0 0
        %3573 = vmatpush1.bf16.msra.mxu0 0
        %3574 = vmatprep.subr.bf16.mxu0 0
        %3575 = vmatpush1.bf16.msra.mxu0 0
        %3576 = vmatprep.subr.bf16.mxu0 0
        %3577 = vmatpush1.bf16.msra.mxu0 0
        %3578 = vmatprep.subr.bf16.mxu0 0
        %3579 = vmatpush1.bf16.msra.mxu0 0
        %3580 = vmatprep.mubr.bf16.mxu0 0
        %3581 = vmatmul.mubr.bf16.gmra.mrb[0].mxu0 %v3505
        %v3582 = vpop.f32.mrb[0].mxu0
        %v3583 = vadd.f32 %v3542, %v3582
        %v3584 = vpop.f32.mrb[0].mxu0
        %v3585 = vpop.f32.mrb[0].mxu0
        %v3586 = vadd.f32 %v3545, %v3585
        %v3587 = vpop.f32.mrb[0].mxu0
        %3588 = vdwg.mxu0
        %v3589 = vmax.f32 %v3583, 0.0
        %v3590 = vmax.f32 %v3586, 0.0
        %v3591 = vpack.c.bf16 %v3590, %v3589
        %v3592 = vld [vmem:[%s75] sm:$0xf]
        %v3593 = vld [vmem:[%s75 + $0x4] sm:$0xf]
        %v3594 = vld [vmem:[%s75 + $0x8] sm:$0xf]
        %v3595 = vld [vmem:[%s75 + $0xc] sm:$0xf]
        %v3596 = vld [vmem:[%s75 + $0x10] sm:$0xf]
        %v3597 = vld [vmem:[%s75 + $0x14] sm:$0xf]
        %v3598 = vld [vmem:[%s75 + $0x18] sm:$0xf]
        %v3599 = vld [vmem:[%s75 + $0x1c] sm:$0xf]
        %v3600 = vld [vmem:[%s77] sm:$0x1]
        %v3602 = vlaneseq
        %v3603 = vshrl.u32 %v3602, 7
        %v3604 = vsub.s32 0, %v3603
        %v3605 = vrot.slane %v3600, %v3604
        %v3615 = vunpack.c.l.b16 %v3592
        %v3616 = vunpack.c.l.b16 %v3593
        %v3617 = vunpack.c.l.b16 %v3594
        %v3618 = vunpack.c.l.b16 %v3595
        %v3619 = vunpack.c.l.b16 %v3596
        %v3620 = vunpack.c.l.b16 %v3597
        %v3621 = vunpack.c.l.b16 %v3598
        %v3622 = vunpack.c.l.b16 %v3599
        %v3623 = vpack.c.b16 %v3616, %v3615
        %v3624 = vpack.c.b16 %v3618, %v3617
        %v3625 = vpack.c.b16 %v3620, %v3619
        %v3626 = vpack.c.b16 %v3622, %v3621
        %v3632 = vsel %vm1910, %v3591, 0
        %3634 = vmatprep.subr.bf16.mxu0 0
        %3635 = vmatpush1.bf16.msra.mxu0 %v3623
        %3636 = vmatprep.subr.bf16.mxu0 0
        %3637 = vmatpush1.bf16.msra.mxu0 %v3624
        %3638 = vmatprep.subr.bf16.mxu0 0
        %3639 = vmatpush1.bf16.msra.mxu0 %v3625
        %3640 = vmatprep.subr.bf16.mxu0 0
        %3641 = vmatpush1.bf16.msra.mxu0 %v3626
        %3642 = vmatprep.subr.bf16.mxu0 0
        %3643 = vmatpush1.bf16.msra.mxu0 0
        %3644 = vmatprep.subr.bf16.mxu0 0
        %3645 = vmatpush1.bf16.msra.mxu0 0
        %3646 = vmatprep.subr.bf16.mxu0 0
        %3647 = vmatpush1.bf16.msra.mxu0 0
        %3648 = vmatprep.subr.bf16.mxu0 0
        %3649 = vmatpush1.bf16.msra.mxu0 0
        %3650 = vmatprep.subr.bf16.mxu0 0
        %3651 = vmatpush1.bf16.msra.mxu0 0
        %3652 = vmatprep.subr.bf16.mxu0 0
        %3653 = vmatpush1.bf16.msra.mxu0 0
        %3654 = vmatprep.subr.bf16.mxu0 0
        %3655 = vmatpush1.bf16.msra.mxu0 0
        %3656 = vmatprep.subr.bf16.mxu0 0
        %3657 = vmatpush1.bf16.msra.mxu0 0
        %3658 = vmatprep.subr.bf16.mxu0 0
        %3659 = vmatpush1.bf16.msra.mxu0 0
        %3660 = vmatprep.subr.bf16.mxu0 0
        %3661 = vmatpush1.bf16.msra.mxu0 0
        %3662 = vmatprep.subr.bf16.mxu0 0
        %3663 = vmatpush1.bf16.msra.mxu0 0
        %3664 = vmatprep.subr.bf16.mxu0 0
        %3665 = vmatpush1.bf16.msra.mxu0 0
        %3666 = vmatprep.mubr.bf16.mxu0 0
        %3667 = vmatmul.mubr.bf16.gmra.mrb[0].mxu0 %v3632
        %v3668 = vpop.f32.mrb[0].mxu0
        %v3669 = vadd.f32 %v3605, %v3668
        %v3670 = vpop.f32.mrb[0].mxu0
        %v3671 = vpop.f32.mrb[0].mxu0
        %v3672 = vadd.f32 %v3605, %v3671
        %v3673 = vpop.f32.mrb[0].mxu0
        %3674 = vdwg.mxu0
        %v3675 = vadd.f32 %v3669, %v3251
        %v3676 = vadd.f32 %v3672, %v3252
        %v3677 = vld [vmem:[%s79] sm:$0x1]
        %v3678 = vld [vmem:[%s81] sm:$0x1]
        %v3679 = vsel %vm1424, %v3675, 0.0
        %3680 = vadd.xlane.f32.xlu0 %v3679
        %v3681 = vpop.xlane.xlu0 %3680
        %v3682 = vsel %vm1424, %v3676, 0.0
        %3683 = vadd.xlane.f32.xlu0 %v3682
        %v3684 = vpop.xlane.xlu0 %3683
        %v3685 = vmul.f32 %v3681, %v1825
        %v3686 = vmul.f32 %v3684, %v1825
        %v3687 = vsub.f32 %v3675, %v3685
        %v3688 = vsub.f32 %v3676, %v3686
        %v3689 = vmul.f32 %v3687, %v3687
        %v3690 = vmul.f32 %v3688, %v3688
        %v3691 = vsel %vm1424, %v3689, 0.0
        %3692 = vadd.xlane.f32.xlu0 %v3691
        %v3693 = vpop.xlane.xlu0 %3692
        %v3694 = vsel %vm1424, %v3690, 0.0
        %3695 = vadd.xlane.f32.xlu0 %v3694
        %v3696 = vpop.xlane.xlu0 %3695
        %v3697 = vmul.f32 %v3693, %v1825
        %v3698 = vmul.f32 %v3696, %v1825
        %v3699 = vadd.f32 %v3697, 1e-05
        %v3700 = vadd.f32 %v3698, 1e-05
        %v3701 = vrsqrt.pop %v3699
        %v3702 = vrsqrt.pop %v3700
        %v3703 = vmul.f32 %v3687, %v3701
        %v3704 = vmul.f32 %v3688, %v3702
        %v3706 = vlaneseq
        %v3707 = vshrl.u32 %v3706, 7
        %v3708 = vsub.s32 0, %v3707
        %v3709 = vrot.slane %v3677, %v3708
        %v3711 = vmul.f32 %v3703, %v3709
        %v3712 = vmul.f32 %v3704, %v3709
        %v3714 = vlaneseq
        %v3715 = vshrl.u32 %v3714, 7
        %v3716 = vsub.s32 0, %v3715
        %v3717 = vrot.slane %v3678, %v3716
        %v3719 = vadd.f32 %v3711, %v3717
        %v3720 = vadd.f32 %v3712, %v3717
        %v3721 = vmul.f32 %v3719, %v3244
        %v3722 = vmul.f32 %v3720, %v3249
        %s3723 = sld [smem:[#allocation3 + %s112]]
        %v3724 = vstv %s3723
        %vm3725 = vcmp.lt.s32.totalorder %v2631, %v3724
        %vm3726 = vcmp.lt.s32.totalorder %v2632, %v3724
        %v3727 = vsel %vm3725, 1, 0
        %v3728 = vsel %vm3726, 1, 0
        %v3729 = vcvt.s32.f32 %v3727
        %v3730 = vcvt.s32.f32 %v3728
        %v3731 = vmul.f32 %v3721, %v3729
        %v3732 = vmul.f32 %v3722, %v3730
        %v3733 = vpack.c.bf16 %v3732, %v3731
        %v3734 = vld [vmem:[%s83] sm:$0xf]
        %v3735 = vld [vmem:[%s83 + $0x4] sm:$0xf]
        %v3736 = vld [vmem:[%s83 + $0x8] sm:$0xf]
        %v3737 = vld [vmem:[%s83 + $0xc] sm:$0xf]
        %v3738 = vld [vmem:[%s85] sm:$0x1]
        %v3740 = vlaneseq
        %v3741 = vshrl.u32 %v3740, 7
        %v3742 = vsub.s32 0, %v3741
        %v3743 = vrot.slane %v3738, %v3742
        %v3749 = vunpack.c.l.b16 %v3734
        %v3750 = vunpack.c.l.b16 %v3735
        %v3751 = vunpack.c.l.b16 %v3736
        %v3752 = vunpack.c.l.b16 %v3737
        %v3753 = vpack.c.b16 %v3750, %v3749
        %v3754 = vpack.c.b16 %v3752, %v3751
        %v3758 = vsel %vm1424, %v3733, 0
        %3760 = vmatprep.subr.bf16.mxu0 0
        %3761 = vmatpush1.bf16.msra.mxu0 %v3753
        %3762 = vmatprep.subr.bf16.mxu0 0
        %3763 = vmatpush1.bf16.msra.mxu0 %v3754
        %3764 = vmatprep.subr.bf16.mxu0 0
        %3765 = vmatpush1.bf16.msra.mxu0 0
        %3766 = vmatprep.subr.bf16.mxu0 0
        %3767 = vmatpush1.bf16.msra.mxu0 0
        %3768 = vmatprep.subr.bf16.mxu0 0
        %3769 = vmatpush1.bf16.msra.mxu0 0
        %3770 = vmatprep.subr.bf16.mxu0 0
        %3771 = vmatpush1.bf16.msra.mxu0 0
        %3772 = vmatprep.subr.bf16.mxu0 0
        %3773 = vmatpush1.bf16.msra.mxu0 0
        %3774 = vmatprep.subr.bf16.mxu0 0
        %3775 = vmatpush1.bf16.msra.mxu0 0
        %3776 = vmatprep.subr.bf16.mxu0 0
        %3777 = vmatpush1.bf16.msra.mxu0 0
        %3778 = vmatprep.subr.bf16.mxu0 0
        %3779 = vmatpush1.bf16.msra.mxu0 0
        %3780 = vmatprep.subr.bf16.mxu0 0
        %3781 = vmatpush1.bf16.msra.mxu0 0
        %3782 = vmatprep.subr.bf16.mxu0 0
        %3783 = vmatpush1.bf16.msra.mxu0 0
        %3784 = vmatprep.subr.bf16.mxu0 0
        %3785 = vmatpush1.bf16.msra.mxu0 0
        %3786 = vmatprep.subr.bf16.mxu0 0
        %3787 = vmatpush1.bf16.msra.mxu0 0
        %3788 = vmatprep.subr.bf16.mxu0 0
        %3789 = vmatpush1.bf16.msra.mxu0 0
        %3790 = vmatprep.subr.bf16.mxu0 0
        %3791 = vmatpush1.bf16.msra.mxu0 0
        %3792 = vmatprep.mubr.bf16.mxu0 0
        %3793 = vmatmul.mubr.bf16.gmra.mrb[0].mxu0 %v3758
        %v3794 = vpop.f32.mrb[0].mxu0
        %v3795 = vadd.f32 %v3743, %v3794
        %v3796 = vpop.f32.mrb[0].mxu0
        %v3797 = vpop.f32.mrb[0].mxu0
        %v3798 = vadd.f32 %v3743, %v3797
        %v3799 = vpop.f32.mrb[0].mxu0
        %3800 = vdwg.mxu0
        %3801 = vst.msk [vmem:[%s1396] sm:$0xff] %vm1524, %v3795
        %3802 = vst.msk [vmem:[%s1396 + $0x8] sm:$0xff] %vm1524, %v3798
        %p3803 = scmp.lt.s32.totalorder %s112, 1
        %s3804 = scalar_select %p3803, %s112, 1
        %s3805 = smul.addr %s3804, 2
        %s3806 = smul.addr %s3805, 8
        %s3807 = scalar_lea.vmem %s87, %s3806
        %s3808 = sand.u32 %s1058, 1
        %s3809 = scalar_lea.sflag [#allocation6], %s3808
        %s3810 = sand.u32 %s1058, 1
        %s3811 = scalar_lea.vmem [#allocation5], %s3810
        // Predicated region
        $region189: #{run.1} parent=187 // pred_check
          %p3812 = pneg %p1042
        $region190: #{run.1} parent=187 // pred_check_branch
          %3814 = sbr.rel (%p3812) target = $region192
        $region191: #{run.1} parent=187 // pred_region
          _
        $region192: #{run.1} parent=187 // pred_fallthru
          _
        // Predicated region
        $region193: #{run.1} parent=187 // pred_check
          %p3815 = pneg %p1068
        $region194: #{run.1} parent=187 // pred_check_branch
          %3817 = sbr.rel (%p3815) target = $region196
        $region195: #{run.1} parent=187 // pred_region
          %s3819 = ssub.s32 16, 16
          %3820 = vsyncadd %s3809, %s3819
          %s3821 = smul.addr %s112, 16
          %s3822 = scalar_lea.hbm %s89, %s3821
          %s3824 = sshll.u32 %s3811, 4
          %s3825 = int_to_ptr.vmem [resolvable:$true] %s3824
          %3827 = dma.vmem_to_hbm [thread:$0]  %s3825, 16, %s3822, %s3809
        $region196: #{run.1} parent=187 // pred_fallthru
          _
      $region188: #{run.1} parent=5 // pred_fallthru
        _
      %p3828 = scmp.le.s32.totalorder 2, %s107
      // Predicated region
      $region197: #{run.1} parent=5 // pred_check
        %p3829 = pneg %p3828
      $region198: #{run.1} parent=5 // pred_check_branch
        %3831 = sbr.rel (%p3829) target = $region200
      $region199: #{run.1} parent=5 // pred_region
        %s3832 = ssub.s32 %s107, 2
        // Predicated region
        $region201: #{run.1} parent=199 // pred_check
          %p3833 = pneg %p1048
        $region202: #{run.1} parent=199 // pred_check_branch
          %3835 = sbr.rel (%p3833) target = $region204
        $region203: #{run.1} parent=199 // pred_region
          %p3836 = scmp.lt.s32.totalorder %s113, 1
          %s3837 = scalar_select %p3836, %s113, 1
          %s3838 = smul.addr %s3837, 2
          %s3839 = smul.addr %s3838, 8
          %s3840 = scalar_lea.vmem %s87, %s3839
        $region204: #{run.1} parent=199 // pred_fallthru
          _
        // Predicated region
        $region205: #{run.1} parent=199 // pred_check
          %p3841 = pneg %p1074
        $region206: #{run.1} parent=199 // pred_check_branch
          %3843 = sbr.rel (%p3841) target = $region208
        $region207: #{run.1} parent=199 // pred_region
          %s3844 = sand.u32 %s1059, 1
          %s3845 = scalar_lea.sflag [#allocation6], %s3844
          %s3846 = sand.u32 %s1059, 1
          %s3847 = scalar_lea.vmem [#allocation5], %s3846
          %3848 = dma.done %s3845, 16
        $region208: #{run.1} parent=199 // pred_fallthru
          _
      $region200: #{run.1} parent=5 // pred_fallthru
        _
    $region6: #{run.1} parent=1 // loop_footer
      %s111 = sadd.s32 1, %s107
    $region7: #{run.1} parent=1 // loop_footer_branch
      %106 = sbr.rel target = $region3
    $region8: #{run.1} parent=1 // loop_exit
      _
    %3849 = vsyncpa [#allocation6], 1
    %s3850 = scalar_lea.sflag [#allocation6], 1
    %3851 = vsyncpa %s3850, 1

</llo_original>
